<compile_context>
chip_gen: v6e
topology: v6e:2x2x1
jax: 0.10.0
libtpu: 0.0.40
codegen_flags: <defaults>
</compile_context>

<pallas_src>
import jax
import jax.numpy as jnp
from jax.experimental import pallas as pl
from jax.experimental.pallas import tpu as pltpu


# ------------------------------ fused kernel -------------------------------

def _lenet_fused_kernel(p1_ref, w1_ref, b1_ref, w2_ref, b2_ref,
                        fw1_ref, fb1_ref, fw2_ref, fb2_ref,
                        o_ref, h1_ref, p2_ref):
    # ---- stage 1: conv1 as ONE matmul over the 4 pool members stacked in
    # rows, then 2x2 max-pool (max of 4 aligned row blocks), bias, ReLU.
    c1 = jnp.dot(p1_ref[0], w1_ref[...],
                 preferred_element_type=jnp.float32)          # (640, 10)
    m1 = jnp.maximum(jnp.maximum(c1[0:160], c1[160:320]),
                     jnp.maximum(c1[320:480], c1[480:640]))   # (160, 10)
    # h1 layout: 4 phase blocks of pitch 40 rows; within a phase block row
    # 6*ih + iw holds the pooled/ReLU'd conv1 output at (2*ih+pr, 2*iw+pc).
    h1_ref[...] = jnp.maximum(m1 + b1_ref[...], 0.0)          # (160, 10)

    # ---- stage 2: build the conv2 patch matrix (96, 250) entirely in VMEM
    # (in-kernel im2col), run ONE matmul, 2x2 max-pool, bias, ReLU.
    members = [(0, 0), (0, 1), (1, 0), (1, 1)]
    taps = [(kh, kw) for kh in range(5) for kw in range(5)]
    for m, (di, dj) in enumerate(members):
        for t, (kh, kw) in enumerate(taps):
            a = di + kh
            b = dj + kw
            base = 40 * ((a % 2) * 2 + (b % 2)) + 6 * (a // 2) + (b // 2)
            p2_ref[pl.ds(24 * m, 24), pl.ds(10 * t, 10)] = (
                h1_ref[pl.ds(base, 24), :])
    c2 = jnp.dot(p2_ref[...], w2_ref[...],
                 preferred_element_type=jnp.float32)          # (96, 20)
    m2 = jnp.maximum(jnp.maximum(c2[0:24], c2[24:48]),
                     jnp.maximum(c2[48:72], c2[72:96]))       # (24, 20)
    h2 = jnp.maximum(m2 + b2_ref[...], 0.0)  # valid rows r = 6*ph + pw, pw < 4

    # ---- stage 3: gather the 16 valid pooled positions into a (1, 320)
    # feature row (order matches the pre-permuted fc1 weights), fc1+ReLU+fc2.
    rows = [h2[6 * ph + pw:6 * ph + pw + 1, :]
            for ph in range(4) for pw in range(4)]
    feat = jnp.concatenate(rows, axis=1)                      # (1, 320)
    z = jnp.maximum(
        jnp.dot(feat, fw1_ref[...], preferred_element_type=jnp.float32)
        + fb1_ref[...], 0.0)                                  # (1, 50)
    # TODO(synk): nn.Dropout2d / F.dropout are identity here (eval-mode).
    o_ref[0] = (jnp.dot(z, fw2_ref[...], preferred_element_type=jnp.float32)
                + fb2_ref[...])                               # (1, 10)


def _full_spec(a):
    n = a.ndim
    return pl.BlockSpec(a.shape, lambda i, n=n: (0,) * n)


def _lenet_fused(p1, w1, b1, w2, b2, fw1, fb1, fw2, fb2):
    bsz = p1.shape[0]
    weights = (w1, b1, w2, b2, fw1, fb1, fw2, fb2)
    out = pl.pallas_call(
        _lenet_fused_kernel,
        grid=(bsz,),
        in_specs=[pl.BlockSpec((1, 640, 25), lambda i: (i, 0, 0))]
                 + [_full_spec(w) for w in weights],
        out_specs=pl.BlockSpec((1, 1, 10), lambda i: (i, 0, 0)),
        out_shape=jax.ShapeDtypeStruct((bsz, 1, 10), jnp.float32),
        scratch_shapes=[pltpu.VMEM((160, 10), jnp.float32),   # conv1 pooled act
                        pltpu.VMEM((96, 250), jnp.float32)],  # conv2 patches
        compiler_params=pltpu.CompilerParams(
            dimension_semantics=("parallel",)),
    )(p1, *weights)
    return out


# ------------------------------ glue (plain JAX) ---------------------------

def _conv1_patches(x):
    """x: (B, 28, 28) -> (B, 640, 25) conv1 patch matrix.

    Row order: pool member (di,dj), spatial phase (pr,pc), within-phase
    (ih,iw) with a 40-row pitch per phase block (rows 36..39 zero-padded).
    Column order: (kh, kw)  (cin = 1).
    """
    bsz = x.shape[0]
    cols = [x[:, kh:kh + 24, kw:kw + 24]
            for kh in range(5) for kw in range(5)]
    pat = jnp.stack(cols, axis=-1)                    # (B, 24, 24, 25)
    # conv-output coord oh = 4*ih + 2*pr + di,  ow = 4*iw + 2*pc + dj
    pat = pat.reshape(bsz, 6, 2, 2, 6, 2, 2, 25)      # (B, ih, pr, di, iw, pc, dj, t)
    pat = pat.transpose(0, 3, 6, 2, 5, 1, 4, 7)       # (B, di, dj, pr, pc, ih, iw, t)
    pat = pat.reshape(bsz, 4, 4, 36, 25)              # (B, member, phase, 6*ih+iw, t)
    pat = jnp.pad(pat, ((0, 0), (0, 0), (0, 0), (0, 4), (0, 0)))
    return pat.reshape(bsz, 640, 25)


def _prep_kernel_params(params):
    """PyTorch-layout params -> kernel-layout matrices (all free permutations)."""
    w1 = params["conv1_w"].reshape(10, 25).T                       # (25, 10)  rows (kh,kw)
    b1 = params["conv1_b"].reshape(1, 10)
    w2 = jnp.transpose(params["conv2_w"], (2, 3, 1, 0)).reshape(250, 20)  # rows (kh,kw,ci)
    b2 = params["conv2_b"].reshape(1, 20)
    # fc1 rows reordered to (p2h, p2w, ci) to match the kernel's flatten order
    # (equivalent to torch's .view(-1, 320) on NCHW features).
    fw1 = (params["fc1_w"].T.reshape(20, 4, 4, 50)
           .transpose(1, 2, 0, 3).reshape(320, 50))
    fb1 = params["fc1_b"].reshape(1, 50)
    fw2 = params["fc2_w"].T                                        # (50, 10)
    fb2 = params["fc2_b"].reshape(1, 10)
    return w1, b1, w2, b2, fw1, fb1, fw2, fb2


def lenet_forward(x_nchw, params):
    # x_nchw: (B, 1, 28, 28) float32 (PyTorch NCHW convention).
    x = x_nchw[:, 0, :, :]                            # (B, 28, 28), cin = 1
    p1 = _conv1_patches(x)                            # (B, 640, 25)
    kparams = _prep_kernel_params(params)
    out = _lenet_fused(p1, *kparams)                  # (B, 1, 10)
    return out[:, 0, :]


# ------------------------------ params & reference -------------------------

def init_params(key):
    ks = jax.random.split(key, 8)

    def u(k, shape, fan_in):
        bound = 1.0 / float(fan_in) ** 0.5
        return jax.random.uniform(k, shape, jnp.float32, -bound, bound)

    return {
        "conv1_w": u(ks[0], (10, 1, 5, 5), 25),       # (cout, cin, kh, kw)
        "conv1_b": u(ks[1], (10,), 25),
        "conv2_w": u(ks[2], (20, 10, 5, 5), 250),
        "conv2_b": u(ks[3], (20,), 250),
        "fc1_w": u(ks[4], (50, 320), 320),
        "fc1_b": u(ks[5], (50,), 320),
        "fc2_w": u(ks[6], (10, 50), 50),
        "fc2_b": u(ks[7], (10,), 50),
    }


def _reference(x_nchw, params):
    # Independent plain-JAX reference (lax.conv + reduce_window).
    x = jnp.transpose(x_nchw, (0, 2, 3, 1))

    def conv(h, w_oihw, b):
        w = jnp.transpose(w_oihw, (2, 3, 1, 0))       # HWIO
        y = jax.lax.conv_general_dilated(
            h, w, (1, 1), "VALID",
            dimension_numbers=("NHWC", "HWIO", "NHWC"))
        return y + b.reshape(1, 1, 1, -1)

    def pool(h):
        return jax.lax.reduce_window(h, -jnp.inf, jax.lax.max,
                                     (1, 2, 2, 1), (1, 2, 2, 1), "VALID")

    y = jax.nn.relu(pool(conv(x, params["conv1_w"], params["conv1_b"])))
    y = jax.nn.relu(pool(conv(y, params["conv2_w"], params["conv2_b"])))
    feat = jnp.transpose(y, (0, 3, 1, 2)).reshape(x.shape[0], 320)
    h = jax.nn.relu(feat @ params["fc1_w"].T + params["fc1_b"])
    return h @ params["fc2_w"].T + params["fc2_b"]


if __name__ == "__main__":
    key = jax.random.PRNGKey(0)
    pkey, xkey = jax.random.split(key)
    params = init_params(pkey)
    # MNIST-shaped input: (batch=2, channels=1, 28, 28) so the flattened conv
    # features equal 320, as fc1 expects.
    x = jax.random.normal(xkey, (2, 1, 28, 28), dtype=jnp.float32)

    out = jax.jit(lenet_forward)(x, params)
    out = jax.block_until_ready(out)
    assert out.shape == (2, 10) and out.dtype == jnp.float32

    ref = _reference(x, params)
    assert jnp.allclose(out, ref, atol=1e-3, rtol=1e-3), "mismatch vs JAX reference"

    print("KERNEL_OK")
</pallas_src>

<mosaic_0001>
module attributes {stable_mosaic.version = 11 : i64} {
  func.func @_lenet_fused_kernel(%arg0: i32, %arg1: memref<1x640x25xf32, #tpu.memory_space<vmem>>, %arg2: memref<25x10xf32, #tpu.memory_space<vmem>>, %arg3: memref<1x10xf32, #tpu.memory_space<vmem>>, %arg4: memref<250x20xf32, #tpu.memory_space<vmem>>, %arg5: memref<1x20xf32, #tpu.memory_space<vmem>>, %arg6: memref<320x50xf32, #tpu.memory_space<vmem>>, %arg7: memref<1x50xf32, #tpu.memory_space<vmem>>, %arg8: memref<50x10xf32, #tpu.memory_space<vmem>>, %arg9: memref<1x10xf32, #tpu.memory_space<vmem>>, %arg10: memref<1x1x10xf32, #tpu.memory_space<vmem>>, %arg11: memref<160x10xf32, #tpu.memory_space<vmem>>, %arg12: memref<96x250xf32, #tpu.memory_space<vmem>>) attributes {dimension_semantics = [#tpu.dimension_semantics<parallel>], iteration_bounds = array<i64: 2>, scalar_prefetch = 0 : i64, scratch_operands = 2 : i64, tpu.core_type = #tpu.core_type<tc>, window_params = [{transform_indices = @transform_0, window_bounds = array<i64: 1, 640, 25>}, {pipeline_mode = #tpu.pipeline_mode<synchronous>, transform_indices = @transform_1, window_bounds = array<i64: 25, 10>}, {pipeline_mode = #tpu.pipeline_mode<synchronous>, transform_indices = @transform_2, window_bounds = array<i64: 1, 10>}, {pipeline_mode = #tpu.pipeline_mode<synchronous>, transform_indices = @transform_3, window_bounds = array<i64: 250, 20>}, {pipeline_mode = #tpu.pipeline_mode<synchronous>, transform_indices = @transform_4, window_bounds = array<i64: 1, 20>}, {pipeline_mode = #tpu.pipeline_mode<synchronous>, transform_indices = @transform_5, window_bounds = array<i64: 320, 50>}, {pipeline_mode = #tpu.pipeline_mode<synchronous>, transform_indices = @transform_6, window_bounds = array<i64: 1, 50>}, {pipeline_mode = #tpu.pipeline_mode<synchronous>, transform_indices = @transform_7, window_bounds = array<i64: 50, 10>}, {pipeline_mode = #tpu.pipeline_mode<synchronous>, transform_indices = @transform_8, window_bounds = array<i64: 1, 10>}, {transform_indices = @transform_9, window_bounds = array<i64: 1, 1, 10>}]} {
    %c0 = arith.constant 0 : index
    %c0_0 = arith.constant 0 : index
    %c0_1 = arith.constant 0 : index
    %0 = vector.load %arg1[%c0, %c0_0, %c0_1] : memref<1x640x25xf32, #tpu.memory_space<vmem>>, vector<1x640x25xf32>
    %1 = vector.shape_cast %0 : vector<1x640x25xf32> to vector<640x25xf32>
    %c0_2 = arith.constant 0 : index
    %c0_3 = arith.constant 0 : index
    %2 = vector.load %arg2[%c0_2, %c0_3] : memref<25x10xf32, #tpu.memory_space<vmem>>, vector<25x10xf32>
    %cst = arith.constant dense<0.000000e+00> : vector<640x10xf32>
    %3 = tpu.matmul %1, %2, %cst {dimension_numbers = #tpu.dot_dimension_numbers<[1], [0], [0], [1], [0, 0, 1, 1], [], []>} : vector<640x25xf32>, vector<25x10xf32>, vector<640x10xf32> -> vector<640x10xf32>
    %4 = vector.extract_strided_slice %3 {offsets = [0, 0], sizes = [160, 10], strides = [1, 1]} : vector<640x10xf32> to vector<160x10xf32>
    %5 = vector.extract_strided_slice %3 {offsets = [160, 0], sizes = [160, 10], strides = [1, 1]} : vector<640x10xf32> to vector<160x10xf32>
    %6 = arith.maximumf %4, %5 : vector<160x10xf32>
    %7 = vector.extract_strided_slice %3 {offsets = [320, 0], sizes = [160, 10], strides = [1, 1]} : vector<640x10xf32> to vector<160x10xf32>
    %8 = vector.extract_strided_slice %3 {offsets = [480, 0], sizes = [160, 10], strides = [1, 1]} : vector<640x10xf32> to vector<160x10xf32>
    %9 = arith.maximumf %7, %8 : vector<160x10xf32>
    %10 = arith.maximumf %6, %9 : vector<160x10xf32>
    %c0_4 = arith.constant 0 : index
    %c0_5 = arith.constant 0 : index
    %11 = vector.load %arg3[%c0_4, %c0_5] : memref<1x10xf32, #tpu.memory_space<vmem>>, vector<1x10xf32>
    %12 = vector.broadcast %11 : vector<1x10xf32> to vector<160x10xf32>
    %13 = arith.addf %10, %12 : vector<160x10xf32>
    %cst_6 = arith.constant 0.000000e+00 : f32
    %14 = vector.broadcast %cst_6 : f32 to vector<160x10xf32>
    %15 = arith.maximumf %13, %14 : vector<160x10xf32>
    %c0_7 = arith.constant 0 : index
    %c0_8 = arith.constant 0 : index
    %16 = vector.load %arg11[%c0_7, %c0_8] : memref<160x10xf32, #tpu.memory_space<vmem>>, vector<160x10xf32>
    tpu.vector_store %arg11[%c0_7, %c0_8], %15 {strides = array<i32>} : memref<160x10xf32, #tpu.memory_space<vmem>>, vector<160x10xf32>,
    %c0_9 = arith.constant 0 : index
    %c0_10 = arith.constant 0 : index
    %17 = vector.load %arg11[%c0_9, %c0_10] : memref<160x10xf32, #tpu.memory_space<vmem>>, vector<24x10xf32>
    %c0_11 = arith.constant 0 : index
    %c0_12 = arith.constant 0 : index
    %18 = vector.load %arg12[%c0_11, %c0_12] : memref<96x250xf32, #tpu.memory_space<vmem>>, vector<24x10xf32>
    tpu.vector_store %arg12[%c0_11, %c0_12], %17 {strides = array<i32>} : memref<96x250xf32, #tpu.memory_space<vmem>>, vector<24x10xf32>,
    %c40 = arith.constant 40 : index
    %c0_13 = arith.constant 0 : index
    %19 = vector.load %arg11[%c40, %c0_13] : memref<160x10xf32, #tpu.memory_space<vmem>>, vector<24x10xf32>
    %c0_14 = arith.constant 0 : index
    %c10 = arith.constant 10 : index
    %20 = vector.load %arg12[%c0_14, %c10] : memref<96x250xf32, #tpu.memory_space<vmem>>, vector<24x10xf32>
    tpu.vector_store %arg12[%c0_14, %c10], %19 {strides = array<i32>} : memref<96x250xf32, #tpu.memory_space<vmem>>, vector<24x10xf32>,
    %c1 = arith.constant 1 : index
    %c0_15 = arith.constant 0 : index
    %21 = vector.load %arg11[%c1, %c0_15] : memref<160x10xf32, #tpu.memory_space<vmem>>, vector<24x10xf32>
    %c0_16 = arith.constant 0 : index
    %c20 = arith.constant 20 : index
    %22 = vector.load %arg12[%c0_16, %c20] : memref<96x250xf32, #tpu.memory_space<vmem>>, vector<24x10xf32>
    tpu.vector_store %arg12[%c0_16, %c20], %21 {strides = array<i32>} : memref<96x250xf32, #tpu.memory_space<vmem>>, vector<24x10xf32>,
    %c41 = arith.constant 41 : index
    %c0_17 = arith.constant 0 : index
    %23 = vector.load %arg11[%c41, %c0_17] : memref<160x10xf32, #tpu.memory_space<vmem>>, vector<24x10xf32>
    %c0_18 = arith.constant 0 : index
    %c30 = arith.constant 30 : index
    %24 = vector.load %arg12[%c0_18, %c30] : memref<96x250xf32, #tpu.memory_space<vmem>>, vector<24x10xf32>
    tpu.vector_store %arg12[%c0_18, %c30], %23 {strides = array<i32>} : memref<96x250xf32, #tpu.memory_space<vmem>>, vector<24x10xf32>,
    %c2 = arith.constant 2 : index
    %c0_19 = arith.constant 0 : index
    %25 = vector.load %arg11[%c2, %c0_19] : memref<160x10xf32, #tpu.memory_space<vmem>>, vector<24x10xf32>
    %c0_20 = arith.constant 0 : index
    %c40_21 = arith.constant 40 : index
    %26 = vector.load %arg12[%c0_20, %c40_21] : memref<96x250xf32, #tpu.memory_space<vmem>>, vector<24x10xf32>
    tpu.vector_store %arg12[%c0_20, %c40_21], %25 {strides = array<i32>} : memref<96x250xf32, #tpu.memory_space<vmem>>, vector<24x10xf32>,
    %c80 = arith.constant 80 : index
    %c0_22 = arith.constant 0 : index
    %27 = vector.load %arg11[%c80, %c0_22] : memref<160x10xf32, #tpu.memory_space<vmem>>, vector<24x10xf32>
    %c0_23 = arith.constant 0 : index
    %c50 = arith.constant 50 : index
    %28 = vector.load %arg12[%c0_23, %c50] : memref<96x250xf32, #tpu.memory_space<vmem>>, vector<24x10xf32>
    tpu.vector_store %arg12[%c0_23, %c50], %27 {strides = array<i32>} : memref<96x250xf32, #tpu.memory_space<vmem>>, vector<24x10xf32>,
    %c120 = arith.constant 120 : index
    %c0_24 = arith.constant 0 : index
    %29 = vector.load %arg11[%c120, %c0_24] : memref<160x10xf32, #tpu.memory_space<vmem>>, vector<24x10xf32>
    %c0_25 = arith.constant 0 : index
    %c60 = arith.constant 60 : index
    %30 = vector.load %arg12[%c0_25, %c60] : memref<96x250xf32, #tpu.memory_space<vmem>>, vector<24x10xf32>
    tpu.vector_store %arg12[%c0_25, %c60], %29 {strides = array<i32>} : memref<96x250xf32, #tpu.memory_space<vmem>>, vector<24x10xf32>,
    %c81 = arith.constant 81 : index
    %c0_26 = arith.constant 0 : index
    %31 = vector.load %arg11[%c81, %c0_26] : memref<160x10xf32, #tpu.memory_space<vmem>>, vector<24x10xf32>
    %c0_27 = arith.constant 0 : index
    %c70 = arith.constant 70 : index
    %32 = vector.load %arg12[%c0_27, %c70] : memref<96x250xf32, #tpu.memory_space<vmem>>, vector<24x10xf32>
    tpu.vector_store %arg12[%c0_27, %c70], %31 {strides = array<i32>} : memref<96x250xf32, #tpu.memory_space<vmem>>, vector<24x10xf32>,
    %c121 = arith.constant 121 : index
    %c0_28 = arith.constant 0 : index
    %33 = vector.load %arg11[%c121, %c0_28] : memref<160x10xf32, #tpu.memory_space<vmem>>, vector<24x10xf32>
    %c0_29 = arith.constant 0 : index
    %c80_30 = arith.constant 80 : index
    %34 = vector.load %arg12[%c0_29, %c80_30] : memref<96x250xf32, #tpu.memory_space<vmem>>, vector<24x10xf32>
    tpu.vector_store %arg12[%c0_29, %c80_30], %33 {strides = array<i32>} : memref<96x250xf32, #tpu.memory_space<vmem>>, vector<24x10xf32>,
    %c82 = arith.constant 82 : index
    %c0_31 = arith.constant 0 : index
    %35 = vector.load %arg11[%c82, %c0_31] : memref<160x10xf32, #tpu.memory_space<vmem>>, vector<24x10xf32>
    %c0_32 = arith.constant 0 : index
    %c90 = arith.constant 90 : index
    %36 = vector.load %arg12[%c0_32, %c90] : memref<96x250xf32, #tpu.memory_space<vmem>>, vector<24x10xf32>
    tpu.vector_store %arg12[%c0_32, %c90], %35 {strides = array<i32>} : memref<96x250xf32, #tpu.memory_space<vmem>>, vector<24x10xf32>,
    %c6 = arith.constant 6 : index
    %c0_33 = arith.constant 0 : index
    %37 = vector.load %arg11[%c6, %c0_33] : memref<160x10xf32, #tpu.memory_space<vmem>>, vector<24x10xf32>
    %c0_34 = arith.constant 0 : index
    %c100 = arith.constant 100 : index
    %38 = vector.load %arg12[%c0_34, %c100] : memref<96x250xf32, #tpu.memory_space<vmem>>, vector<24x10xf32>
    tpu.vector_store %arg12[%c0_34, %c100], %37 {strides = array<i32>} : memref<96x250xf32, #tpu.memory_space<vmem>>, vector<24x10xf32>,
    %c46 = arith.constant 46 : index
    %c0_35 = arith.constant 0 : index
    %39 = vector.load %arg11[%c46, %c0_35] : memref<160x10xf32, #tpu.memory_space<vmem>>, vector<24x10xf32>
    %c0_36 = arith.constant 0 : index
    %c110 = arith.constant 110 : index
    %40 = vector.load %arg12[%c0_36, %c110] : memref<96x250xf32, #tpu.memory_space<vmem>>, vector<24x10xf32>
    tpu.vector_store %arg12[%c0_36, %c110], %39 {strides = array<i32>} : memref<96x250xf32, #tpu.memory_space<vmem>>, vector<24x10xf32>,
    %c7 = arith.constant 7 : index
    %c0_37 = arith.constant 0 : index
    %41 = vector.load %arg11[%c7, %c0_37] : memref<160x10xf32, #tpu.memory_space<vmem>>, vector<24x10xf32>
    %c0_38 = arith.constant 0 : index
    %c120_39 = arith.constant 120 : index
    %42 = vector.load %arg12[%c0_38, %c120_39] : memref<96x250xf32, #tpu.memory_space<vmem>>, vector<24x10xf32>
    tpu.vector_store %arg12[%c0_38, %c120_39], %41 {strides = array<i32>} : memref<96x250xf32, #tpu.memory_space<vmem>>, vector<24x10xf32>,
    %c47 = arith.constant 47 : index
    %c0_40 = arith.constant 0 : index
    %43 = vector.load %arg11[%c47, %c0_40] : memref<160x10xf32, #tpu.memory_space<vmem>>, vector<24x10xf32>
    %c0_41 = arith.constant 0 : index
    %c130 = arith.constant 130 : index
    %44 = vector.load %arg12[%c0_41, %c130] : memref<96x250xf32, #tpu.memory_space<vmem>>, vector<24x10xf32>
    tpu.vector_store %arg12[%c0_41, %c130], %43 {strides = array<i32>} : memref<96x250xf32, #tpu.memory_space<vmem>>, vector<24x10xf32>,
    %c8 = arith.constant 8 : index
    %c0_42 = arith.constant 0 : index
    %45 = vector.load %arg11[%c8, %c0_42] : memref<160x10xf32, #tpu.memory_space<vmem>>, vector<24x10xf32>
    %c0_43 = arith.constant 0 : index
    %c140 = arith.constant 140 : index
    %46 = vector.load %arg12[%c0_43, %c140] : memref<96x250xf32, #tpu.memory_space<vmem>>, vector<24x10xf32>
    tpu.vector_store %arg12[%c0_43, %c140], %45 {strides = array<i32>} : memref<96x250xf32, #tpu.memory_space<vmem>>, vector<24x10xf32>,
    %c86 = arith.constant 86 : index
    %c0_44 = arith.constant 0 : index
    %47 = vector.load %arg11[%c86, %c0_44] : memref<160x10xf32, #tpu.memory_space<vmem>>, vector<24x10xf32>
    %c0_45 = arith.constant 0 : index
    %c150 = arith.constant 150 : index
    %48 = vector.load %arg12[%c0_45, %c150] : memref<96x250xf32, #tpu.memory_space<vmem>>, vector<24x10xf32>
    tpu.vector_store %arg12[%c0_45, %c150], %47 {strides = array<i32>} : memref<96x250xf32, #tpu.memory_space<vmem>>, vector<24x10xf32>,
    %c126 = arith.constant 126 : index
    %c0_46 = arith.constant 0 : index
    %49 = vector.load %arg11[%c126, %c0_46] : memref<160x10xf32, #tpu.memory_space<vmem>>, vector<24x10xf32>
    %c0_47 = arith.constant 0 : index
    %c160 = arith.constant 160 : index
    %50 = vector.load %arg12[%c0_47, %c160] : memref<96x250xf32, #tpu.memory_space<vmem>>, vector<24x10xf32>
    tpu.vector_store %arg12[%c0_47, %c160], %49 {strides = array<i32>} : memref<96x250xf32, #tpu.memory_space<vmem>>, vector<24x10xf32>,
    %c87 = arith.constant 87 : index
    %c0_48 = arith.constant 0 : index
    %51 = vector.load %arg11[%c87, %c0_48] : memref<160x10xf32, #tpu.memory_space<vmem>>, vector<24x10xf32>
    %c0_49 = arith.constant 0 : index
    %c170 = arith.constant 170 : index
    %52 = vector.load %arg12[%c0_49, %c170] : memref<96x250xf32, #tpu.memory_space<vmem>>, vector<24x10xf32>
    tpu.vector_store %arg12[%c0_49, %c170], %51 {strides = array<i32>} : memref<96x250xf32, #tpu.memory_space<vmem>>, vector<24x10xf32>,
    %c127 = arith.constant 127 : index
    %c0_50 = arith.constant 0 : index
    %53 = vector.load %arg11[%c127, %c0_50] : memref<160x10xf32, #tpu.memory_space<vmem>>, vector<24x10xf32>
    %c0_51 = arith.constant 0 : index
    %c180 = arith.constant 180 : index
    %54 = vector.load %arg12[%c0_51, %c180] : memref<96x250xf32, #tpu.memory_space<vmem>>, vector<24x10xf32>
    tpu.vector_store %arg12[%c0_51, %c180], %53 {strides = array<i32>} : memref<96x250xf32, #tpu.memory_space<vmem>>, vector<24x10xf32>,
    %c88 = arith.constant 88 : index
    %c0_52 = arith.constant 0 : index
    %55 = vector.load %arg11[%c88, %c0_52] : memref<160x10xf32, #tpu.memory_space<vmem>>, vector<24x10xf32>
    %c0_53 = arith.constant 0 : index
    %c190 = arith.constant 190 : index
    %56 = vector.load %arg12[%c0_53, %c190] : memref<96x250xf32, #tpu.memory_space<vmem>>, vector<24x10xf32>
    tpu.vector_store %arg12[%c0_53, %c190], %55 {strides = array<i32>} : memref<96x250xf32, #tpu.memory_space<vmem>>, vector<24x10xf32>,
    %c12 = arith.constant 12 : index
    %c0_54 = arith.constant 0 : index
    %57 = vector.load %arg11[%c12, %c0_54] : memref<160x10xf32, #tpu.memory_space<vmem>>, vector<24x10xf32>
    %c0_55 = arith.constant 0 : index
    %c200 = arith.constant 200 : index
    %58 = vector.load %arg12[%c0_55, %c200] : memref<96x250xf32, #tpu.memory_space<vmem>>, vector<24x10xf32>
    tpu.vector_store %arg12[%c0_55, %c200], %57 {strides = array<i32>} : memref<96x250xf32, #tpu.memory_space<vmem>>, vector<24x10xf32>,
    %c52 = arith.constant 52 : index
    %c0_56 = arith.constant 0 : index
    %59 = vector.load %arg11[%c52, %c0_56] : memref<160x10xf32, #tpu.memory_space<vmem>>, vector<24x10xf32>
    %c0_57 = arith.constant 0 : index
    %c210 = arith.constant 210 : index
    %60 = vector.load %arg12[%c0_57, %c210] : memref<96x250xf32, #tpu.memory_space<vmem>>, vector<24x10xf32>
    tpu.vector_store %arg12[%c0_57, %c210], %59 {strides = array<i32>} : memref<96x250xf32, #tpu.memory_space<vmem>>, vector<24x10xf32>,
    %c13 = arith.constant 13 : index
    %c0_58 = arith.constant 0 : index
    %61 = vector.load %arg11[%c13, %c0_58] : memref<160x10xf32, #tpu.memory_space<vmem>>, vector<24x10xf32>
    %c0_59 = arith.constant 0 : index
    %c220 = arith.constant 220 : index
    %62 = vector.load %arg12[%c0_59, %c220] : memref<96x250xf32, #tpu.memory_space<vmem>>, vector<24x10xf32>
    tpu.vector_store %arg12[%c0_59, %c220], %61 {strides = array<i32>} : memref<96x250xf32, #tpu.memory_space<vmem>>, vector<24x10xf32>,
    %c53 = arith.constant 53 : index
    %c0_60 = arith.constant 0 : index
    %63 = vector.load %arg11[%c53, %c0_60] : memref<160x10xf32, #tpu.memory_space<vmem>>, vector<24x10xf32>
    %c0_61 = arith.constant 0 : index
    %c230 = arith.constant 230 : index
    %64 = vector.load %arg12[%c0_61, %c230] : memref<96x250xf32, #tpu.memory_space<vmem>>, vector<24x10xf32>
    tpu.vector_store %arg12[%c0_61, %c230], %63 {strides = array<i32>} : memref<96x250xf32, #tpu.memory_space<vmem>>, vector<24x10xf32>,
    %c14 = arith.constant 14 : index
    %c0_62 = arith.constant 0 : index
    %65 = vector.load %arg11[%c14, %c0_62] : memref<160x10xf32, #tpu.memory_space<vmem>>, vector<24x10xf32>
    %c0_63 = arith.constant 0 : index
    %c240 = arith.constant 240 : index
    %66 = vector.load %arg12[%c0_63, %c240] : memref<96x250xf32, #tpu.memory_space<vmem>>, vector<24x10xf32>
    tpu.vector_store %arg12[%c0_63, %c240], %65 {strides = array<i32>} : memref<96x250xf32, #tpu.memory_space<vmem>>, vector<24x10xf32>,
    %c40_64 = arith.constant 40 : index
    %c0_65 = arith.constant 0 : index
    %67 = vector.load %arg11[%c40_64, %c0_65] : memref<160x10xf32, #tpu.memory_space<vmem>>, vector<24x10xf32>
    %c24 = arith.constant 24 : index
    %c0_66 = arith.constant 0 : index
    %68 = vector.load %arg12[%c24, %c0_66] : memref<96x250xf32, #tpu.memory_space<vmem>>, vector<24x10xf32>
    tpu.vector_store %arg12[%c24, %c0_66], %67 {strides = array<i32>} : memref<96x250xf32, #tpu.memory_space<vmem>>, vector<24x10xf32>,
    %c1_67 = arith.constant 1 : index
    %c0_68 = arith.constant 0 : index
    %69 = vector.load %arg11[%c1_67, %c0_68] : memref<160x10xf32, #tpu.memory_space<vmem>>, vector<24x10xf32>
    %c24_69 = arith.constant 24 : index
    %c10_70 = arith.constant 10 : index
    %70 = vector.load %arg12[%c24_69, %c10_70] : memref<96x250xf32, #tpu.memory_space<vmem>>, vector<24x10xf32>
    tpu.vector_store %arg12[%c24_69, %c10_70], %69 {strides = array<i32>} : memref<96x250xf32, #tpu.memory_space<vmem>>, vector<24x10xf32>,
    %c41_71 = arith.constant 41 : index
    %c0_72 = arith.constant 0 : index
    %71 = vector.load %arg11[%c41_71, %c0_72] : memref<160x10xf32, #tpu.memory_space<vmem>>, vector<24x10xf32>
    %c24_73 = arith.constant 24 : index
    %c20_74 = arith.constant 20 : index
    %72 = vector.load %arg12[%c24_73, %c20_74] : memref<96x250xf32, #tpu.memory_space<vmem>>, vector<24x10xf32>
    tpu.vector_store %arg12[%c24_73, %c20_74], %71 {strides = array<i32>} : memref<96x250xf32, #tpu.memory_space<vmem>>, vector<24x10xf32>,
    %c2_75 = arith.constant 2 : index
    %c0_76 = arith.constant 0 : index
    %73 = vector.load %arg11[%c2_75, %c0_76] : memref<160x10xf32, #tpu.memory_space<vmem>>, vector<24x10xf32>
    %c24_77 = arith.constant 24 : index
    %c30_78 = arith.constant 30 : index
    %74 = vector.load %arg12[%c24_77, %c30_78] : memref<96x250xf32, #tpu.memory_space<vmem>>, vector<24x10xf32>
    tpu.vector_store %arg12[%c24_77, %c30_78], %73 {strides = array<i32>} : memref<96x250xf32, #tpu.memory_space<vmem>>, vector<24x10xf32>,
    %c42 = arith.constant 42 : index
    %c0_79 = arith.constant 0 : index
    %75 = vector.load %arg11[%c42, %c0_79] : memref<160x10xf32, #tpu.memory_space<vmem>>, vector<24x10xf32>
    %c24_80 = arith.constant 24 : index
    %c40_81 = arith.constant 40 : index
    %76 = vector.load %arg12[%c24_80, %c40_81] : memref<96x250xf32, #tpu.memory_space<vmem>>, vector<24x10xf32>
    tpu.vector_store %arg12[%c24_80, %c40_81], %75 {strides = array<i32>} : memref<96x250xf32, #tpu.memory_space<vmem>>, vector<24x10xf32>,
    %c120_82 = arith.constant 120 : index
    %c0_83 = arith.constant 0 : index
    %77 = vector.load %arg11[%c120_82, %c0_83] : memref<160x10xf32, #tpu.memory_space<vmem>>, vector<24x10xf32>
    %c24_84 = arith.constant 24 : index
    %c50_85 = arith.constant 50 : index
    %78 = vector.load %arg12[%c24_84, %c50_85] : memref<96x250xf32, #tpu.memory_space<vmem>>, vector<24x10xf32>
    tpu.vector_store %arg12[%c24_84, %c50_85], %77 {strides = array<i32>} : memref<96x250xf32, #tpu.memory_space<vmem>>, vector<24x10xf32>,
    %c81_86 = arith.constant 81 : index
    %c0_87 = arith.constant 0 : index
    %79 = vector.load %arg11[%c81_86, %c0_87] : memref<160x10xf32, #tpu.memory_space<vmem>>, vector<24x10xf32>
    %c24_88 = arith.constant 24 : index
    %c60_89 = arith.constant 60 : index
    %80 = vector.load %arg12[%c24_88, %c60_89] : memref<96x250xf32, #tpu.memory_space<vmem>>, vector<24x10xf32>
    tpu.vector_store %arg12[%c24_88, %c60_89], %79 {strides = array<i32>} : memref<96x250xf32, #tpu.memory_space<vmem>>, vector<24x10xf32>,
    %c121_90 = arith.constant 121 : index
    %c0_91 = arith.constant 0 : index
    %81 = vector.load %arg11[%c121_90, %c0_91] : memref<160x10xf32, #tpu.memory_space<vmem>>, vector<24x10xf32>
    %c24_92 = arith.constant 24 : index
    %c70_93 = arith.constant 70 : index
    %82 = vector.load %arg12[%c24_92, %c70_93] : memref<96x250xf32, #tpu.memory_space<vmem>>, vector<24x10xf32>
    tpu.vector_store %arg12[%c24_92, %c70_93], %81 {strides = array<i32>} : memref<96x250xf32, #tpu.memory_space<vmem>>, vector<24x10xf32>,
    %c82_94 = arith.constant 82 : index
    %c0_95 = arith.constant 0 : index
    %83 = vector.load %arg11[%c82_94, %c0_95] : memref<160x10xf32, #tpu.memory_space<vmem>>, vector<24x10xf32>
    %c24_96 = arith.constant 24 : index
    %c80_97 = arith.constant 80 : index
    %84 = vector.load %arg12[%c24_96, %c80_97] : memref<96x250xf32, #tpu.memory_space<vmem>>, vector<24x10xf32>
    tpu.vector_store %arg12[%c24_96, %c80_97], %83 {strides = array<i32>} : memref<96x250xf32, #tpu.memory_space<vmem>>, vector<24x10xf32>,
    %c122 = arith.constant 122 : index
    %c0_98 = arith.constant 0 : index
    %85 = vector.load %arg11[%c122, %c0_98] : memref<160x10xf32, #tpu.memory_space<vmem>>, vector<24x10xf32>
    %c24_99 = arith.constant 24 : index
    %c90_100 = arith.constant 90 : index
    %86 = vector.load %arg12[%c24_99, %c90_100] : memref<96x250xf32, #tpu.memory_space<vmem>>, vector<24x10xf32>
    tpu.vector_store %arg12[%c24_99, %c90_100], %85 {strides = array<i32>} : memref<96x250xf32, #tpu.memory_space<vmem>>, vector<24x10xf32>,
    %c46_101 = arith.constant 46 : index
    %c0_102 = arith.constant 0 : index
    %87 = vector.load %arg11[%c46_101, %c0_102] : memref<160x10xf32, #tpu.memory_space<vmem>>, vector<24x10xf32>
    %c24_103 = arith.constant 24 : index
    %c100_104 = arith.constant 100 : index
    %88 = vector.load %arg12[%c24_103, %c100_104] : memref<96x250xf32, #tpu.memory_space<vmem>>, vector<24x10xf32>
    tpu.vector_store %arg12[%c24_103, %c100_104], %87 {strides = array<i32>} : memref<96x250xf32, #tpu.memory_space<vmem>>, vector<24x10xf32>,
    %c7_105 = arith.constant 7 : index
    %c0_106 = arith.constant 0 : index
    %89 = vector.load %arg11[%c7_105, %c0_106] : memref<160x10xf32, #tpu.memory_space<vmem>>, vector<24x10xf32>
    %c24_107 = arith.constant 24 : index
    %c110_108 = arith.constant 110 : index
    %90 = vector.load %arg12[%c24_107, %c110_108] : memref<96x250xf32, #tpu.memory_space<vmem>>, vector<24x10xf32>
    tpu.vector_store %arg12[%c24_107, %c110_108], %89 {strides = array<i32>} : memref<96x250xf32, #tpu.memory_space<vmem>>, vector<24x10xf32>,
    %c47_109 = arith.constant 47 : index
    %c0_110 = arith.constant 0 : index
    %91 = vector.load %arg11[%c47_109, %c0_110] : memref<160x10xf32, #tpu.memory_space<vmem>>, vector<24x10xf32>
    %c24_111 = arith.constant 24 : index
    %c120_112 = arith.constant 120 : index
    %92 = vector.load %arg12[%c24_111, %c120_112] : memref<96x250xf32, #tpu.memory_space<vmem>>, vector<24x10xf32>
    tpu.vector_store %arg12[%c24_111, %c120_112], %91 {strides = array<i32>} : memref<96x250xf32, #tpu.memory_space<vmem>>, vector<24x10xf32>,
    %c8_113 = arith.constant 8 : index
    %c0_114 = arith.constant 0 : index
    %93 = vector.load %arg11[%c8_113, %c0_114] : memref<160x10xf32, #tpu.memory_space<vmem>>, vector<24x10xf32>
    %c24_115 = arith.constant 24 : index
    %c130_116 = arith.constant 130 : index
    %94 = vector.load %arg12[%c24_115, %c130_116] : memref<96x250xf32, #tpu.memory_space<vmem>>, vector<24x10xf32>
    tpu.vector_store %arg12[%c24_115, %c130_116], %93 {strides = array<i32>} : memref<96x250xf32, #tpu.memory_space<vmem>>, vector<24x10xf32>,
    %c48 = arith.constant 48 : index
    %c0_117 = arith.constant 0 : index
    %95 = vector.load %arg11[%c48, %c0_117] : memref<160x10xf32, #tpu.memory_space<vmem>>, vector<24x10xf32>
    %c24_118 = arith.constant 24 : index
    %c140_119 = arith.constant 140 : index
    %96 = vector.load %arg12[%c24_118, %c140_119] : memref<96x250xf32, #tpu.memory_space<vmem>>, vector<24x10xf32>
    tpu.vector_store %arg12[%c24_118, %c140_119], %95 {strides = array<i32>} : memref<96x250xf32, #tpu.memory_space<vmem>>, vector<24x10xf32>,
    %c126_120 = arith.constant 126 : index
    %c0_121 = arith.constant 0 : index
    %97 = vector.load %arg11[%c126_120, %c0_121] : memref<160x10xf32, #tpu.memory_space<vmem>>, vector<24x10xf32>
    %c24_122 = arith.constant 24 : index
    %c150_123 = arith.constant 150 : index
    %98 = vector.load %arg12[%c24_122, %c150_123] : memref<96x250xf32, #tpu.memory_space<vmem>>, vector<24x10xf32>
    tpu.vector_store %arg12[%c24_122, %c150_123], %97 {strides = array<i32>} : memref<96x250xf32, #tpu.memory_space<vmem>>, vector<24x10xf32>,
    %c87_124 = arith.constant 87 : index
    %c0_125 = arith.constant 0 : index
    %99 = vector.load %arg11[%c87_124, %c0_125] : memref<160x10xf32, #tpu.memory_space<vmem>>, vector<24x10xf32>
    %c24_126 = arith.constant 24 : index
    %c160_127 = arith.constant 160 : index
    %100 = vector.load %arg12[%c24_126, %c160_127] : memref<96x250xf32, #tpu.memory_space<vmem>>, vector<24x10xf32>
    tpu.vector_store %arg12[%c24_126, %c160_127], %99 {strides = array<i32>} : memref<96x250xf32, #tpu.memory_space<vmem>>, vector<24x10xf32>,
    %c127_128 = arith.constant 127 : index
    %c0_129 = arith.constant 0 : index
    %101 = vector.load %arg11[%c127_128, %c0_129] : memref<160x10xf32, #tpu.memory_space<vmem>>, vector<24x10xf32>
    %c24_130 = arith.constant 24 : index
    %c170_131 = arith.constant 170 : index
    %102 = vector.load %arg12[%c24_130, %c170_131] : memref<96x250xf32, #tpu.memory_space<vmem>>, vector<24x10xf32>
    tpu.vector_store %arg12[%c24_130, %c170_131], %101 {strides = array<i32>} : memref<96x250xf32, #tpu.memory_space<vmem>>, vector<24x10xf32>,
    %c88_132 = arith.constant 88 : index
    %c0_133 = arith.constant 0 : index
    %103 = vector.load %arg11[%c88_132, %c0_133] : memref<160x10xf32, #tpu.memory_space<vmem>>, vector<24x10xf32>
    %c24_134 = arith.constant 24 : index
    %c180_135 = arith.constant 180 : index
    %104 = vector.load %arg12[%c24_134, %c180_135] : memref<96x250xf32, #tpu.memory_space<vmem>>, vector<24x10xf32>
    tpu.vector_store %arg12[%c24_134, %c180_135], %103 {strides = array<i32>} : memref<96x250xf32, #tpu.memory_space<vmem>>, vector<24x10xf32>,
    %c128 = arith.constant 128 : index
    %c0_136 = arith.constant 0 : index
    %105 = vector.load %arg11[%c128, %c0_136] : memref<160x10xf32, #tpu.memory_space<vmem>>, vector<24x10xf32>
    %c24_137 = arith.constant 24 : index
    %c190_138 = arith.constant 190 : index
    %106 = vector.load %arg12[%c24_137, %c190_138] : memref<96x250xf32, #tpu.memory_space<vmem>>, vector<24x10xf32>
    tpu.vector_store %arg12[%c24_137, %c190_138], %105 {strides = array<i32>} : memref<96x250xf32, #tpu.memory_space<vmem>>, vector<24x10xf32>,
    %c52_139 = arith.constant 52 : index
    %c0_140 = arith.constant 0 : index
    %107 = vector.load %arg11[%c52_139, %c0_140] : memref<160x10xf32, #tpu.memory_space<vmem>>, vector<24x10xf32>
    %c24_141 = arith.constant 24 : index
    %c200_142 = arith.constant 200 : index
    %108 = vector.load %arg12[%c24_141, %c200_142] : memref<96x250xf32, #tpu.memory_space<vmem>>, vector<24x10xf32>
    tpu.vector_store %arg12[%c24_141, %c200_142], %107 {strides = array<i32>} : memref<96x250xf32, #tpu.memory_space<vmem>>, vector<24x10xf32>,
    %c13_143 = arith.constant 13 : index
    %c0_144 = arith.constant 0 : index
    %109 = vector.load %arg11[%c13_143, %c0_144] : memref<160x10xf32, #tpu.memory_space<vmem>>, vector<24x10xf32>
    %c24_145 = arith.constant 24 : index
    %c210_146 = arith.constant 210 : index
    %110 = vector.load %arg12[%c24_145, %c210_146] : memref<96x250xf32, #tpu.memory_space<vmem>>, vector<24x10xf32>
    tpu.vector_store %arg12[%c24_145, %c210_146], %109 {strides = array<i32>} : memref<96x250xf32, #tpu.memory_space<vmem>>, vector<24x10xf32>,
    %c53_147 = arith.constant 53 : index
    %c0_148 = arith.constant 0 : index
    %111 = vector.load %arg11[%c53_147, %c0_148] : memref<160x10xf32, #tpu.memory_space<vmem>>, vector<24x10xf32>
    %c24_149 = arith.constant 24 : index
    %c220_150 = arith.constant 220 : index
    %112 = vector.load %arg12[%c24_149, %c220_150] : memref<96x250xf32, #tpu.memory_space<vmem>>, vector<24x10xf32>
    tpu.vector_store %arg12[%c24_149, %c220_150], %111 {strides = array<i32>} : memref<96x250xf32, #tpu.memory_space<vmem>>, vector<24x10xf32>,
    %c14_151 = arith.constant 14 : index
    %c0_152 = arith.constant 0 : index
    %113 = vector.load %arg11[%c14_151, %c0_152] : memref<160x10xf32, #tpu.memory_space<vmem>>, vector<24x10xf32>
    %c24_153 = arith.constant 24 : index
    %c230_154 = arith.constant 230 : index
    %114 = vector.load %arg12[%c24_153, %c230_154] : memref<96x250xf32, #tpu.memory_space<vmem>>, vector<24x10xf32>
    tpu.vector_store %arg12[%c24_153, %c230_154], %113 {strides = array<i32>} : memref<96x250xf32, #tpu.memory_space<vmem>>, vector<24x10xf32>,
    %c54 = arith.constant 54 : index
    %c0_155 = arith.constant 0 : index
    %115 = vector.load %arg11[%c54, %c0_155] : memref<160x10xf32, #tpu.memory_space<vmem>>, vector<24x10xf32>
    %c24_156 = arith.constant 24 : index
    %c240_157 = arith.constant 240 : index
    %116 = vector.load %arg12[%c24_156, %c240_157] : memref<96x250xf32, #tpu.memory_space<vmem>>, vector<24x10xf32>
    tpu.vector_store %arg12[%c24_156, %c240_157], %115 {strides = array<i32>} : memref<96x250xf32, #tpu.memory_space<vmem>>, vector<24x10xf32>,
    %c80_158 = arith.constant 80 : index
    %c0_159 = arith.constant 0 : index
    %117 = vector.load %arg11[%c80_158, %c0_159] : memref<160x10xf32, #tpu.memory_space<vmem>>, vector<24x10xf32>
    %c48_160 = arith.constant 48 : index
    %c0_161 = arith.constant 0 : index
    %118 = vector.load %arg12[%c48_160, %c0_161] : memref<96x250xf32, #tpu.memory_space<vmem>>, vector<24x10xf32>
    tpu.vector_store %arg12[%c48_160, %c0_161], %117 {strides = array<i32>} : memref<96x250xf32, #tpu.memory_space<vmem>>, vector<24x10xf32>,
    %c120_162 = arith.constant 120 : index
    %c0_163 = arith.constant 0 : index
    %119 = vector.load %arg11[%c120_162, %c0_163] : memref<160x10xf32, #tpu.memory_space<vmem>>, vector<24x10xf32>
    %c48_164 = arith.constant 48 : index
    %c10_165 = arith.constant 10 : index
    %120 = vector.load %arg12[%c48_164, %c10_165] : memref<96x250xf32, #tpu.memory_space<vmem>>, vector<24x10xf32>
    tpu.vector_store %arg12[%c48_164, %c10_165], %119 {strides = array<i32>} : memref<96x250xf32, #tpu.memory_space<vmem>>, vector<24x10xf32>,
    %c81_166 = arith.constant 81 : index
    %c0_167 = arith.constant 0 : index
    %121 = vector.load %arg11[%c81_166, %c0_167] : memref<160x10xf32, #tpu.memory_space<vmem>>, vector<24x10xf32>
    %c48_168 = arith.constant 48 : index
    %c20_169 = arith.constant 20 : index
    %122 = vector.load %arg12[%c48_168, %c20_169] : memref<96x250xf32, #tpu.memory_space<vmem>>, vector<24x10xf32>
    tpu.vector_store %arg12[%c48_168, %c20_169], %121 {strides = array<i32>} : memref<96x250xf32, #tpu.memory_space<vmem>>, vector<24x10xf32>,
    %c121_170 = arith.constant 121 : index
    %c0_171 = arith.constant 0 : index
    %123 = vector.load %arg11[%c121_170, %c0_171] : memref<160x10xf32, #tpu.memory_space<vmem>>, vector<24x10xf32>
    %c48_172 = arith.constant 48 : index
    %c30_173 = arith.constant 30 : index
    %124 = vector.load %arg12[%c48_172, %c30_173] : memref<96x250xf32, #tpu.memory_space<vmem>>, vector<24x10xf32>
    tpu.vector_store %arg12[%c48_172, %c30_173], %123 {strides = array<i32>} : memref<96x250xf32, #tpu.memory_space<vmem>>, vector<24x10xf32>,
    %c82_174 = arith.constant 82 : index
    %c0_175 = arith.constant 0 : index
    %125 = vector.load %arg11[%c82_174, %c0_175] : memref<160x10xf32, #tpu.memory_space<vmem>>, vector<24x10xf32>
    %c48_176 = arith.constant 48 : index
    %c40_177 = arith.constant 40 : index
    %126 = vector.load %arg12[%c48_176, %c40_177] : memref<96x250xf32, #tpu.memory_space<vmem>>, vector<24x10xf32>
    tpu.vector_store %arg12[%c48_176, %c40_177], %125 {strides = array<i32>} : memref<96x250xf32, #tpu.memory_space<vmem>>, vector<24x10xf32>,
    %c6_178 = arith.constant 6 : index
    %c0_179 = arith.constant 0 : index
    %127 = vector.load %arg11[%c6_178, %c0_179] : memref<160x10xf32, #tpu.memory_space<vmem>>, vector<24x10xf32>
    %c48_180 = arith.constant 48 : index
    %c50_181 = arith.constant 50 : index
    %128 = vector.load %arg12[%c48_180, %c50_181] : memref<96x250xf32, #tpu.memory_space<vmem>>, vector<24x10xf32>
    tpu.vector_store %arg12[%c48_180, %c50_181], %127 {strides = array<i32>} : memref<96x250xf32, #tpu.memory_space<vmem>>, vector<24x10xf32>,
    %c46_182 = arith.constant 46 : index
    %c0_183 = arith.constant 0 : index
    %129 = vector.load %arg11[%c46_182, %c0_183] : memref<160x10xf32, #tpu.memory_space<vmem>>, vector<24x10xf32>
    %c48_184 = arith.constant 48 : index
    %c60_185 = arith.constant 60 : index
    %130 = vector.load %arg12[%c48_184, %c60_185] : memref<96x250xf32, #tpu.memory_space<vmem>>, vector<24x10xf32>
    tpu.vector_store %arg12[%c48_184, %c60_185], %129 {strides = array<i32>} : memref<96x250xf32, #tpu.memory_space<vmem>>, vector<24x10xf32>,
    %c7_186 = arith.constant 7 : index
    %c0_187 = arith.constant 0 : index
    %131 = vector.load %arg11[%c7_186, %c0_187] : memref<160x10xf32, #tpu.memory_space<vmem>>, vector<24x10xf32>
    %c48_188 = arith.constant 48 : index
    %c70_189 = arith.constant 70 : index
    %132 = vector.load %arg12[%c48_188, %c70_189] : memref<96x250xf32, #tpu.memory_space<vmem>>, vector<24x10xf32>
    tpu.vector_store %arg12[%c48_188, %c70_189], %131 {strides = array<i32>} : memref<96x250xf32, #tpu.memory_space<vmem>>, vector<24x10xf32>,
    %c47_190 = arith.constant 47 : index
    %c0_191 = arith.constant 0 : index
    %133 = vector.load %arg11[%c47_190, %c0_191] : memref<160x10xf32, #tpu.memory_space<vmem>>, vector<24x10xf32>
    %c48_192 = arith.constant 48 : index
    %c80_193 = arith.constant 80 : index
    %134 = vector.load %arg12[%c48_192, %c80_193] : memref<96x250xf32, #tpu.memory_space<vmem>>, vector<24x10xf32>
    tpu.vector_store %arg12[%c48_192, %c80_193], %133 {strides = array<i32>} : memref<96x250xf32, #tpu.memory_space<vmem>>, vector<24x10xf32>,
    %c8_194 = arith.constant 8 : index
    %c0_195 = arith.constant 0 : index
    %135 = vector.load %arg11[%c8_194, %c0_195] : memref<160x10xf32, #tpu.memory_space<vmem>>, vector<24x10xf32>
    %c48_196 = arith.constant 48 : index
    %c90_197 = arith.constant 90 : index
    %136 = vector.load %arg12[%c48_196, %c90_197] : memref<96x250xf32, #tpu.memory_space<vmem>>, vector<24x10xf32>
    tpu.vector_store %arg12[%c48_196, %c90_197], %135 {strides = array<i32>} : memref<96x250xf32, #tpu.memory_space<vmem>>, vector<24x10xf32>,
    %c86_198 = arith.constant 86 : index
    %c0_199 = arith.constant 0 : index
    %137 = vector.load %arg11[%c86_198, %c0_199] : memref<160x10xf32, #tpu.memory_space<vmem>>, vector<24x10xf32>
    %c48_200 = arith.constant 48 : index
    %c100_201 = arith.constant 100 : index
    %138 = vector.load %arg12[%c48_200, %c100_201] : memref<96x250xf32, #tpu.memory_space<vmem>>, vector<24x10xf32>
    tpu.vector_store %arg12[%c48_200, %c100_201], %137 {strides = array<i32>} : memref<96x250xf32, #tpu.memory_space<vmem>>, vector<24x10xf32>,
    %c126_202 = arith.constant 126 : index
    %c0_203 = arith.constant 0 : index
    %139 = vector.load %arg11[%c126_202, %c0_203] : memref<160x10xf32, #tpu.memory_space<vmem>>, vector<24x10xf32>
    %c48_204 = arith.constant 48 : index
    %c110_205 = arith.constant 110 : index
    %140 = vector.load %arg12[%c48_204, %c110_205] : memref<96x250xf32, #tpu.memory_space<vmem>>, vector<24x10xf32>
    tpu.vector_store %arg12[%c48_204, %c110_205], %139 {strides = array<i32>} : memref<96x250xf32, #tpu.memory_space<vmem>>, vector<24x10xf32>,
    %c87_206 = arith.constant 87 : index
    %c0_207 = arith.constant 0 : index
    %141 = vector.load %arg11[%c87_206, %c0_207] : memref<160x10xf32, #tpu.memory_space<vmem>>, vector<24x10xf32>
    %c48_208 = arith.constant 48 : index
    %c120_209 = arith.constant 120 : index
    %142 = vector.load %arg12[%c48_208, %c120_209] : memref<96x250xf32, #tpu.memory_space<vmem>>, vector<24x10xf32>
    tpu.vector_store %arg12[%c48_208, %c120_209], %141 {strides = array<i32>} : memref<96x250xf32, #tpu.memory_space<vmem>>, vector<24x10xf32>,
    %c127_210 = arith.constant 127 : index
    %c0_211 = arith.constant 0 : index
    %143 = vector.load %arg11[%c127_210, %c0_211] : memref<160x10xf32, #tpu.memory_space<vmem>>, vector<24x10xf32>
    %c48_212 = arith.constant 48 : index
    %c130_213 = arith.constant 130 : index
    %144 = vector.load %arg12[%c48_212, %c130_213] : memref<96x250xf32, #tpu.memory_space<vmem>>, vector<24x10xf32>
    tpu.vector_store %arg12[%c48_212, %c130_213], %143 {strides = array<i32>} : memref<96x250xf32, #tpu.memory_space<vmem>>, vector<24x10xf32>,
    %c88_214 = arith.constant 88 : index
    %c0_215 = arith.constant 0 : index
    %145 = vector.load %arg11[%c88_214, %c0_215] : memref<160x10xf32, #tpu.memory_space<vmem>>, vector<24x10xf32>
    %c48_216 = arith.constant 48 : index
    %c140_217 = arith.constant 140 : index
    %146 = vector.load %arg12[%c48_216, %c140_217] : memref<96x250xf32, #tpu.memory_space<vmem>>, vector<24x10xf32>
    tpu.vector_store %arg12[%c48_216, %c140_217], %145 {strides = array<i32>} : memref<96x250xf32, #tpu.memory_space<vmem>>, vector<24x10xf32>,
    %c12_218 = arith.constant 12 : index
    %c0_219 = arith.constant 0 : index
    %147 = vector.load %arg11[%c12_218, %c0_219] : memref<160x10xf32, #tpu.memory_space<vmem>>, vector<24x10xf32>
    %c48_220 = arith.constant 48 : index
    %c150_221 = arith.constant 150 : index
    %148 = vector.load %arg12[%c48_220, %c150_221] : memref<96x250xf32, #tpu.memory_space<vmem>>, vector<24x10xf32>
    tpu.vector_store %arg12[%c48_220, %c150_221], %147 {strides = array<i32>} : memref<96x250xf32, #tpu.memory_space<vmem>>, vector<24x10xf32>,
    %c52_222 = arith.constant 52 : index
    %c0_223 = arith.constant 0 : index
    %149 = vector.load %arg11[%c52_222, %c0_223] : memref<160x10xf32, #tpu.memory_space<vmem>>, vector<24x10xf32>
    %c48_224 = arith.constant 48 : index
    %c160_225 = arith.constant 160 : index
    %150 = vector.load %arg12[%c48_224, %c160_225] : memref<96x250xf32, #tpu.memory_space<vmem>>, vector<24x10xf32>
    tpu.vector_store %arg12[%c48_224, %c160_225], %149 {strides = array<i32>} : memref<96x250xf32, #tpu.memory_space<vmem>>, vector<24x10xf32>,
    %c13_226 = arith.constant 13 : index
    %c0_227 = arith.constant 0 : index
    %151 = vector.load %arg11[%c13_226, %c0_227] : memref<160x10xf32, #tpu.memory_space<vmem>>, vector<24x10xf32>
    %c48_228 = arith.constant 48 : index
    %c170_229 = arith.constant 170 : index
    %152 = vector.load %arg12[%c48_228, %c170_229] : memref<96x250xf32, #tpu.memory_space<vmem>>, vector<24x10xf32>
    tpu.vector_store %arg12[%c48_228, %c170_229], %151 {strides = array<i32>} : memref<96x250xf32, #tpu.memory_space<vmem>>, vector<24x10xf32>,
    %c53_230 = arith.constant 53 : index
    %c0_231 = arith.constant 0 : index
    %153 = vector.load %arg11[%c53_230, %c0_231] : memref<160x10xf32, #tpu.memory_space<vmem>>, vector<24x10xf32>
    %c48_232 = arith.constant 48 : index
    %c180_233 = arith.constant 180 : index
    %154 = vector.load %arg12[%c48_232, %c180_233] : memref<96x250xf32, #tpu.memory_space<vmem>>, vector<24x10xf32>
    tpu.vector_store %arg12[%c48_232, %c180_233], %153 {strides = array<i32>} : memref<96x250xf32, #tpu.memory_space<vmem>>, vector<24x10xf32>,
    %c14_234 = arith.constant 14 : index
    %c0_235 = arith.constant 0 : index
    %155 = vector.load %arg11[%c14_234, %c0_235] : memref<160x10xf32, #tpu.memory_space<vmem>>, vector<24x10xf32>
    %c48_236 = arith.constant 48 : index
    %c190_237 = arith.constant 190 : index
    %156 = vector.load %arg12[%c48_236, %c190_237] : memref<96x250xf32, #tpu.memory_space<vmem>>, vector<24x10xf32>
    tpu.vector_store %arg12[%c48_236, %c190_237], %155 {strides = array<i32>} : memref<96x250xf32, #tpu.memory_space<vmem>>, vector<24x10xf32>,
    %c92 = arith.constant 92 : index
    %c0_238 = arith.constant 0 : index
    %157 = vector.load %arg11[%c92, %c0_238] : memref<160x10xf32, #tpu.memory_space<vmem>>, vector<24x10xf32>
    %c48_239 = arith.constant 48 : index
    %c200_240 = arith.constant 200 : index
    %158 = vector.load %arg12[%c48_239, %c200_240] : memref<96x250xf32, #tpu.memory_space<vmem>>, vector<24x10xf32>
    tpu.vector_store %arg12[%c48_239, %c200_240], %157 {strides = array<i32>} : memref<96x250xf32, #tpu.memory_space<vmem>>, vector<24x10xf32>,
    %c132 = arith.constant 132 : index
    %c0_241 = arith.constant 0 : index
    %159 = vector.load %arg11[%c132, %c0_241] : memref<160x10xf32, #tpu.memory_space<vmem>>, vector<24x10xf32>
    %c48_242 = arith.constant 48 : index
    %c210_243 = arith.constant 210 : index
    %160 = vector.load %arg12[%c48_242, %c210_243] : memref<96x250xf32, #tpu.memory_space<vmem>>, vector<24x10xf32>
    tpu.vector_store %arg12[%c48_242, %c210_243], %159 {strides = array<i32>} : memref<96x250xf32, #tpu.memory_space<vmem>>, vector<24x10xf32>,
    %c93 = arith.constant 93 : index
    %c0_244 = arith.constant 0 : index
    %161 = vector.load %arg11[%c93, %c0_244] : memref<160x10xf32, #tpu.memory_space<vmem>>, vector<24x10xf32>
    %c48_245 = arith.constant 48 : index
    %c220_246 = arith.constant 220 : index
    %162 = vector.load %arg12[%c48_245, %c220_246] : memref<96x250xf32, #tpu.memory_space<vmem>>, vector<24x10xf32>
    tpu.vector_store %arg12[%c48_245, %c220_246], %161 {strides = array<i32>} : memref<96x250xf32, #tpu.memory_space<vmem>>, vector<24x10xf32>,
    %c133 = arith.constant 133 : index
    %c0_247 = arith.constant 0 : index
    %163 = vector.load %arg11[%c133, %c0_247] : memref<160x10xf32, #tpu.memory_space<vmem>>, vector<24x10xf32>
    %c48_248 = arith.constant 48 : index
    %c230_249 = arith.constant 230 : index
    %164 = vector.load %arg12[%c48_248, %c230_249] : memref<96x250xf32, #tpu.memory_space<vmem>>, vector<24x10xf32>
    tpu.vector_store %arg12[%c48_248, %c230_249], %163 {strides = array<i32>} : memref<96x250xf32, #tpu.memory_space<vmem>>, vector<24x10xf32>,
    %c94 = arith.constant 94 : index
    %c0_250 = arith.constant 0 : index
    %165 = vector.load %arg11[%c94, %c0_250] : memref<160x10xf32, #tpu.memory_space<vmem>>, vector<24x10xf32>
    %c48_251 = arith.constant 48 : index
    %c240_252 = arith.constant 240 : index
    %166 = vector.load %arg12[%c48_251, %c240_252] : memref<96x250xf32, #tpu.memory_space<vmem>>, vector<24x10xf32>
    tpu.vector_store %arg12[%c48_251, %c240_252], %165 {strides = array<i32>} : memref<96x250xf32, #tpu.memory_space<vmem>>, vector<24x10xf32>,
    %c120_253 = arith.constant 120 : index
    %c0_254 = arith.constant 0 : index
    %167 = vector.load %arg11[%c120_253, %c0_254] : memref<160x10xf32, #tpu.memory_space<vmem>>, vector<24x10xf32>
    %c72 = arith.constant 72 : index
    %c0_255 = arith.constant 0 : index
    %168 = vector.load %arg12[%c72, %c0_255] : memref<96x250xf32, #tpu.memory_space<vmem>>, vector<24x10xf32>
    tpu.vector_store %arg12[%c72, %c0_255], %167 {strides = array<i32>} : memref<96x250xf32, #tpu.memory_space<vmem>>, vector<24x10xf32>,
    %c81_256 = arith.constant 81 : index
    %c0_257 = arith.constant 0 : index
    %169 = vector.load %arg11[%c81_256, %c0_257] : memref<160x10xf32, #tpu.memory_space<vmem>>, vector<24x10xf32>
    %c72_258 = arith.constant 72 : index
    %c10_259 = arith.constant 10 : index
    %170 = vector.load %arg12[%c72_258, %c10_259] : memref<96x250xf32, #tpu.memory_space<vmem>>, vector<24x10xf32>
    tpu.vector_store %arg12[%c72_258, %c10_259], %169 {strides = array<i32>} : memref<96x250xf32, #tpu.memory_space<vmem>>, vector<24x10xf32>,
    %c121_260 = arith.constant 121 : index
    %c0_261 = arith.constant 0 : index
    %171 = vector.load %arg11[%c121_260, %c0_261] : memref<160x10xf32, #tpu.memory_space<vmem>>, vector<24x10xf32>
    %c72_262 = arith.constant 72 : index
    %c20_263 = arith.constant 20 : index
    %172 = vector.load %arg12[%c72_262, %c20_263] : memref<96x250xf32, #tpu.memory_space<vmem>>, vector<24x10xf32>
    tpu.vector_store %arg12[%c72_262, %c20_263], %171 {strides = array<i32>} : memref<96x250xf32, #tpu.memory_space<vmem>>, vector<24x10xf32>,
    %c82_264 = arith.constant 82 : index
    %c0_265 = arith.constant 0 : index
    %173 = vector.load %arg11[%c82_264, %c0_265] : memref<160x10xf32, #tpu.memory_space<vmem>>, vector<24x10xf32>
    %c72_266 = arith.constant 72 : index
    %c30_267 = arith.constant 30 : index
    %174 = vector.load %arg12[%c72_266, %c30_267] : memref<96x250xf32, #tpu.memory_space<vmem>>, vector<24x10xf32>
    tpu.vector_store %arg12[%c72_266, %c30_267], %173 {strides = array<i32>} : memref<96x250xf32, #tpu.memory_space<vmem>>, vector<24x10xf32>,
    %c122_268 = arith.constant 122 : index
    %c0_269 = arith.constant 0 : index
    %175 = vector.load %arg11[%c122_268, %c0_269] : memref<160x10xf32, #tpu.memory_space<vmem>>, vector<24x10xf32>
    %c72_270 = arith.constant 72 : index
    %c40_271 = arith.constant 40 : index
    %176 = vector.load %arg12[%c72_270, %c40_271] : memref<96x250xf32, #tpu.memory_space<vmem>>, vector<24x10xf32>
    tpu.vector_store %arg12[%c72_270, %c40_271], %175 {strides = array<i32>} : memref<96x250xf32, #tpu.memory_space<vmem>>, vector<24x10xf32>,
    %c46_272 = arith.constant 46 : index
    %c0_273 = arith.constant 0 : index
    %177 = vector.load %arg11[%c46_272, %c0_273] : memref<160x10xf32, #tpu.memory_space<vmem>>, vector<24x10xf32>
    %c72_274 = arith.constant 72 : index
    %c50_275 = arith.constant 50 : index
    %178 = vector.load %arg12[%c72_274, %c50_275] : memref<96x250xf32, #tpu.memory_space<vmem>>, vector<24x10xf32>
    tpu.vector_store %arg12[%c72_274, %c50_275], %177 {strides = array<i32>} : memref<96x250xf32, #tpu.memory_space<vmem>>, vector<24x10xf32>,
    %c7_276 = arith.constant 7 : index
    %c0_277 = arith.constant 0 : index
    %179 = vector.load %arg11[%c7_276, %c0_277] : memref<160x10xf32, #tpu.memory_space<vmem>>, vector<24x10xf32>
    %c72_278 = arith.constant 72 : index
    %c60_279 = arith.constant 60 : index
    %180 = vector.load %arg12[%c72_278, %c60_279] : memref<96x250xf32, #tpu.memory_space<vmem>>, vector<24x10xf32>
    tpu.vector_store %arg12[%c72_278, %c60_279], %179 {strides = array<i32>} : memref<96x250xf32, #tpu.memory_space<vmem>>, vector<24x10xf32>,
    %c47_280 = arith.constant 47 : index
    %c0_281 = arith.constant 0 : index
    %181 = vector.load %arg11[%c47_280, %c0_281] : memref<160x10xf32, #tpu.memory_space<vmem>>, vector<24x10xf32>
    %c72_282 = arith.constant 72 : index
    %c70_283 = arith.constant 70 : index
    %182 = vector.load %arg12[%c72_282, %c70_283] : memref<96x250xf32, #tpu.memory_space<vmem>>, vector<24x10xf32>
    tpu.vector_store %arg12[%c72_282, %c70_283], %181 {strides = array<i32>} : memref<96x250xf32, #tpu.memory_space<vmem>>, vector<24x10xf32>,
    %c8_284 = arith.constant 8 : index
    %c0_285 = arith.constant 0 : index
    %183 = vector.load %arg11[%c8_284, %c0_285] : memref<160x10xf32, #tpu.memory_space<vmem>>, vector<24x10xf32>
    %c72_286 = arith.constant 72 : index
    %c80_287 = arith.constant 80 : index
    %184 = vector.load %arg12[%c72_286, %c80_287] : memref<96x250xf32, #tpu.memory_space<vmem>>, vector<24x10xf32>
    tpu.vector_store %arg12[%c72_286, %c80_287], %183 {strides = array<i32>} : memref<96x250xf32, #tpu.memory_space<vmem>>, vector<24x10xf32>,
    %c48_288 = arith.constant 48 : index
    %c0_289 = arith.constant 0 : index
    %185 = vector.load %arg11[%c48_288, %c0_289] : memref<160x10xf32, #tpu.memory_space<vmem>>, vector<24x10xf32>
    %c72_290 = arith.constant 72 : index
    %c90_291 = arith.constant 90 : index
    %186 = vector.load %arg12[%c72_290, %c90_291] : memref<96x250xf32, #tpu.memory_space<vmem>>, vector<24x10xf32>
    tpu.vector_store %arg12[%c72_290, %c90_291], %185 {strides = array<i32>} : memref<96x250xf32, #tpu.memory_space<vmem>>, vector<24x10xf32>,
    %c126_292 = arith.constant 126 : index
    %c0_293 = arith.constant 0 : index
    %187 = vector.load %arg11[%c126_292, %c0_293] : memref<160x10xf32, #tpu.memory_space<vmem>>, vector<24x10xf32>
    %c72_294 = arith.constant 72 : index
    %c100_295 = arith.constant 100 : index
    %188 = vector.load %arg12[%c72_294, %c100_295] : memref<96x250xf32, #tpu.memory_space<vmem>>, vector<24x10xf32>
    tpu.vector_store %arg12[%c72_294, %c100_295], %187 {strides = array<i32>} : memref<96x250xf32, #tpu.memory_space<vmem>>, vector<24x10xf32>,
    %c87_296 = arith.constant 87 : index
    %c0_297 = arith.constant 0 : index
    %189 = vector.load %arg11[%c87_296, %c0_297] : memref<160x10xf32, #tpu.memory_space<vmem>>, vector<24x10xf32>
    %c72_298 = arith.constant 72 : index
    %c110_299 = arith.constant 110 : index
    %190 = vector.load %arg12[%c72_298, %c110_299] : memref<96x250xf32, #tpu.memory_space<vmem>>, vector<24x10xf32>
    tpu.vector_store %arg12[%c72_298, %c110_299], %189 {strides = array<i32>} : memref<96x250xf32, #tpu.memory_space<vmem>>, vector<24x10xf32>,
    %c127_300 = arith.constant 127 : index
    %c0_301 = arith.constant 0 : index
    %191 = vector.load %arg11[%c127_300, %c0_301] : memref<160x10xf32, #tpu.memory_space<vmem>>, vector<24x10xf32>
    %c72_302 = arith.constant 72 : index
    %c120_303 = arith.constant 120 : index
    %192 = vector.load %arg12[%c72_302, %c120_303] : memref<96x250xf32, #tpu.memory_space<vmem>>, vector<24x10xf32>
    tpu.vector_store %arg12[%c72_302, %c120_303], %191 {strides = array<i32>} : memref<96x250xf32, #tpu.memory_space<vmem>>, vector<24x10xf32>,
    %c88_304 = arith.constant 88 : index
    %c0_305 = arith.constant 0 : index
    %193 = vector.load %arg11[%c88_304, %c0_305] : memref<160x10xf32, #tpu.memory_space<vmem>>, vector<24x10xf32>
    %c72_306 = arith.constant 72 : index
    %c130_307 = arith.constant 130 : index
    %194 = vector.load %arg12[%c72_306, %c130_307] : memref<96x250xf32, #tpu.memory_space<vmem>>, vector<24x10xf32>
    tpu.vector_store %arg12[%c72_306, %c130_307], %193 {strides = array<i32>} : memref<96x250xf32, #tpu.memory_space<vmem>>, vector<24x10xf32>,
    %c128_308 = arith.constant 128 : index
    %c0_309 = arith.constant 0 : index
    %195 = vector.load %arg11[%c128_308, %c0_309] : memref<160x10xf32, #tpu.memory_space<vmem>>, vector<24x10xf32>
    %c72_310 = arith.constant 72 : index
    %c140_311 = arith.constant 140 : index
    %196 = vector.load %arg12[%c72_310, %c140_311] : memref<96x250xf32, #tpu.memory_space<vmem>>, vector<24x10xf32>
    tpu.vector_store %arg12[%c72_310, %c140_311], %195 {strides = array<i32>} : memref<96x250xf32, #tpu.memory_space<vmem>>, vector<24x10xf32>,
    %c52_312 = arith.constant 52 : index
    %c0_313 = arith.constant 0 : index
    %197 = vector.load %arg11[%c52_312, %c0_313] : memref<160x10xf32, #tpu.memory_space<vmem>>, vector<24x10xf32>
    %c72_314 = arith.constant 72 : index
    %c150_315 = arith.constant 150 : index
    %198 = vector.load %arg12[%c72_314, %c150_315] : memref<96x250xf32, #tpu.memory_space<vmem>>, vector<24x10xf32>
    tpu.vector_store %arg12[%c72_314, %c150_315], %197 {strides = array<i32>} : memref<96x250xf32, #tpu.memory_space<vmem>>, vector<24x10xf32>,
    %c13_316 = arith.constant 13 : index
    %c0_317 = arith.constant 0 : index
    %199 = vector.load %arg11[%c13_316, %c0_317] : memref<160x10xf32, #tpu.memory_space<vmem>>, vector<24x10xf32>
    %c72_318 = arith.constant 72 : index
    %c160_319 = arith.constant 160 : index
    %200 = vector.load %arg12[%c72_318, %c160_319] : memref<96x250xf32, #tpu.memory_space<vmem>>, vector<24x10xf32>
    tpu.vector_store %arg12[%c72_318, %c160_319], %199 {strides = array<i32>} : memref<96x250xf32, #tpu.memory_space<vmem>>, vector<24x10xf32>,
    %c53_320 = arith.constant 53 : index
    %c0_321 = arith.constant 0 : index
    %201 = vector.load %arg11[%c53_320, %c0_321] : memref<160x10xf32, #tpu.memory_space<vmem>>, vector<24x10xf32>
    %c72_322 = arith.constant 72 : index
    %c170_323 = arith.constant 170 : index
    %202 = vector.load %arg12[%c72_322, %c170_323] : memref<96x250xf32, #tpu.memory_space<vmem>>, vector<24x10xf32>
    tpu.vector_store %arg12[%c72_322, %c170_323], %201 {strides = array<i32>} : memref<96x250xf32, #tpu.memory_space<vmem>>, vector<24x10xf32>,
    %c14_324 = arith.constant 14 : index
    %c0_325 = arith.constant 0 : index
    %203 = vector.load %arg11[%c14_324, %c0_325] : memref<160x10xf32, #tpu.memory_space<vmem>>, vector<24x10xf32>
    %c72_326 = arith.constant 72 : index
    %c180_327 = arith.constant 180 : index
    %204 = vector.load %arg12[%c72_326, %c180_327] : memref<96x250xf32, #tpu.memory_space<vmem>>, vector<24x10xf32>
    tpu.vector_store %arg12[%c72_326, %c180_327], %203 {strides = array<i32>} : memref<96x250xf32, #tpu.memory_space<vmem>>, vector<24x10xf32>,
    %c54_328 = arith.constant 54 : index
    %c0_329 = arith.constant 0 : index
    %205 = vector.load %arg11[%c54_328, %c0_329] : memref<160x10xf32, #tpu.memory_space<vmem>>, vector<24x10xf32>
    %c72_330 = arith.constant 72 : index
    %c190_331 = arith.constant 190 : index
    %206 = vector.load %arg12[%c72_330, %c190_331] : memref<96x250xf32, #tpu.memory_space<vmem>>, vector<24x10xf32>
    tpu.vector_store %arg12[%c72_330, %c190_331], %205 {strides = array<i32>} : memref<96x250xf32, #tpu.memory_space<vmem>>, vector<24x10xf32>,
    %c132_332 = arith.constant 132 : index
    %c0_333 = arith.constant 0 : index
    %207 = vector.load %arg11[%c132_332, %c0_333] : memref<160x10xf32, #tpu.memory_space<vmem>>, vector<24x10xf32>
    %c72_334 = arith.constant 72 : index
    %c200_335 = arith.constant 200 : index
    %208 = vector.load %arg12[%c72_334, %c200_335] : memref<96x250xf32, #tpu.memory_space<vmem>>, vector<24x10xf32>
    tpu.vector_store %arg12[%c72_334, %c200_335], %207 {strides = array<i32>} : memref<96x250xf32, #tpu.memory_space<vmem>>, vector<24x10xf32>,
    %c93_336 = arith.constant 93 : index
    %c0_337 = arith.constant 0 : index
    %209 = vector.load %arg11[%c93_336, %c0_337] : memref<160x10xf32, #tpu.memory_space<vmem>>, vector<24x10xf32>
    %c72_338 = arith.constant 72 : index
    %c210_339 = arith.constant 210 : index
    %210 = vector.load %arg12[%c72_338, %c210_339] : memref<96x250xf32, #tpu.memory_space<vmem>>, vector<24x10xf32>
    tpu.vector_store %arg12[%c72_338, %c210_339], %209 {strides = array<i32>} : memref<96x250xf32, #tpu.memory_space<vmem>>, vector<24x10xf32>,
    %c133_340 = arith.constant 133 : index
    %c0_341 = arith.constant 0 : index
    %211 = vector.load %arg11[%c133_340, %c0_341] : memref<160x10xf32, #tpu.memory_space<vmem>>, vector<24x10xf32>
    %c72_342 = arith.constant 72 : index
    %c220_343 = arith.constant 220 : index
    %212 = vector.load %arg12[%c72_342, %c220_343] : memref<96x250xf32, #tpu.memory_space<vmem>>, vector<24x10xf32>
    tpu.vector_store %arg12[%c72_342, %c220_343], %211 {strides = array<i32>} : memref<96x250xf32, #tpu.memory_space<vmem>>, vector<24x10xf32>,
    %c94_344 = arith.constant 94 : index
    %c0_345 = arith.constant 0 : index
    %213 = vector.load %arg11[%c94_344, %c0_345] : memref<160x10xf32, #tpu.memory_space<vmem>>, vector<24x10xf32>
    %c72_346 = arith.constant 72 : index
    %c230_347 = arith.constant 230 : index
    %214 = vector.load %arg12[%c72_346, %c230_347] : memref<96x250xf32, #tpu.memory_space<vmem>>, vector<24x10xf32>
    tpu.vector_store %arg12[%c72_346, %c230_347], %213 {strides = array<i32>} : memref<96x250xf32, #tpu.memory_space<vmem>>, vector<24x10xf32>,
    %c134 = arith.constant 134 : index
    %c0_348 = arith.constant 0 : index
    %215 = vector.load %arg11[%c134, %c0_348] : memref<160x10xf32, #tpu.memory_space<vmem>>, vector<24x10xf32>
    %c72_349 = arith.constant 72 : index
    %c240_350 = arith.constant 240 : index
    %216 = vector.load %arg12[%c72_349, %c240_350] : memref<96x250xf32, #tpu.memory_space<vmem>>, vector<24x10xf32>
    tpu.vector_store %arg12[%c72_349, %c240_350], %215 {strides = array<i32>} : memref<96x250xf32, #tpu.memory_space<vmem>>, vector<24x10xf32>,
    %c0_351 = arith.constant 0 : index
    %c0_352 = arith.constant 0 : index
    %217 = vector.load %arg12[%c0_351, %c0_352] : memref<96x250xf32, #tpu.memory_space<vmem>>, vector<96x250xf32>
    %c0_353 = arith.constant 0 : index
    %c0_354 = arith.constant 0 : index
    %218 = vector.load %arg4[%c0_353, %c0_354] : memref<250x20xf32, #tpu.memory_space<vmem>>, vector<250x20xf32>
    %cst_355 = arith.constant dense<0.000000e+00> : vector<96x20xf32>
    %219 = tpu.matmul %217, %218, %cst_355 {dimension_numbers = #tpu.dot_dimension_numbers<[1], [0], [0], [1], [0, 0, 1, 1], [], []>} : vector<96x250xf32>, vector<250x20xf32>, vector<96x20xf32> -> vector<96x20xf32>
    %220 = vector.extract_strided_slice %219 {offsets = [0, 0], sizes = [24, 20], strides = [1, 1]} : vector<96x20xf32> to vector<24x20xf32>
    %221 = vector.extract_strided_slice %219 {offsets = [24, 0], sizes = [24, 20], strides = [1, 1]} : vector<96x20xf32> to vector<24x20xf32>
    %222 = arith.maximumf %220, %221 : vector<24x20xf32>
    %223 = vector.extract_strided_slice %219 {offsets = [48, 0], sizes = [24, 20], strides = [1, 1]} : vector<96x20xf32> to vector<24x20xf32>
    %224 = vector.extract_strided_slice %219 {offsets = [72, 0], sizes = [24, 20], strides = [1, 1]} : vector<96x20xf32> to vector<24x20xf32>
    %225 = arith.maximumf %223, %224 : vector<24x20xf32>
    %226 = arith.maximumf %222, %225 : vector<24x20xf32>
    %c0_356 = arith.constant 0 : index
    %c0_357 = arith.constant 0 : index
    %227 = vector.load %arg5[%c0_356, %c0_357] : memref<1x20xf32, #tpu.memory_space<vmem>>, vector<1x20xf32>
    %228 = vector.broadcast %227 : vector<1x20xf32> to vector<24x20xf32>
    %229 = arith.addf %226, %228 : vector<24x20xf32>
    %cst_358 = arith.constant 0.000000e+00 : f32
    %230 = vector.broadcast %cst_358 : f32 to vector<24x20xf32>
    %231 = arith.maximumf %229, %230 : vector<24x20xf32>
    %232 = vector.extract_strided_slice %231 {offsets = [0, 0], sizes = [1, 20], strides = [1, 1]} : vector<24x20xf32> to vector<1x20xf32>
    %233 = vector.extract_strided_slice %231 {offsets = [1, 0], sizes = [1, 20], strides = [1, 1]} : vector<24x20xf32> to vector<1x20xf32>
    %234 = vector.extract_strided_slice %231 {offsets = [2, 0], sizes = [1, 20], strides = [1, 1]} : vector<24x20xf32> to vector<1x20xf32>
    %235 = vector.extract_strided_slice %231 {offsets = [3, 0], sizes = [1, 20], strides = [1, 1]} : vector<24x20xf32> to vector<1x20xf32>
    %236 = vector.extract_strided_slice %231 {offsets = [6, 0], sizes = [1, 20], strides = [1, 1]} : vector<24x20xf32> to vector<1x20xf32>
    %237 = vector.extract_strided_slice %231 {offsets = [7, 0], sizes = [1, 20], strides = [1, 1]} : vector<24x20xf32> to vector<1x20xf32>
    %238 = vector.extract_strided_slice %231 {offsets = [8, 0], sizes = [1, 20], strides = [1, 1]} : vector<24x20xf32> to vector<1x20xf32>
    %239 = vector.extract_strided_slice %231 {offsets = [9, 0], sizes = [1, 20], strides = [1, 1]} : vector<24x20xf32> to vector<1x20xf32>
    %240 = vector.extract_strided_slice %231 {offsets = [12, 0], sizes = [1, 20], strides = [1, 1]} : vector<24x20xf32> to vector<1x20xf32>
    %241 = vector.extract_strided_slice %231 {offsets = [13, 0], sizes = [1, 20], strides = [1, 1]} : vector<24x20xf32> to vector<1x20xf32>
    %242 = vector.extract_strided_slice %231 {offsets = [14, 0], sizes = [1, 20], strides = [1, 1]} : vector<24x20xf32> to vector<1x20xf32>
    %243 = vector.extract_strided_slice %231 {offsets = [15, 0], sizes = [1, 20], strides = [1, 1]} : vector<24x20xf32> to vector<1x20xf32>
    %244 = vector.extract_strided_slice %231 {offsets = [18, 0], sizes = [1, 20], strides = [1, 1]} : vector<24x20xf32> to vector<1x20xf32>
    %245 = vector.extract_strided_slice %231 {offsets = [19, 0], sizes = [1, 20], strides = [1, 1]} : vector<24x20xf32> to vector<1x20xf32>
    %246 = vector.extract_strided_slice %231 {offsets = [20, 0], sizes = [1, 20], strides = [1, 1]} : vector<24x20xf32> to vector<1x20xf32>
    %247 = vector.extract_strided_slice %231 {offsets = [21, 0], sizes = [1, 20], strides = [1, 1]} : vector<24x20xf32> to vector<1x20xf32>
    %248 = tpu.concatenate %232, %233, %234, %235, %236, %237, %238, %239, %240, %241, %242, %243, %244, %245, %246, %247 in 1 : vector<1x20xf32>, vector<1x20xf32>, vector<1x20xf32>, vector<1x20xf32>, vector<1x20xf32>, vector<1x20xf32>, vector<1x20xf32>, vector<1x20xf32>, vector<1x20xf32>, vector<1x20xf32>, vector<1x20xf32>, vector<1x20xf32>, vector<1x20xf32>, vector<1x20xf32>, vector<1x20xf32>, vector<1x20xf32> -> vector<1x320xf32>
    %c0_359 = arith.constant 0 : index
    %c0_360 = arith.constant 0 : index
    %249 = vector.load %arg6[%c0_359, %c0_360] : memref<320x50xf32, #tpu.memory_space<vmem>>, vector<320x50xf32>
    %cst_361 = arith.constant dense<0.000000e+00> : vector<1x50xf32>
    %250 = tpu.matmul %248, %249, %cst_361 {dimension_numbers = #tpu.dot_dimension_numbers<[1], [0], [0], [1], [0, 0, 1, 1], [], []>} : vector<1x320xf32>, vector<320x50xf32>, vector<1x50xf32> -> vector<1x50xf32>
    %c0_362 = arith.constant 0 : index
    %c0_363 = arith.constant 0 : index
    %251 = vector.load %arg7[%c0_362, %c0_363] : memref<1x50xf32, #tpu.memory_space<vmem>>, vector<1x50xf32>
    %252 = arith.addf %250, %251 : vector<1x50xf32>
    %cst_364 = arith.constant 0.000000e+00 : f32
    %253 = vector.broadcast %cst_364 : f32 to vector<1x50xf32>
    %254 = arith.maximumf %252, %253 : vector<1x50xf32>
    %c0_365 = arith.constant 0 : index
    %c0_366 = arith.constant 0 : index
    %255 = vector.load %arg8[%c0_365, %c0_366] : memref<50x10xf32, #tpu.memory_space<vmem>>, vector<50x10xf32>
    %cst_367 = arith.constant dense<0.000000e+00> : vector<1x10xf32>
    %256 = tpu.matmul %254, %255, %cst_367 {dimension_numbers = #tpu.dot_dimension_numbers<[1], [0], [0], [1], [0, 0, 1, 1], [], []>} : vector<1x50xf32>, vector<50x10xf32>, vector<1x10xf32> -> vector<1x10xf32>
    %c0_368 = arith.constant 0 : index
    %c0_369 = arith.constant 0 : index
    %257 = vector.load %arg9[%c0_368, %c0_369] : memref<1x10xf32, #tpu.memory_space<vmem>>, vector<1x10xf32>
    %258 = arith.addf %256, %257 : vector<1x10xf32>
    %c0_370 = arith.constant 0 : index
    %c0_371 = arith.constant 0 : index
    %c0_372 = arith.constant 0 : index
    %259 = vector.load %arg10[%c0_370, %c0_371, %c0_372] : memref<1x1x10xf32, #tpu.memory_space<vmem>>, vector<1x1x10xf32>
    %260 = vector.shape_cast %259 : vector<1x1x10xf32> to vector<1x10xf32>
    %261 = vector.shape_cast %258 : vector<1x10xf32> to vector<1x1x10xf32>
    tpu.vector_store %arg10[%c0_370, %c0_371, %c0_372], %261 {strides = array<i32>} : memref<1x1x10xf32, #tpu.memory_space<vmem>>, vector<1x1x10xf32>,
    return
  }
  func.func @transform_0(%arg0: i32) -> (i32, i32, i32) {
    %c0_i32 = arith.constant 0 : i32
    %c0_i32_0 = arith.constant 0 : i32
    %c0_i32_1 = arith.constant 0 : i32
    return %arg0, %c0_i32, %c0_i32_0 : i32, i32, i32
  }
  func.func @transform_1(%arg0: i32) -> (i32, i32) {
    %c0_i32 = arith.constant 0 : i32
    %c0_i32_0 = arith.constant 0 : i32
    %c0_i32_1 = arith.constant 0 : i32
    return %c0_i32, %c0_i32_0 : i32, i32
  }
  func.func @transform_2(%arg0: i32) -> (i32, i32) {
    %c0_i32 = arith.constant 0 : i32
    %c0_i32_0 = arith.constant 0 : i32
    %c0_i32_1 = arith.constant 0 : i32
    return %c0_i32, %c0_i32_0 : i32, i32
  }
  func.func @transform_3(%arg0: i32) -> (i32, i32) {
    %c0_i32 = arith.constant 0 : i32
    %c0_i32_0 = arith.constant 0 : i32
    %c0_i32_1 = arith.constant 0 : i32
    return %c0_i32, %c0_i32_0 : i32, i32
  }
  func.func @transform_4(%arg0: i32) -> (i32, i32) {
    %c0_i32 = arith.constant 0 : i32
    %c0_i32_0 = arith.constant 0 : i32
    %c0_i32_1 = arith.constant 0 : i32
    return %c0_i32, %c0_i32_0 : i32, i32
  }
  func.func @transform_5(%arg0: i32) -> (i32, i32) {
    %c0_i32 = arith.constant 0 : i32
    %c0_i32_0 = arith.constant 0 : i32
    %c0_i32_1 = arith.constant 0 : i32
    return %c0_i32, %c0_i32_0 : i32, i32
  }
  func.func @transform_6(%arg0: i32) -> (i32, i32) {
    %c0_i32 = arith.constant 0 : i32
    %c0_i32_0 = arith.constant 0 : i32
    %c0_i32_1 = arith.constant 0 : i32
    return %c0_i32, %c0_i32_0 : i32, i32
  }
  func.func @transform_7(%arg0: i32) -> (i32, i32) {
    %c0_i32 = arith.constant 0 : i32
    %c0_i32_0 = arith.constant 0 : i32
    %c0_i32_1 = arith.constant 0 : i32
    return %c0_i32, %c0_i32_0 : i32, i32
  }
  func.func @transform_8(%arg0: i32) -> (i32, i32) {
    %c0_i32 = arith.constant 0 : i32
    %c0_i32_0 = arith.constant 0 : i32
    %c0_i32_1 = arith.constant 0 : i32
    return %c0_i32, %c0_i32_0 : i32, i32
  }
  func.func @transform_9(%arg0: i32) -> (i32, i32, i32) {
    %c0_i32 = arith.constant 0 : i32
    %c0_i32_0 = arith.constant 0 : i32
    %c0_i32_1 = arith.constant 0 : i32
    return %arg0, %c0_i32, %c0_i32_0 : i32, i32, i32
  }
}

</mosaic_0001>

<llo_original>
// kernel: lenet_forward.1
$region0: #{lenet_forward.1}
  #allocation0 [shape = 'u32[]', space=smem, size = 0x4, offset = 0x4, fixed_abs, tag = 'smem constant byte address 0x4 - core index']
  #allocation1 [shape = 'u32[144,128]{1,0:T(1,128)}', space=vmem, size = 0x12000, scoped, tag = 'internal scratch']
  #allocation2 [shape = 'f32[160,10]{1,0:T(8,128)}', space=vmem, size = 0x14000, scoped, tag = 'scratch operand']
  #allocation3 [shape = 'f32[96,250]{1,0:T(8,128)}', space=vmem, size = 0x18000, scoped, tag = 'scratch operand']
  %s0 = inlined_call_operand.vmem [shape: f32[2,640,25], index: 0, kind: input, shape index: {}]
  %s1 = inlined_call_operand.vmem [shape: f32[25,10], index: 1, kind: input, shape index: {}]
  %s2 = inlined_call_operand.vmem [shape: f32[1,10], index: 2, kind: input, shape index: {}]
  %s3 = inlined_call_operand.vmem [shape: f32[250,20], index: 3, kind: input, shape index: {}]
  %s4 = inlined_call_operand.vmem [shape: f32[1,20], index: 4, kind: input, shape index: {}]
  %s5 = inlined_call_operand.vmem [shape: f32[320,50], index: 5, kind: input, shape index: {}]
  %s6 = inlined_call_operand.vmem [shape: f32[1,50], index: 6, kind: input, shape index: {}]
  %s7 = inlined_call_operand.vmem [shape: f32[50,10], index: 7, kind: input, shape index: {}]
  %s8 = inlined_call_operand.vmem [shape: f32[1,10], index: 8, kind: input, shape index: {}]
  %s9 = inlined_call_operand.hbm [shape: f32[2,1,10], index: 9, kind: output, shape index: {}]
  %s10 = sld [smem:[#allocation0]]
  $region69: #{lenet_forward.1} parent=0
    _
  %s12 = ssub.s32 1, %s10
  %s13 = scalar_select 0, %s12, %s10
  $region1: #{lenet_forward.1} parent=0
    #allocation4 [shape = 'u8[1024]{0}', space=vmem, size = 0x400, scoped, tag = 'output window, operand 0']
    #allocation5 [shape = 's32[2]{0}', space=sflag, size = 0x8, scoped, tag = 'scoped memory for lenet_forward.1']
    %14 = vsyncpa [#allocation5], 0
    %s15 = scalar_lea.sflag [#allocation5], 1
    %16 = vsyncpa %s15, 0
    loop: start=0, step=1, limit=4
    $region2: #{lenet_forward.1} parent=1 // loop_pre_header
      _
    $region3: #{lenet_forward.1} parent=1 // loop_header
      %s18 = sphi 0, %s22
      %p19 = scmp.ge.s32.totalorder %s18, 4
      %s28 = sphi 0, %s30
      %s31 = sphi 0, %s28
      %s32 = sphi 0, %s31
      %s48 = sphi 0, %s32
      %s52 = sphi 0, %s52
      %s54 = sphi 0, %s52
      %s55 = sphi 0, %s54
      %s69 = sphi 0, %s55
      %s73 = sphi 0, %s73
      %s75 = sphi 0, %s73
      %s76 = sphi 0, %s75
      %s90 = sphi 0, %s76
      %s94 = sphi 0, %s94
      %s96 = sphi 0, %s94
      %s97 = sphi 0, %s96
      %s111 = sphi 0, %s97
      %s115 = sphi 0, %s115
      %s117 = sphi 0, %s115
      %s118 = sphi 0, %s117
      %s132 = sphi 0, %s118
      %s136 = sphi 0, %s136
      %s138 = sphi 0, %s136
      %s139 = sphi 0, %s138
      %s153 = sphi 0, %s139
      %s157 = sphi 0, %s157
      %s159 = sphi 0, %s157
      %s160 = sphi 0, %s159
      %s174 = sphi 0, %s160
      %s178 = sphi 0, %s178
      %s180 = sphi 0, %s178
      %s181 = sphi 0, %s180
      %s195 = sphi 0, %s181
      %s199 = sphi 0, %s199
      %s201 = sphi 0, %s199
      %s202 = sphi 0, %s201
      %s216 = sphi 0, %s202
      %s222 = sphi 0, %s224
      %s225 = sphi 0, %s222
      %s226 = sphi 0, %s225
      %s242 = sphi 0, %s226
    $region4: #{lenet_forward.1} parent=1 // loop_header_branch
      %21 = sbr.rel (%p19) target = $region8
    $region5: #{lenet_forward.1} parent=1 // loop_body
      %s23 = ssub.s32 %s18, 1
      %s24 = ssub.s32 %s18, 2
      %s25 = sadd.s32 %s18, 1
      %s26 = ssub.s32 %s18, %s25
      %p27 = scmp.eq.s32.totalorder %s26, 0
      %s29 = sadd.s32 %s28, 1
      %s30 = scalar_select %p27, %s28, %s29
      %p33 = pneg %p27
      %p34 = scmp.eq.s32.totalorder %s18, 1
      %p35 = por %p33, %p34
      %p36 = scmp.ne.s32.totalorder %s28, %s31
      %p37 = scmp.eq.s32.totalorder %s18, 0
      %p38 = por %p36, %p37
      %p39 = scmp.ne.s32.totalorder %s28, %s31
      %p40 = scmp.eq.s32.totalorder %s23, 1
      %p41 = por %p39, %p40
      %p42 = scmp.ne.s32.totalorder %s31, %s32
      %p43 = scmp.eq.s32.totalorder %s23, 0
      %p44 = por %p42, %p43
      %p45 = scmp.ne.s32.totalorder %s31, %s32
      %p46 = scmp.eq.s32.totalorder %s24, 1
      %p47 = por %p45, %p46
      %p49 = scmp.ne.s32.totalorder %s32, %s48
      %p50 = scmp.eq.s32.totalorder %s24, 0
      %p51 = por %p49, %p50
      %s53 = sadd.s32 %s52, 1
      %p56 = scmp.eq.s32.totalorder %s18, 1
      %p57 = scmp.ne.s32.totalorder %s52, %s54
      %p58 = scmp.eq.s32.totalorder %s18, 0
      %p59 = por %p57, %p58
      %p60 = scmp.ne.s32.totalorder %s52, %s54
      %p61 = scmp.eq.s32.totalorder %s23, 1
      %p62 = por %p60, %p61
      %p63 = scmp.ne.s32.totalorder %s54, %s55
      %p64 = scmp.eq.s32.totalorder %s23, 0
      %p65 = por %p63, %p64
      %p66 = scmp.ne.s32.totalorder %s54, %s55
      %p67 = scmp.eq.s32.totalorder %s24, 1
      %p68 = por %p66, %p67
      %p70 = scmp.ne.s32.totalorder %s55, %s69
      %p71 = scmp.eq.s32.totalorder %s24, 0
      %p72 = por %p70, %p71
      %s74 = sadd.s32 %s73, 1
      %p77 = scmp.eq.s32.totalorder %s18, 1
      %p78 = scmp.ne.s32.totalorder %s73, %s75
      %p79 = scmp.eq.s32.totalorder %s18, 0
      %p80 = por %p78, %p79
      %p81 = scmp.ne.s32.totalorder %s73, %s75
      %p82 = scmp.eq.s32.totalorder %s23, 1
      %p83 = por %p81, %p82
      %p84 = scmp.ne.s32.totalorder %s75, %s76
      %p85 = scmp.eq.s32.totalorder %s23, 0
      %p86 = por %p84, %p85
      %p87 = scmp.ne.s32.totalorder %s75, %s76
      %p88 = scmp.eq.s32.totalorder %s24, 1
      %p89 = por %p87, %p88
      %p91 = scmp.ne.s32.totalorder %s76, %s90
      %p92 = scmp.eq.s32.totalorder %s24, 0
      %p93 = por %p91, %p92
      %s95 = sadd.s32 %s94, 1
      %p98 = scmp.eq.s32.totalorder %s18, 1
      %p99 = scmp.ne.s32.totalorder %s94, %s96
      %p100 = scmp.eq.s32.totalorder %s18, 0
      %p101 = por %p99, %p100
      %p102 = scmp.ne.s32.totalorder %s94, %s96
      %p103 = scmp.eq.s32.totalorder %s23, 1
      %p104 = por %p102, %p103
      %p105 = scmp.ne.s32.totalorder %s96, %s97
      %p106 = scmp.eq.s32.totalorder %s23, 0
      %p107 = por %p105, %p106
      %p108 = scmp.ne.s32.totalorder %s96, %s97
      %p109 = scmp.eq.s32.totalorder %s24, 1
      %p110 = por %p108, %p109
      %p112 = scmp.ne.s32.totalorder %s97, %s111
      %p113 = scmp.eq.s32.totalorder %s24, 0
      %p114 = por %p112, %p113
      %s116 = sadd.s32 %s115, 1
      %p119 = scmp.eq.s32.totalorder %s18, 1
      %p120 = scmp.ne.s32.totalorder %s115, %s117
      %p121 = scmp.eq.s32.totalorder %s18, 0
      %p122 = por %p120, %p121
      %p123 = scmp.ne.s32.totalorder %s115, %s117
      %p124 = scmp.eq.s32.totalorder %s23, 1
      %p125 = por %p123, %p124
      %p126 = scmp.ne.s32.totalorder %s117, %s118
      %p127 = scmp.eq.s32.totalorder %s23, 0
      %p128 = por %p126, %p127
      %p129 = scmp.ne.s32.totalorder %s117, %s118
      %p130 = scmp.eq.s32.totalorder %s24, 1
      %p131 = por %p129, %p130
      %p133 = scmp.ne.s32.totalorder %s118, %s132
      %p134 = scmp.eq.s32.totalorder %s24, 0
      %p135 = por %p133, %p134
      %s137 = sadd.s32 %s136, 1
      %p140 = scmp.eq.s32.totalorder %s18, 1
      %p141 = scmp.ne.s32.totalorder %s136, %s138
      %p142 = scmp.eq.s32.totalorder %s18, 0
      %p143 = por %p141, %p142
      %p144 = scmp.ne.s32.totalorder %s136, %s138
      %p145 = scmp.eq.s32.totalorder %s23, 1
      %p146 = por %p144, %p145
      %p147 = scmp.ne.s32.totalorder %s138, %s139
      %p148 = scmp.eq.s32.totalorder %s23, 0
      %p149 = por %p147, %p148
      %p150 = scmp.ne.s32.totalorder %s138, %s139
      %p151 = scmp.eq.s32.totalorder %s24, 1
      %p152 = por %p150, %p151
      %p154 = scmp.ne.s32.totalorder %s139, %s153
      %p155 = scmp.eq.s32.totalorder %s24, 0
      %p156 = por %p154, %p155
      %s158 = sadd.s32 %s157, 1
      %p161 = scmp.eq.s32.totalorder %s18, 1
      %p162 = scmp.ne.s32.totalorder %s157, %s159
      %p163 = scmp.eq.s32.totalorder %s18, 0
      %p164 = por %p162, %p163
      %p165 = scmp.ne.s32.totalorder %s157, %s159
      %p166 = scmp.eq.s32.totalorder %s23, 1
      %p167 = por %p165, %p166
      %p168 = scmp.ne.s32.totalorder %s159, %s160
      %p169 = scmp.eq.s32.totalorder %s23, 0
      %p170 = por %p168, %p169
      %p171 = scmp.ne.s32.totalorder %s159, %s160
      %p172 = scmp.eq.s32.totalorder %s24, 1
      %p173 = por %p171, %p172
      %p175 = scmp.ne.s32.totalorder %s160, %s174
      %p176 = scmp.eq.s32.totalorder %s24, 0
      %p177 = por %p175, %p176
      %s179 = sadd.s32 %s178, 1
      %p182 = scmp.eq.s32.totalorder %s18, 1
      %p183 = scmp.ne.s32.totalorder %s178, %s180
      %p184 = scmp.eq.s32.totalorder %s18, 0
      %p185 = por %p183, %p184
      %p186 = scmp.ne.s32.totalorder %s178, %s180
      %p187 = scmp.eq.s32.totalorder %s23, 1
      %p188 = por %p186, %p187
      %p189 = scmp.ne.s32.totalorder %s180, %s181
      %p190 = scmp.eq.s32.totalorder %s23, 0
      %p191 = por %p189, %p190
      %p192 = scmp.ne.s32.totalorder %s180, %s181
      %p193 = scmp.eq.s32.totalorder %s24, 1
      %p194 = por %p192, %p193
      %p196 = scmp.ne.s32.totalorder %s181, %s195
      %p197 = scmp.eq.s32.totalorder %s24, 0
      %p198 = por %p196, %p197
      %s200 = sadd.s32 %s199, 1
      %p203 = scmp.eq.s32.totalorder %s18, 1
      %p204 = scmp.ne.s32.totalorder %s199, %s201
      %p205 = scmp.eq.s32.totalorder %s18, 0
      %p206 = por %p204, %p205
      %p207 = scmp.ne.s32.totalorder %s199, %s201
      %p208 = scmp.eq.s32.totalorder %s23, 1
      %p209 = por %p207, %p208
      %p210 = scmp.ne.s32.totalorder %s201, %s202
      %p211 = scmp.eq.s32.totalorder %s23, 0
      %p212 = por %p210, %p211
      %p213 = scmp.ne.s32.totalorder %s201, %s202
      %p214 = scmp.eq.s32.totalorder %s24, 1
      %p215 = por %p213, %p214
      %p217 = scmp.ne.s32.totalorder %s202, %s216
      %p218 = scmp.eq.s32.totalorder %s24, 0
      %p219 = por %p217, %p218
      %s220 = ssub.s32 %s18, %s25
      %p221 = scmp.eq.s32.totalorder %s220, 0
      %s223 = sadd.s32 %s222, 1
      %s224 = scalar_select %p221, %s222, %s223
      %p227 = pneg %p221
      %p228 = scmp.eq.s32.totalorder %s18, 1
      %p229 = por %p227, %p228
      %p230 = scmp.ne.s32.totalorder %s222, %s225
      %p231 = scmp.eq.s32.totalorder %s18, 0
      %p232 = por %p230, %p231
      %p233 = scmp.ne.s32.totalorder %s222, %s225
      %p234 = scmp.eq.s32.totalorder %s23, 1
      %p235 = por %p233, %p234
      %p236 = scmp.ne.s32.totalorder %s225, %s226
      %p237 = scmp.eq.s32.totalorder %s23, 0
      %p238 = por %p236, %p237
      %p239 = scmp.ne.s32.totalorder %s225, %s226
      %p240 = scmp.eq.s32.totalorder %s24, 1
      %p241 = por %p239, %p240
      %p243 = scmp.ne.s32.totalorder %s226, %s242
      %p244 = scmp.eq.s32.totalorder %s24, 0
      %p245 = por %p243, %p244
      %p246 = scmp.le.s32.totalorder 1, %s18
      %p247 = scmp.lt.s32.totalorder %s18, 3
      %p248 = pnand %p246, %p247
      %p249 = pneg %p248
      // Predicated region
      $region9: #{lenet_forward.1} parent=5 // pred_check
        _
      $region10: #{lenet_forward.1} parent=5 // pred_check_branch
        %251 = sbr.rel (%p248) target = $region12
      $region11: #{lenet_forward.1} parent=5 // pred_region
        %s252 = ssub.s32 %s18, 1
        // Predicated region
        $region13: #{lenet_forward.1} parent=11 // pred_check
          %p253 = pneg %p65
        $region14: #{lenet_forward.1} parent=11 // pred_check_branch
          %255 = sbr.rel (%p253) target = $region16
        $region15: #{lenet_forward.1} parent=11 // pred_region
          _
        $region16: #{lenet_forward.1} parent=11 // pred_fallthru
          _
        // Predicated region
        $region17: #{lenet_forward.1} parent=11 // pred_check
          %p256 = pneg %p86
        $region18: #{lenet_forward.1} parent=11 // pred_check_branch
          %258 = sbr.rel (%p256) target = $region20
        $region19: #{lenet_forward.1} parent=11 // pred_region
          _
        $region20: #{lenet_forward.1} parent=11 // pred_fallthru
          _
        // Predicated region
        $region21: #{lenet_forward.1} parent=11 // pred_check
          %p259 = pneg %p107
        $region22: #{lenet_forward.1} parent=11 // pred_check_branch
          %261 = sbr.rel (%p259) target = $region24
        $region23: #{lenet_forward.1} parent=11 // pred_region
          _
        $region24: #{lenet_forward.1} parent=11 // pred_fallthru
          _
        // Predicated region
        $region25: #{lenet_forward.1} parent=11 // pred_check
          %p262 = pneg %p128
        $region26: #{lenet_forward.1} parent=11 // pred_check_branch
          %264 = sbr.rel (%p262) target = $region28
        $region27: #{lenet_forward.1} parent=11 // pred_region
          _
        $region28: #{lenet_forward.1} parent=11 // pred_fallthru
          _
        // Predicated region
        $region29: #{lenet_forward.1} parent=11 // pred_check
          %p265 = pneg %p149
        $region30: #{lenet_forward.1} parent=11 // pred_check_branch
          %267 = sbr.rel (%p265) target = $region32
        $region31: #{lenet_forward.1} parent=11 // pred_region
          _
        $region32: #{lenet_forward.1} parent=11 // pred_fallthru
          _
        // Predicated region
        $region33: #{lenet_forward.1} parent=11 // pred_check
          %p268 = pneg %p170
        $region34: #{lenet_forward.1} parent=11 // pred_check_branch
          %270 = sbr.rel (%p268) target = $region36
        $region35: #{lenet_forward.1} parent=11 // pred_region
          _
        $region36: #{lenet_forward.1} parent=11 // pred_fallthru
          _
        // Predicated region
        $region37: #{lenet_forward.1} parent=11 // pred_check
          %p271 = pneg %p191
        $region38: #{lenet_forward.1} parent=11 // pred_check_branch
          %273 = sbr.rel (%p271) target = $region40
        $region39: #{lenet_forward.1} parent=11 // pred_region
          _
        $region40: #{lenet_forward.1} parent=11 // pred_fallthru
          _
        // Predicated region
        $region41: #{lenet_forward.1} parent=11 // pred_check
          %p274 = pneg %p212
        $region42: #{lenet_forward.1} parent=11 // pred_check_branch
          %276 = sbr.rel (%p274) target = $region44
        $region43: #{lenet_forward.1} parent=11 // pred_region
          _
        $region44: #{lenet_forward.1} parent=11 // pred_fallthru
          _
      $region12: #{lenet_forward.1} parent=5 // pred_fallthru
        _
      %p277 = scmp.lt.s32.totalorder %s18, 2
      // Predicated region
      $region45: #{lenet_forward.1} parent=5 // pred_check
        %p278 = pneg %p277
      $region46: #{lenet_forward.1} parent=5 // pred_check_branch
        %280 = sbr.rel (%p278) target = $region48
      $region47: #{lenet_forward.1} parent=5 // pred_region
        // Predicated region
        $region49: #{lenet_forward.1} parent=47 // pred_check
          %p281 = pneg %p38
        $region50: #{lenet_forward.1} parent=47 // pred_check_branch
          %283 = sbr.rel (%p281) target = $region52
        $region51: #{lenet_forward.1} parent=47 // pred_region
          %p284 = scmp.lt.s32.totalorder %s18, 1
          %s285 = scalar_select %p284, %s18, 1
          %s286 = smul.addr %s285, 80
          %s287 = smul.addr %s286, 8
          %s288 = scalar_lea.vmem %s0, %s287
        $region52: #{lenet_forward.1} parent=47 // pred_fallthru
          _
      $region48: #{lenet_forward.1} parent=5 // pred_fallthru
        _
      %p289 = scmp.le.s32.totalorder 1, %s18
      %p290 = scmp.lt.s32.totalorder %s18, 3
      %p291 = pnand %p289, %p290
      %p292 = pneg %p291
      // Predicated region
      $region53: #{lenet_forward.1} parent=5 // pred_check
        _
      $region54: #{lenet_forward.1} parent=5 // pred_check_branch
        %294 = sbr.rel (%p291) target = $region56
      $region55: #{lenet_forward.1} parent=5 // pred_region
        %s295 = ssub.s32 %s18, 1
        %p296 = scmp.lt.s32.totalorder %s23, 1
        %s297 = scalar_select %p296, %s23, 1
        %s298 = smul.addr %s297, 80
        %s299 = smul.addr %s298, 8
        %s300 = scalar_lea.vmem %s0, %s299
        %p301 = pneg %p44
        %p302 = pneg %p41
        %p303 = pneg %p65
        %p304 = pneg %p62
        %p305 = pneg %p86
        %p306 = pneg %p83
        %p307 = pneg %p107
        %p308 = pneg %p104
        %p309 = pneg %p128
        %p310 = pneg %p125
        %p311 = pneg %p149
        %p312 = pneg %p146
        %p313 = pneg %p170
        %p314 = pneg %p167
        %p315 = pneg %p191
        %p316 = pneg %p188
        %p317 = pneg %p212
        %p318 = pneg %p209
        %p319 = pneg %p238
        %p320 = pneg %p235
        %s321 = sand.u32 %s225, 1
        %s322 = scalar_lea.sflag [#allocation5], %s321
        %s323 = sand.u32 %s225, 1
        %s324 = scalar_lea.vmem [#allocation4], %s323
        %p325 = scmp.lt.s32.totalorder %s23, 1
        %s326 = scalar_select %p325, %s23, 1
        %s327 = smul.addr %s326, 80
        %s328 = smul.addr %s327, 8
        %s329 = scalar_lea.vmem %s0, %s328
        %v330 = vld [vmem:[%s329] sm:$0xff]
        %v331 = vld [vmem:[%s329 + $0x8] sm:$0xff]
        %v332 = vld [vmem:[%s329 + $0x10] sm:$0xff]
        %v333 = vld [vmem:[%s329 + $0x18] sm:$0xff]
        %v334 = vld [vmem:[%s329 + $0x20] sm:$0xff]
        %v335 = vld [vmem:[%s329 + $0x28] sm:$0xff]
        %v336 = vld [vmem:[%s329 + $0x30] sm:$0xff]
        %v337 = vld [vmem:[%s329 + $0x38] sm:$0xff]
        %v338 = vld [vmem:[%s329 + $0x40] sm:$0xff]
        %v339 = vld [vmem:[%s329 + $0x48] sm:$0xff]
        %v340 = vld [vmem:[%s329 + $0x50] sm:$0xff]
        %v341 = vld [vmem:[%s329 + $0x58] sm:$0xff]
        %v342 = vld [vmem:[%s329 + $0x60] sm:$0xff]
        %v343 = vld [vmem:[%s329 + $0x68] sm:$0xff]
        %v344 = vld [vmem:[%s329 + $0x70] sm:$0xff]
        %v345 = vld [vmem:[%s329 + $0x78] sm:$0xff]
        %v346 = vld [vmem:[%s329 + $0x80] sm:$0xff]
        %v347 = vld [vmem:[%s329 + $0x88] sm:$0xff]
        %v348 = vld [vmem:[%s329 + $0x90] sm:$0xff]
        %v349 = vld [vmem:[%s329 + $0x98] sm:$0xff]
        %v350 = vld [vmem:[%s329 + $0xa0] sm:$0xff]
        %v351 = vld [vmem:[%s329 + $0xa8] sm:$0xff]
        %v352 = vld [vmem:[%s329 + $0xb0] sm:$0xff]
        %v353 = vld [vmem:[%s329 + $0xb8] sm:$0xff]
        %v354 = vld [vmem:[%s329 + $0xc0] sm:$0xff]
        %v355 = vld [vmem:[%s329 + $0xc8] sm:$0xff]
        %v356 = vld [vmem:[%s329 + $0xd0] sm:$0xff]
        %v357 = vld [vmem:[%s329 + $0xd8] sm:$0xff]
        %v358 = vld [vmem:[%s329 + $0xe0] sm:$0xff]
        %v359 = vld [vmem:[%s329 + $0xe8] sm:$0xff]
        %v360 = vld [vmem:[%s329 + $0xf0] sm:$0xff]
        %v361 = vld [vmem:[%s329 + $0xf8] sm:$0xff]
        %v362 = vld [vmem:[%s329 + $0x100] sm:$0xff]
        %v363 = vld [vmem:[%s329 + $0x108] sm:$0xff]
        %v364 = vld [vmem:[%s329 + $0x110] sm:$0xff]
        %v365 = vld [vmem:[%s329 + $0x118] sm:$0xff]
        %v366 = vld [vmem:[%s329 + $0x120] sm:$0xff]
        %v367 = vld [vmem:[%s329 + $0x128] sm:$0xff]
        %v368 = vld [vmem:[%s329 + $0x130] sm:$0xff]
        %v369 = vld [vmem:[%s329 + $0x138] sm:$0xff]
        %v370 = vld [vmem:[%s329 + $0x140] sm:$0xff]
        %v371 = vld [vmem:[%s329 + $0x148] sm:$0xff]
        %v372 = vld [vmem:[%s329 + $0x150] sm:$0xff]
        %v373 = vld [vmem:[%s329 + $0x158] sm:$0xff]
        %v374 = vld [vmem:[%s329 + $0x160] sm:$0xff]
        %v375 = vld [vmem:[%s329 + $0x168] sm:$0xff]
        %v376 = vld [vmem:[%s329 + $0x170] sm:$0xff]
        %v377 = vld [vmem:[%s329 + $0x178] sm:$0xff]
        %v378 = vld [vmem:[%s329 + $0x180] sm:$0xff]
        %v379 = vld [vmem:[%s329 + $0x188] sm:$0xff]
        %v380 = vld [vmem:[%s329 + $0x190] sm:$0xff]
        %v381 = vld [vmem:[%s329 + $0x198] sm:$0xff]
        %v382 = vld [vmem:[%s329 + $0x1a0] sm:$0xff]
        %v383 = vld [vmem:[%s329 + $0x1a8] sm:$0xff]
        %v384 = vld [vmem:[%s329 + $0x1b0] sm:$0xff]
        %v385 = vld [vmem:[%s329 + $0x1b8] sm:$0xff]
        %v386 = vld [vmem:[%s329 + $0x1c0] sm:$0xff]
        %v387 = vld [vmem:[%s329 + $0x1c8] sm:$0xff]
        %v388 = vld [vmem:[%s329 + $0x1d0] sm:$0xff]
        %v389 = vld [vmem:[%s329 + $0x1d8] sm:$0xff]
        %v390 = vld [vmem:[%s329 + $0x1e0] sm:$0xff]
        %v391 = vld [vmem:[%s329 + $0x1e8] sm:$0xff]
        %v392 = vld [vmem:[%s329 + $0x1f0] sm:$0xff]
        %v393 = vld [vmem:[%s329 + $0x1f8] sm:$0xff]
        %v394 = vld [vmem:[%s329 + $0x200] sm:$0xff]
        %v395 = vld [vmem:[%s329 + $0x208] sm:$0xff]
        %v396 = vld [vmem:[%s329 + $0x210] sm:$0xff]
        %v397 = vld [vmem:[%s329 + $0x218] sm:$0xff]
        %v398 = vld [vmem:[%s329 + $0x220] sm:$0xff]
        %v399 = vld [vmem:[%s329 + $0x228] sm:$0xff]
        %v400 = vld [vmem:[%s329 + $0x230] sm:$0xff]
        %v401 = vld [vmem:[%s329 + $0x238] sm:$0xff]
        %v402 = vld [vmem:[%s329 + $0x240] sm:$0xff]
        %v403 = vld [vmem:[%s329 + $0x248] sm:$0xff]
        %v404 = vld [vmem:[%s329 + $0x250] sm:$0xff]
        %v405 = vld [vmem:[%s329 + $0x258] sm:$0xff]
        %v406 = vld [vmem:[%s329 + $0x260] sm:$0xff]
        %v407 = vld [vmem:[%s329 + $0x268] sm:$0xff]
        %v408 = vld [vmem:[%s329 + $0x270] sm:$0xff]
        %v409 = vld [vmem:[%s329 + $0x278] sm:$0xff]
        %v410 = vld [vmem:[%s1] sm:$0xff]
        %v411 = vld [vmem:[%s1 + $0x8] sm:$0xff]
        %v412 = vld [vmem:[%s1 + $0x10] sm:$0xff]
        %v413 = vld [vmem:[%s1 + $0x18] sm:$0x1]
        %vm414 = vcmask 203776
        %v416 = vsel %vm414, %v330, 0
        %v419 = vsel %vm414, %v331, 0
        %v422 = vsel %vm414, %v332, 0
        %v425 = vsel %vm414, %v333, 0
        %v428 = vsel %vm414, %v334, 0
        %v431 = vsel %vm414, %v335, 0
        %v434 = vsel %vm414, %v336, 0
        %v437 = vsel %vm414, %v337, 0
        %v440 = vsel %vm414, %v338, 0
        %v443 = vsel %vm414, %v339, 0
        %v446 = vsel %vm414, %v340, 0
        %v449 = vsel %vm414, %v341, 0
        %v452 = vsel %vm414, %v342, 0
        %v455 = vsel %vm414, %v343, 0
        %v458 = vsel %vm414, %v344, 0
        %v461 = vsel %vm414, %v345, 0
        %v464 = vsel %vm414, %v346, 0
        %v467 = vsel %vm414, %v347, 0
        %v470 = vsel %vm414, %v348, 0
        %v473 = vsel %vm414, %v349, 0
        %v476 = vsel %vm414, %v350, 0
        %v479 = vsel %vm414, %v351, 0
        %v482 = vsel %vm414, %v352, 0
        %v485 = vsel %vm414, %v353, 0
        %v488 = vsel %vm414, %v354, 0
        %v491 = vsel %vm414, %v355, 0
        %v494 = vsel %vm414, %v356, 0
        %v497 = vsel %vm414, %v357, 0
        %v500 = vsel %vm414, %v358, 0
        %v503 = vsel %vm414, %v359, 0
        %v506 = vsel %vm414, %v360, 0
        %v509 = vsel %vm414, %v361, 0
        %v512 = vsel %vm414, %v362, 0
        %v515 = vsel %vm414, %v363, 0
        %v518 = vsel %vm414, %v364, 0
        %v521 = vsel %vm414, %v365, 0
        %v524 = vsel %vm414, %v366, 0
        %v527 = vsel %vm414, %v367, 0
        %v530 = vsel %vm414, %v368, 0
        %v533 = vsel %vm414, %v369, 0
        %v536 = vsel %vm414, %v370, 0
        %v539 = vsel %vm414, %v371, 0
        %v542 = vsel %vm414, %v372, 0
        %v545 = vsel %vm414, %v373, 0
        %v548 = vsel %vm414, %v374, 0
        %v551 = vsel %vm414, %v375, 0
        %v554 = vsel %vm414, %v376, 0
        %v557 = vsel %vm414, %v377, 0
        %v560 = vsel %vm414, %v378, 0
        %v563 = vsel %vm414, %v379, 0
        %v566 = vsel %vm414, %v380, 0
        %v569 = vsel %vm414, %v381, 0
        %v572 = vsel %vm414, %v382, 0
        %v575 = vsel %vm414, %v383, 0
        %v578 = vsel %vm414, %v384, 0
        %v581 = vsel %vm414, %v385, 0
        %v584 = vsel %vm414, %v386, 0
        %v587 = vsel %vm414, %v387, 0
        %v590 = vsel %vm414, %v388, 0
        %v593 = vsel %vm414, %v389, 0
        %v596 = vsel %vm414, %v390, 0
        %v599 = vsel %vm414, %v391, 0
        %v602 = vsel %vm414, %v392, 0
        %v605 = vsel %vm414, %v393, 0
        %v608 = vsel %vm414, %v394, 0
        %v611 = vsel %vm414, %v395, 0
        %v614 = vsel %vm414, %v396, 0
        %v617 = vsel %vm414, %v397, 0
        %v620 = vsel %vm414, %v398, 0
        %v623 = vsel %vm414, %v399, 0
        %v626 = vsel %vm414, %v400, 0
        %v629 = vsel %vm414, %v401, 0
        %v632 = vsel %vm414, %v402, 0
        %v635 = vsel %vm414, %v403, 0
        %v638 = vsel %vm414, %v404, 0
        %v641 = vsel %vm414, %v405, 0
        %v644 = vsel %vm414, %v406, 0
        %v647 = vsel %vm414, %v407, 0
        %v650 = vsel %vm414, %v408, 0
        %v653 = vsel %vm414, %v409, 0
        %vm655 = vcmask 1040384
        %v657 = vsel %vm655, %v413, 0
        %659 = vmatprep.subr.mxu0 0.0
        %660 = vmatpush1.msra.mxu0 0.0
        %661 = vmatprep.subr.mxu0 0.0
        %662 = vmatpush1.msra.mxu0 0.0
        %663 = vmatprep.subr.mxu0 0.0
        %664 = vmatpush1.msra.mxu0 0.0
        %665 = vmatprep.subr.mxu0 0.0
        %666 = vmatpush1.msra.mxu0 0.0
        %667 = vmatprep.subr.mxu0 0.0
        %668 = vmatpush1.msra.mxu0 0.0
        %669 = vmatprep.subr.mxu0 0.0
        %670 = vmatpush1.msra.mxu0 0.0
        %671 = vmatprep.subr.mxu0 0.0
        %672 = vmatpush1.msra.mxu0 0.0
        %673 = vmatprep.subr.mxu0 0.0
        %674 = vmatpush1.msra.mxu0 0.0
        %675 = vmatprep.subr.mxu0 0.0
        %676 = vmatpush1.msra.mxu0 0.0
        %677 = vmatprep.subr.mxu0 0.0
        %678 = vmatpush1.msra.mxu0 0.0
        %679 = vmatprep.subr.mxu0 0.0
        %680 = vmatpush1.msra.mxu0 0.0
        %681 = vmatprep.subr.mxu0 0.0
        %682 = vmatpush1.msra.mxu0 0.0
        %683 = vmatprep.subr.mxu0 0.0
        %684 = vmatpush1.msra.mxu0 %v657
        %685 = vmatprep.subr.mxu0 0.0
        %686 = vmatpush1.msra.mxu0 %v412
        %687 = vmatprep.subr.mxu0 0.0
        %688 = vmatpush1.msra.mxu0 %v411
        %689 = vmatprep.subr.mxu0 0.0
        %690 = vmatpush1.msra.mxu0 %v410
        %691 = vmatprep.subr.mxu0 0.0
        %692 = vmatpush2.msra.mxu0 0.0
        %693 = vmatprep.subr.mxu0 0.0
        %694 = vmatpush2.msra.mxu0 0.0
        %695 = vmatprep.subr.mxu0 0.0
        %696 = vmatpush2.msra.mxu0 0.0
        %697 = vmatprep.subr.mxu0 0.0
        %698 = vmatpush2.msra.mxu0 0.0
        %699 = vmatprep.subr.mxu0 0.0
        %700 = vmatpush2.msra.mxu0 0.0
        %701 = vmatprep.subr.mxu0 0.0
        %702 = vmatpush2.msra.mxu0 0.0
        %703 = vmatprep.subr.mxu0 0.0
        %704 = vmatpush2.msra.mxu0 0.0
        %705 = vmatprep.subr.mxu0 0.0
        %706 = vmatpush2.msra.mxu0 0.0
        %707 = vmatprep.subr.mxu0 0.0
        %708 = vmatpush2.msra.mxu0 0.0
        %709 = vmatprep.subr.mxu0 0.0
        %710 = vmatpush2.msra.mxu0 0.0
        %711 = vmatprep.subr.mxu0 0.0
        %712 = vmatpush2.msra.mxu0 0.0
        %713 = vmatprep.subr.mxu0 0.0
        %714 = vmatpush2.msra.mxu0 0.0
        %715 = vmatprep.subr.mxu0 0.0
        %716 = vmatpush2.msra.mxu0 0.0
        %717 = vmatprep.subr.mxu0 0.0
        %718 = vmatpush2.msra.mxu0 0.0
        %719 = vmatprep.subr.mxu0 0.0
        %720 = vmatpush2.msra.mxu0 0.0
        %721 = vmatprep.subr.mxu0 0.0
        %722 = vmatpush2.msra.mxu0 0.0
        %723 = vmatprep.mubr.f32.mxu0 0.0
        %724 = vmatmul.mubr.f32.gmra.mxu0 %v416
        %v725 = vpop.f32.mrf.mxu0
        %v726 = vadd.f32 0.0, %v725
        %v727 = vpop.f32.mrf.mxu0
        %728 = vmatprep.mubr.f32.mxu0 0.0
        %729 = vmatmul.mubr.f32.gmra.mxu0 %v419
        %v730 = vpop.f32.mrf.mxu0
        %v731 = vadd.f32 0.0, %v730
        %v732 = vpop.f32.mrf.mxu0
        %733 = vmatprep.mubr.f32.mxu0 0.0
        %734 = vmatmul.mubr.f32.gmra.mxu0 %v422
        %v735 = vpop.f32.mrf.mxu0
        %v736 = vadd.f32 0.0, %v735
        %v737 = vpop.f32.mrf.mxu0
        %738 = vmatprep.mubr.f32.mxu0 0.0
        %739 = vmatmul.mubr.f32.gmra.mxu0 %v425
        %v740 = vpop.f32.mrf.mxu0
        %v741 = vadd.f32 0.0, %v740
        %v742 = vpop.f32.mrf.mxu0
        %743 = vmatprep.mubr.f32.mxu0 0.0
        %744 = vmatmul.mubr.f32.gmra.mxu0 %v428
        %v745 = vpop.f32.mrf.mxu0
        %v746 = vadd.f32 0.0, %v745
        %v747 = vpop.f32.mrf.mxu0
        %748 = vmatprep.mubr.f32.mxu0 0.0
        %749 = vmatmul.mubr.f32.gmra.mxu0 %v431
        %v750 = vpop.f32.mrf.mxu0
        %v751 = vadd.f32 0.0, %v750
        %v752 = vpop.f32.mrf.mxu0
        %753 = vmatprep.mubr.f32.mxu0 0.0
        %754 = vmatmul.mubr.f32.gmra.mxu0 %v434
        %v755 = vpop.f32.mrf.mxu0
        %v756 = vadd.f32 0.0, %v755
        %v757 = vpop.f32.mrf.mxu0
        %758 = vmatprep.mubr.f32.mxu0 0.0
        %759 = vmatmul.mubr.f32.gmra.mxu0 %v437
        %v760 = vpop.f32.mrf.mxu0
        %v761 = vadd.f32 0.0, %v760
        %v762 = vpop.f32.mrf.mxu0
        %763 = vmatprep.mubr.f32.mxu0 0.0
        %764 = vmatmul.mubr.f32.gmra.mxu0 %v440
        %v765 = vpop.f32.mrf.mxu0
        %v766 = vadd.f32 0.0, %v765
        %v767 = vpop.f32.mrf.mxu0
        %768 = vmatprep.mubr.f32.mxu0 0.0
        %769 = vmatmul.mubr.f32.gmra.mxu0 %v443
        %v770 = vpop.f32.mrf.mxu0
        %v771 = vadd.f32 0.0, %v770
        %v772 = vpop.f32.mrf.mxu0
        %773 = vmatprep.mubr.f32.mxu0 0.0
        %774 = vmatmul.mubr.f32.gmra.mxu0 %v446
        %v775 = vpop.f32.mrf.mxu0
        %v776 = vadd.f32 0.0, %v775
        %v777 = vpop.f32.mrf.mxu0
        %778 = vmatprep.mubr.f32.mxu0 0.0
        %779 = vmatmul.mubr.f32.gmra.mxu0 %v449
        %v780 = vpop.f32.mrf.mxu0
        %v781 = vadd.f32 0.0, %v780
        %v782 = vpop.f32.mrf.mxu0
        %783 = vmatprep.mubr.f32.mxu0 0.0
        %784 = vmatmul.mubr.f32.gmra.mxu0 %v452
        %v785 = vpop.f32.mrf.mxu0
        %v786 = vadd.f32 0.0, %v785
        %v787 = vpop.f32.mrf.mxu0
        %788 = vmatprep.mubr.f32.mxu0 0.0
        %789 = vmatmul.mubr.f32.gmra.mxu0 %v455
        %v790 = vpop.f32.mrf.mxu0
        %v791 = vadd.f32 0.0, %v790
        %v792 = vpop.f32.mrf.mxu0
        %793 = vmatprep.mubr.f32.mxu0 0.0
        %794 = vmatmul.mubr.f32.gmra.mxu0 %v458
        %v795 = vpop.f32.mrf.mxu0
        %v796 = vadd.f32 0.0, %v795
        %v797 = vpop.f32.mrf.mxu0
        %798 = vmatprep.mubr.f32.mxu0 0.0
        %799 = vmatmul.mubr.f32.gmra.mxu0 %v461
        %v800 = vpop.f32.mrf.mxu0
        %v801 = vadd.f32 0.0, %v800
        %v802 = vpop.f32.mrf.mxu0
        %803 = vmatprep.mubr.f32.mxu0 0.0
        %804 = vmatmul.mubr.f32.gmra.mxu0 %v464
        %v805 = vpop.f32.mrf.mxu0
        %v806 = vadd.f32 0.0, %v805
        %v807 = vpop.f32.mrf.mxu0
        %808 = vmatprep.mubr.f32.mxu0 0.0
        %809 = vmatmul.mubr.f32.gmra.mxu0 %v467
        %v810 = vpop.f32.mrf.mxu0
        %v811 = vadd.f32 0.0, %v810
        %v812 = vpop.f32.mrf.mxu0
        %813 = vmatprep.mubr.f32.mxu0 0.0
        %814 = vmatmul.mubr.f32.gmra.mxu0 %v470
        %v815 = vpop.f32.mrf.mxu0
        %v816 = vadd.f32 0.0, %v815
        %v817 = vpop.f32.mrf.mxu0
        %818 = vmatprep.mubr.f32.mxu0 0.0
        %819 = vmatmul.mubr.f32.gmra.mxu0 %v473
        %v820 = vpop.f32.mrf.mxu0
        %v821 = vadd.f32 0.0, %v820
        %v822 = vpop.f32.mrf.mxu0
        %823 = vmatprep.mubr.f32.mxu0 0.0
        %824 = vmatmul.mubr.f32.gmra.mxu0 %v476
        %v825 = vpop.f32.mrf.mxu0
        %v826 = vadd.f32 0.0, %v825
        %v827 = vpop.f32.mrf.mxu0
        %828 = vmatprep.mubr.f32.mxu0 0.0
        %829 = vmatmul.mubr.f32.gmra.mxu0 %v479
        %v830 = vpop.f32.mrf.mxu0
        %v831 = vadd.f32 0.0, %v830
        %v832 = vpop.f32.mrf.mxu0
        %833 = vmatprep.mubr.f32.mxu0 0.0
        %834 = vmatmul.mubr.f32.gmra.mxu0 %v482
        %v835 = vpop.f32.mrf.mxu0
        %v836 = vadd.f32 0.0, %v835
        %v837 = vpop.f32.mrf.mxu0
        %838 = vmatprep.mubr.f32.mxu0 0.0
        %839 = vmatmul.mubr.f32.gmra.mxu0 %v485
        %v840 = vpop.f32.mrf.mxu0
        %v841 = vadd.f32 0.0, %v840
        %v842 = vpop.f32.mrf.mxu0
        %843 = vmatprep.mubr.f32.mxu0 0.0
        %844 = vmatmul.mubr.f32.gmra.mxu0 %v488
        %v845 = vpop.f32.mrf.mxu0
        %v846 = vadd.f32 0.0, %v845
        %v847 = vpop.f32.mrf.mxu0
        %848 = vmatprep.mubr.f32.mxu0 0.0
        %849 = vmatmul.mubr.f32.gmra.mxu0 %v491
        %v850 = vpop.f32.mrf.mxu0
        %v851 = vadd.f32 0.0, %v850
        %v852 = vpop.f32.mrf.mxu0
        %853 = vmatprep.mubr.f32.mxu0 0.0
        %854 = vmatmul.mubr.f32.gmra.mxu0 %v494
        %v855 = vpop.f32.mrf.mxu0
        %v856 = vadd.f32 0.0, %v855
        %v857 = vpop.f32.mrf.mxu0
        %858 = vmatprep.mubr.f32.mxu0 0.0
        %859 = vmatmul.mubr.f32.gmra.mxu0 %v497
        %v860 = vpop.f32.mrf.mxu0
        %v861 = vadd.f32 0.0, %v860
        %v862 = vpop.f32.mrf.mxu0
        %863 = vmatprep.mubr.f32.mxu0 0.0
        %864 = vmatmul.mubr.f32.gmra.mxu0 %v500
        %v865 = vpop.f32.mrf.mxu0
        %v866 = vadd.f32 0.0, %v865
        %v867 = vpop.f32.mrf.mxu0
        %868 = vmatprep.mubr.f32.mxu0 0.0
        %869 = vmatmul.mubr.f32.gmra.mxu0 %v503
        %v870 = vpop.f32.mrf.mxu0
        %v871 = vadd.f32 0.0, %v870
        %v872 = vpop.f32.mrf.mxu0
        %873 = vmatprep.mubr.f32.mxu0 0.0
        %874 = vmatmul.mubr.f32.gmra.mxu0 %v506
        %v875 = vpop.f32.mrf.mxu0
        %v876 = vadd.f32 0.0, %v875
        %v877 = vpop.f32.mrf.mxu0
        %878 = vmatprep.mubr.f32.mxu0 0.0
        %879 = vmatmul.mubr.f32.gmra.mxu0 %v509
        %v880 = vpop.f32.mrf.mxu0
        %v881 = vadd.f32 0.0, %v880
        %v882 = vpop.f32.mrf.mxu0
        %883 = vmatprep.mubr.f32.mxu0 0.0
        %884 = vmatmul.mubr.f32.gmra.mxu0 %v512
        %v885 = vpop.f32.mrf.mxu0
        %v886 = vadd.f32 0.0, %v885
        %v887 = vpop.f32.mrf.mxu0
        %888 = vmatprep.mubr.f32.mxu0 0.0
        %889 = vmatmul.mubr.f32.gmra.mxu0 %v515
        %v890 = vpop.f32.mrf.mxu0
        %v891 = vadd.f32 0.0, %v890
        %v892 = vpop.f32.mrf.mxu0
        %893 = vmatprep.mubr.f32.mxu0 0.0
        %894 = vmatmul.mubr.f32.gmra.mxu0 %v518
        %v895 = vpop.f32.mrf.mxu0
        %v896 = vadd.f32 0.0, %v895
        %v897 = vpop.f32.mrf.mxu0
        %898 = vmatprep.mubr.f32.mxu0 0.0
        %899 = vmatmul.mubr.f32.gmra.mxu0 %v521
        %v900 = vpop.f32.mrf.mxu0
        %v901 = vadd.f32 0.0, %v900
        %v902 = vpop.f32.mrf.mxu0
        %903 = vmatprep.mubr.f32.mxu0 0.0
        %904 = vmatmul.mubr.f32.gmra.mxu0 %v524
        %v905 = vpop.f32.mrf.mxu0
        %v906 = vadd.f32 0.0, %v905
        %v907 = vpop.f32.mrf.mxu0
        %908 = vmatprep.mubr.f32.mxu0 0.0
        %909 = vmatmul.mubr.f32.gmra.mxu0 %v527
        %v910 = vpop.f32.mrf.mxu0
        %v911 = vadd.f32 0.0, %v910
        %v912 = vpop.f32.mrf.mxu0
        %913 = vmatprep.mubr.f32.mxu0 0.0
        %914 = vmatmul.mubr.f32.gmra.mxu0 %v530
        %v915 = vpop.f32.mrf.mxu0
        %v916 = vadd.f32 0.0, %v915
        %v917 = vpop.f32.mrf.mxu0
        %918 = vmatprep.mubr.f32.mxu0 0.0
        %919 = vmatmul.mubr.f32.gmra.mxu0 %v533
        %v920 = vpop.f32.mrf.mxu0
        %v921 = vadd.f32 0.0, %v920
        %v922 = vpop.f32.mrf.mxu0
        %923 = vmatprep.mubr.f32.mxu0 0.0
        %924 = vmatmul.mubr.f32.gmra.mxu0 %v536
        %v925 = vpop.f32.mrf.mxu0
        %v926 = vadd.f32 0.0, %v925
        %v927 = vpop.f32.mrf.mxu0
        %928 = vmatprep.mubr.f32.mxu0 0.0
        %929 = vmatmul.mubr.f32.gmra.mxu0 %v539
        %v930 = vpop.f32.mrf.mxu0
        %v931 = vadd.f32 0.0, %v930
        %v932 = vpop.f32.mrf.mxu0
        %933 = vmatprep.mubr.f32.mxu0 0.0
        %934 = vmatmul.mubr.f32.gmra.mxu0 %v542
        %v935 = vpop.f32.mrf.mxu0
        %v936 = vadd.f32 0.0, %v935
        %v937 = vpop.f32.mrf.mxu0
        %938 = vmatprep.mubr.f32.mxu0 0.0
        %939 = vmatmul.mubr.f32.gmra.mxu0 %v545
        %v940 = vpop.f32.mrf.mxu0
        %v941 = vadd.f32 0.0, %v940
        %v942 = vpop.f32.mrf.mxu0
        %943 = vmatprep.mubr.f32.mxu0 0.0
        %944 = vmatmul.mubr.f32.gmra.mxu0 %v548
        %v945 = vpop.f32.mrf.mxu0
        %v946 = vadd.f32 0.0, %v945
        %v947 = vpop.f32.mrf.mxu0
        %948 = vmatprep.mubr.f32.mxu0 0.0
        %949 = vmatmul.mubr.f32.gmra.mxu0 %v551
        %v950 = vpop.f32.mrf.mxu0
        %v951 = vadd.f32 0.0, %v950
        %v952 = vpop.f32.mrf.mxu0
        %953 = vmatprep.mubr.f32.mxu0 0.0
        %954 = vmatmul.mubr.f32.gmra.mxu0 %v554
        %v955 = vpop.f32.mrf.mxu0
        %v956 = vadd.f32 0.0, %v955
        %v957 = vpop.f32.mrf.mxu0
        %958 = vmatprep.mubr.f32.mxu0 0.0
        %959 = vmatmul.mubr.f32.gmra.mxu0 %v557
        %v960 = vpop.f32.mrf.mxu0
        %v961 = vadd.f32 0.0, %v960
        %v962 = vpop.f32.mrf.mxu0
        %963 = vmatprep.mubr.f32.mxu0 0.0
        %964 = vmatmul.mubr.f32.gmra.mxu0 %v560
        %v965 = vpop.f32.mrf.mxu0
        %v966 = vadd.f32 0.0, %v965
        %v967 = vpop.f32.mrf.mxu0
        %968 = vmatprep.mubr.f32.mxu0 0.0
        %969 = vmatmul.mubr.f32.gmra.mxu0 %v563
        %v970 = vpop.f32.mrf.mxu0
        %v971 = vadd.f32 0.0, %v970
        %v972 = vpop.f32.mrf.mxu0
        %973 = vmatprep.mubr.f32.mxu0 0.0
        %974 = vmatmul.mubr.f32.gmra.mxu0 %v566
        %v975 = vpop.f32.mrf.mxu0
        %v976 = vadd.f32 0.0, %v975
        %v977 = vpop.f32.mrf.mxu0
        %978 = vmatprep.mubr.f32.mxu0 0.0
        %979 = vmatmul.mubr.f32.gmra.mxu0 %v569
        %v980 = vpop.f32.mrf.mxu0
        %v981 = vadd.f32 0.0, %v980
        %v982 = vpop.f32.mrf.mxu0
        %983 = vmatprep.mubr.f32.mxu0 0.0
        %984 = vmatmul.mubr.f32.gmra.mxu0 %v572
        %v985 = vpop.f32.mrf.mxu0
        %v986 = vadd.f32 0.0, %v985
        %v987 = vpop.f32.mrf.mxu0
        %988 = vmatprep.mubr.f32.mxu0 0.0
        %989 = vmatmul.mubr.f32.gmra.mxu0 %v575
        %v990 = vpop.f32.mrf.mxu0
        %v991 = vadd.f32 0.0, %v990
        %v992 = vpop.f32.mrf.mxu0
        %993 = vmatprep.mubr.f32.mxu0 0.0
        %994 = vmatmul.mubr.f32.gmra.mxu0 %v578
        %v995 = vpop.f32.mrf.mxu0
        %v996 = vadd.f32 0.0, %v995
        %v997 = vpop.f32.mrf.mxu0
        %998 = vmatprep.mubr.f32.mxu0 0.0
        %999 = vmatmul.mubr.f32.gmra.mxu0 %v581
        %v1000 = vpop.f32.mrf.mxu0
        %v1001 = vadd.f32 0.0, %v1000
        %v1002 = vpop.f32.mrf.mxu0
        %1003 = vmatprep.mubr.f32.mxu0 0.0
        %1004 = vmatmul.mubr.f32.gmra.mxu0 %v584
        %v1005 = vpop.f32.mrf.mxu0
        %v1006 = vadd.f32 0.0, %v1005
        %v1007 = vpop.f32.mrf.mxu0
        %1008 = vmatprep.mubr.f32.mxu0 0.0
        %1009 = vmatmul.mubr.f32.gmra.mxu0 %v587
        %v1010 = vpop.f32.mrf.mxu0
        %v1011 = vadd.f32 0.0, %v1010
        %v1012 = vpop.f32.mrf.mxu0
        %1013 = vmatprep.mubr.f32.mxu0 0.0
        %1014 = vmatmul.mubr.f32.gmra.mxu0 %v590
        %v1015 = vpop.f32.mrf.mxu0
        %v1016 = vadd.f32 0.0, %v1015
        %v1017 = vpop.f32.mrf.mxu0
        %1018 = vmatprep.mubr.f32.mxu0 0.0
        %1019 = vmatmul.mubr.f32.gmra.mxu0 %v593
        %v1020 = vpop.f32.mrf.mxu0
        %v1021 = vadd.f32 0.0, %v1020
        %v1022 = vpop.f32.mrf.mxu0
        %1023 = vmatprep.mubr.f32.mxu0 0.0
        %1024 = vmatmul.mubr.f32.gmra.mxu0 %v596
        %v1025 = vpop.f32.mrf.mxu0
        %v1026 = vadd.f32 0.0, %v1025
        %v1027 = vpop.f32.mrf.mxu0
        %1028 = vmatprep.mubr.f32.mxu0 0.0
        %1029 = vmatmul.mubr.f32.gmra.mxu0 %v599
        %v1030 = vpop.f32.mrf.mxu0
        %v1031 = vadd.f32 0.0, %v1030
        %v1032 = vpop.f32.mrf.mxu0
        %1033 = vmatprep.mubr.f32.mxu0 0.0
        %1034 = vmatmul.mubr.f32.gmra.mxu0 %v602
        %v1035 = vpop.f32.mrf.mxu0
        %v1036 = vadd.f32 0.0, %v1035
        %v1037 = vpop.f32.mrf.mxu0
        %1038 = vmatprep.mubr.f32.mxu0 0.0
        %1039 = vmatmul.mubr.f32.gmra.mxu0 %v605
        %v1040 = vpop.f32.mrf.mxu0
        %v1041 = vadd.f32 0.0, %v1040
        %v1042 = vpop.f32.mrf.mxu0
        %1043 = vmatprep.mubr.f32.mxu0 0.0
        %1044 = vmatmul.mubr.f32.gmra.mxu0 %v608
        %v1045 = vpop.f32.mrf.mxu0
        %v1046 = vadd.f32 0.0, %v1045
        %v1047 = vpop.f32.mrf.mxu0
        %1048 = vmatprep.mubr.f32.mxu0 0.0
        %1049 = vmatmul.mubr.f32.gmra.mxu0 %v611
        %v1050 = vpop.f32.mrf.mxu0
        %v1051 = vadd.f32 0.0, %v1050
        %v1052 = vpop.f32.mrf.mxu0
        %1053 = vmatprep.mubr.f32.mxu0 0.0
        %1054 = vmatmul.mubr.f32.gmra.mxu0 %v614
        %v1055 = vpop.f32.mrf.mxu0
        %v1056 = vadd.f32 0.0, %v1055
        %v1057 = vpop.f32.mrf.mxu0
        %1058 = vmatprep.mubr.f32.mxu0 0.0
        %1059 = vmatmul.mubr.f32.gmra.mxu0 %v617
        %v1060 = vpop.f32.mrf.mxu0
        %v1061 = vadd.f32 0.0, %v1060
        %v1062 = vpop.f32.mrf.mxu0
        %1063 = vmatprep.mubr.f32.mxu0 0.0
        %1064 = vmatmul.mubr.f32.gmra.mxu0 %v620
        %v1065 = vpop.f32.mrf.mxu0
        %v1066 = vadd.f32 0.0, %v1065
        %v1067 = vpop.f32.mrf.mxu0
        %1068 = vmatprep.mubr.f32.mxu0 0.0
        %1069 = vmatmul.mubr.f32.gmra.mxu0 %v623
        %v1070 = vpop.f32.mrf.mxu0
        %v1071 = vadd.f32 0.0, %v1070
        %v1072 = vpop.f32.mrf.mxu0
        %1073 = vmatprep.mubr.f32.mxu0 0.0
        %1074 = vmatmul.mubr.f32.gmra.mxu0 %v626
        %v1075 = vpop.f32.mrf.mxu0
        %v1076 = vadd.f32 0.0, %v1075
        %v1077 = vpop.f32.mrf.mxu0
        %1078 = vmatprep.mubr.f32.mxu0 0.0
        %1079 = vmatmul.mubr.f32.gmra.mxu0 %v629
        %v1080 = vpop.f32.mrf.mxu0
        %v1081 = vadd.f32 0.0, %v1080
        %v1082 = vpop.f32.mrf.mxu0
        %1083 = vmatprep.mubr.f32.mxu0 0.0
        %1084 = vmatmul.mubr.f32.gmra.mxu0 %v632
        %v1085 = vpop.f32.mrf.mxu0
        %v1086 = vadd.f32 0.0, %v1085
        %v1087 = vpop.f32.mrf.mxu0
        %1088 = vmatprep.mubr.f32.mxu0 0.0
        %1089 = vmatmul.mubr.f32.gmra.mxu0 %v635
        %v1090 = vpop.f32.mrf.mxu0
        %v1091 = vadd.f32 0.0, %v1090
        %v1092 = vpop.f32.mrf.mxu0
        %1093 = vmatprep.mubr.f32.mxu0 0.0
        %1094 = vmatmul.mubr.f32.gmra.mxu0 %v638
        %v1095 = vpop.f32.mrf.mxu0
        %v1096 = vadd.f32 0.0, %v1095
        %v1097 = vpop.f32.mrf.mxu0
        %1098 = vmatprep.mubr.f32.mxu0 0.0
        %1099 = vmatmul.mubr.f32.gmra.mxu0 %v641
        %v1100 = vpop.f32.mrf.mxu0
        %v1101 = vadd.f32 0.0, %v1100
        %v1102 = vpop.f32.mrf.mxu0
        %1103 = vmatprep.mubr.f32.mxu0 0.0
        %1104 = vmatmul.mubr.f32.gmra.mxu0 %v644
        %v1105 = vpop.f32.mrf.mxu0
        %v1106 = vadd.f32 0.0, %v1105
        %v1107 = vpop.f32.mrf.mxu0
        %1108 = vmatprep.mubr.f32.mxu0 0.0
        %1109 = vmatmul.mubr.f32.gmra.mxu0 %v647
        %v1110 = vpop.f32.mrf.mxu0
        %v1111 = vadd.f32 0.0, %v1110
        %v1112 = vpop.f32.mrf.mxu0
        %1113 = vmatprep.mubr.f32.mxu0 0.0
        %1114 = vmatmul.mubr.f32.gmra.mxu0 %v650
        %v1115 = vpop.f32.mrf.mxu0
        %v1116 = vadd.f32 0.0, %v1115
        %v1117 = vpop.f32.mrf.mxu0
        %1118 = vmatprep.mubr.f32.mxu0 0.0
        %1119 = vmatmul.mubr.f32.gmra.mxu0 %v653
        %v1120 = vpop.f32.mrf.mxu0
        %v1121 = vadd.f32 0.0, %v1120
        %v1122 = vpop.f32.mrf.mxu0
        %1123 = vdwg.mxu0
        %v1124 = vmax.f32 %v726, %v826
        %v1125 = vmax.f32 %v731, %v831
        %v1126 = vmax.f32 %v736, %v836
        %v1127 = vmax.f32 %v741, %v841
        %v1128 = vmax.f32 %v746, %v846
        %v1129 = vmax.f32 %v751, %v851
        %v1130 = vmax.f32 %v756, %v856
        %v1131 = vmax.f32 %v761, %v861
        %v1132 = vmax.f32 %v766, %v866
        %v1133 = vmax.f32 %v771, %v871
        %v1134 = vmax.f32 %v776, %v876
        %v1135 = vmax.f32 %v781, %v881
        %v1136 = vmax.f32 %v786, %v886
        %v1137 = vmax.f32 %v791, %v891
        %v1138 = vmax.f32 %v796, %v896
        %v1139 = vmax.f32 %v801, %v901
        %v1140 = vmax.f32 %v806, %v906
        %v1141 = vmax.f32 %v811, %v911
        %v1142 = vmax.f32 %v816, %v916
        %v1143 = vmax.f32 %v821, %v921
        %v1144 = vmax.f32 %v926, %v1026
        %v1145 = vmax.f32 %v931, %v1031
        %v1146 = vmax.f32 %v936, %v1036
        %v1147 = vmax.f32 %v941, %v1041
        %v1148 = vmax.f32 %v946, %v1046
        %v1149 = vmax.f32 %v951, %v1051
        %v1150 = vmax.f32 %v956, %v1056
        %v1151 = vmax.f32 %v961, %v1061
        %v1152 = vmax.f32 %v966, %v1066
        %v1153 = vmax.f32 %v971, %v1071
        %v1154 = vmax.f32 %v976, %v1076
        %v1155 = vmax.f32 %v981, %v1081
        %v1156 = vmax.f32 %v986, %v1086
        %v1157 = vmax.f32 %v991, %v1091
        %v1158 = vmax.f32 %v996, %v1096
        %v1159 = vmax.f32 %v1001, %v1101
        %v1160 = vmax.f32 %v1006, %v1106
        %v1161 = vmax.f32 %v1011, %v1111
        %v1162 = vmax.f32 %v1016, %v1116
        %v1163 = vmax.f32 %v1021, %v1121
        %v1164 = vmax.f32 %v1124, %v1144
        %v1165 = vmax.f32 %v1125, %v1145
        %v1166 = vmax.f32 %v1126, %v1146
        %v1167 = vmax.f32 %v1127, %v1147
        %v1168 = vmax.f32 %v1128, %v1148
        %v1169 = vmax.f32 %v1129, %v1149
        %v1170 = vmax.f32 %v1130, %v1150
        %v1171 = vmax.f32 %v1131, %v1151
        %v1172 = vmax.f32 %v1132, %v1152
        %v1173 = vmax.f32 %v1133, %v1153
        %v1174 = vmax.f32 %v1134, %v1154
        %v1175 = vmax.f32 %v1135, %v1155
        %v1176 = vmax.f32 %v1136, %v1156
        %v1177 = vmax.f32 %v1137, %v1157
        %v1178 = vmax.f32 %v1138, %v1158
        %v1179 = vmax.f32 %v1139, %v1159
        %v1180 = vmax.f32 %v1140, %v1160
        %v1181 = vmax.f32 %v1141, %v1161
        %v1182 = vmax.f32 %v1142, %v1162
        %v1183 = vmax.f32 %v1143, %v1163
        %v1184 = vld [vmem:[%s2] sm:$0x1]
        %v1186 = vlaneseq
        %v1187 = vshrl.u32 %v1186, 7
        %v1188 = vsub.s32 0, %v1187
        %v1189 = vrot.slane %v1184, %v1188
        %v1191 = vadd.f32 %v1164, %v1189
        %v1192 = vadd.f32 %v1165, %v1189
        %v1193 = vadd.f32 %v1166, %v1189
        %v1194 = vadd.f32 %v1167, %v1189
        %v1195 = vadd.f32 %v1168, %v1189
        %v1196 = vadd.f32 %v1169, %v1189
        %v1197 = vadd.f32 %v1170, %v1189
        %v1198 = vadd.f32 %v1171, %v1189
        %v1199 = vadd.f32 %v1172, %v1189
        %v1200 = vadd.f32 %v1173, %v1189
        %v1201 = vadd.f32 %v1174, %v1189
        %v1202 = vadd.f32 %v1175, %v1189
        %v1203 = vadd.f32 %v1176, %v1189
        %v1204 = vadd.f32 %v1177, %v1189
        %v1205 = vadd.f32 %v1178, %v1189
        %v1206 = vadd.f32 %v1179, %v1189
        %v1207 = vadd.f32 %v1180, %v1189
        %v1208 = vadd.f32 %v1181, %v1189
        %v1209 = vadd.f32 %v1182, %v1189
        %v1210 = vadd.f32 %v1183, %v1189
        %v1211 = vmax.f32 %v1191, 0.0
        %v1212 = vmax.f32 %v1192, 0.0
        %v1213 = vmax.f32 %v1193, 0.0
        %v1214 = vmax.f32 %v1194, 0.0
        %v1215 = vmax.f32 %v1195, 0.0
        %v1216 = vmax.f32 %v1196, 0.0
        %v1217 = vmax.f32 %v1197, 0.0
        %v1218 = vmax.f32 %v1198, 0.0
        %v1219 = vmax.f32 %v1199, 0.0
        %v1220 = vmax.f32 %v1200, 0.0
        %v1221 = vmax.f32 %v1201, 0.0
        %v1222 = vmax.f32 %v1202, 0.0
        %v1223 = vmax.f32 %v1203, 0.0
        %v1224 = vmax.f32 %v1204, 0.0
        %v1225 = vmax.f32 %v1205, 0.0
        %v1226 = vmax.f32 %v1206, 0.0
        %v1227 = vmax.f32 %v1207, 0.0
        %v1228 = vmax.f32 %v1208, 0.0
        %v1229 = vmax.f32 %v1209, 0.0
        %v1230 = vmax.f32 %v1210, 0.0
        %vm1231 = vcmask 80896
        %1232 = vst.msk [vmem:[#allocation2] sm:$0xff] %vm1231, %v1211
        %1233 = vst.msk [vmem:[#allocation2 + $0x8] sm:$0xff] %vm1231, %v1212
        %1234 = vst.msk [vmem:[#allocation2 + $0x10] sm:$0xff] %vm1231, %v1213
        %1235 = vst.msk [vmem:[#allocation2 + $0x18] sm:$0xff] %vm1231, %v1214
        %1236 = vst.msk [vmem:[#allocation2 + $0x20] sm:$0xff] %vm1231, %v1215
        %1237 = vst.msk [vmem:[#allocation2 + $0x28] sm:$0xff] %vm1231, %v1216
        %1238 = vst.msk [vmem:[#allocation2 + $0x30] sm:$0xff] %vm1231, %v1217
        %1239 = vst.msk [vmem:[#allocation2 + $0x38] sm:$0xff] %vm1231, %v1218
        %1240 = vst.msk [vmem:[#allocation2 + $0x40] sm:$0xff] %vm1231, %v1219
        %1241 = vst.msk [vmem:[#allocation2 + $0x48] sm:$0xff] %vm1231, %v1220
        %1242 = vst.msk [vmem:[#allocation2 + $0x50] sm:$0xff] %vm1231, %v1221
        %1243 = vst.msk [vmem:[#allocation2 + $0x58] sm:$0xff] %vm1231, %v1222
        %1244 = vst.msk [vmem:[#allocation2 + $0x60] sm:$0xff] %vm1231, %v1223
        %1245 = vst.msk [vmem:[#allocation2 + $0x68] sm:$0xff] %vm1231, %v1224
        %1246 = vst.msk [vmem:[#allocation2 + $0x70] sm:$0xff] %vm1231, %v1225
        %1247 = vst.msk [vmem:[#allocation2 + $0x78] sm:$0xff] %vm1231, %v1226
        %1248 = vst.msk [vmem:[#allocation2 + $0x80] sm:$0xff] %vm1231, %v1227
        %1249 = vst.msk [vmem:[#allocation2 + $0x88] sm:$0xff] %vm1231, %v1228
        %1250 = vst.msk [vmem:[#allocation2 + $0x90] sm:$0xff] %vm1231, %v1229
        %1251 = vst.msk [vmem:[#allocation2 + $0x98] sm:$0xff] %vm1231, %v1230
        %v1252 = vld [vmem:[#allocation2] sm:$0xff]
        %v1253 = vld [vmem:[#allocation2 + $0x8] sm:$0xff]
        %v1254 = vld [vmem:[#allocation2 + $0x10] sm:$0xff]
        %1255 = vst.msk [vmem:[#allocation3] sm:$0xff] %vm1231, %v1252
        %1256 = vst.msk [vmem:[#allocation3 + $0x10] sm:$0xff] %vm1231, %v1253
        %1257 = vst.msk [vmem:[#allocation3 + $0x20] sm:$0xff] %vm1231, %v1254
        %v1258 = vld [vmem:[#allocation2 + $0x28] sm:$0xff]
        %v1259 = vld [vmem:[#allocation2 + $0x30] sm:$0xff]
        %v1260 = vld [vmem:[#allocation2 + $0x38] sm:$0xff]
        %1264 = vrot.lane.b32.xlu0 %v1258, 10
        %v1265 = vpop.permute.xlu0 %1264
        %1266 = vrot.lane.b32.xlu0 %v1259, 10
        %v1267 = vpop.permute.xlu0 %1266
        %1268 = vrot.lane.b32.xlu0 %v1260, 10
        %v1269 = vpop.permute.xlu0 %1268
        %vm1273 = vcmask 162896
        %1274 = vst.msk [vmem:[#allocation3] sm:$0xff] %vm1273, %v1265
        %1275 = vst.msk [vmem:[#allocation3 + $0x10] sm:$0xff] %vm1273, %v1267
        %1276 = vst.msk [vmem:[#allocation3 + $0x20] sm:$0xff] %vm1273, %v1269
        %v1277 = vld [vmem:[#allocation2 + $0x1] sm:$0xff]
        %v1278 = vld [vmem:[#allocation2 + $0x9] sm:$0xff]
        %v1279 = vld [vmem:[#allocation2 + $0x11] sm:$0xff]
        %1283 = vrot.lane.b32.xlu0 %v1277, 20
        %v1284 = vpop.permute.xlu0 %1283
        %1285 = vrot.lane.b32.xlu0 %v1278, 20
        %v1286 = vpop.permute.xlu0 %1285
        %1287 = vrot.lane.b32.xlu0 %v1279, 20
        %v1288 = vpop.permute.xlu0 %1287
        %vm1292 = vcmask 244896
        %1293 = vst.msk [vmem:[#allocation3] sm:$0xff] %vm1292, %v1284
        %1294 = vst.msk [vmem:[#allocation3 + $0x10] sm:$0xff] %vm1292, %v1286
        %1295 = vst.msk [vmem:[#allocation3 + $0x20] sm:$0xff] %vm1292, %v1288
        %v1296 = vld [vmem:[#allocation2 + $0x29] sm:$0xff]
        %v1297 = vld [vmem:[#allocation2 + $0x31] sm:$0xff]
        %v1298 = vld [vmem:[#allocation2 + $0x39] sm:$0xff]
        %1302 = vrot.lane.b32.xlu0 %v1296, 30
        %v1303 = vpop.permute.xlu0 %1302
        %1304 = vrot.lane.b32.xlu0 %v1297, 30
        %v1305 = vpop.permute.xlu0 %1304
        %1306 = vrot.lane.b32.xlu0 %v1298, 30
        %v1307 = vpop.permute.xlu0 %1306
        %vm1311 = vcmask 326896
        %1312 = vst.msk [vmem:[#allocation3] sm:$0xff] %vm1311, %v1303
        %1313 = vst.msk [vmem:[#allocation3 + $0x10] sm:$0xff] %vm1311, %v1305
        %1314 = vst.msk [vmem:[#allocation3 + $0x20] sm:$0xff] %vm1311, %v1307
        %v1315 = vld [vmem:[#allocation2 + $0x2] sm:$0xff]
        %v1316 = vld [vmem:[#allocation2 + $0xa] sm:$0xff]
        %v1317 = vld [vmem:[#allocation2 + $0x12] sm:$0xff]
        %1321 = vrot.lane.b32.xlu0 %v1315, 40
        %v1322 = vpop.permute.xlu0 %1321
        %1323 = vrot.lane.b32.xlu0 %v1316, 40
        %v1324 = vpop.permute.xlu0 %1323
        %1325 = vrot.lane.b32.xlu0 %v1317, 40
        %v1326 = vpop.permute.xlu0 %1325
        %vm1330 = vcmask 408896
        %1331 = vst.msk [vmem:[#allocation3] sm:$0xff] %vm1330, %v1322
        %1332 = vst.msk [vmem:[#allocation3 + $0x10] sm:$0xff] %vm1330, %v1324
        %1333 = vst.msk [vmem:[#allocation3 + $0x20] sm:$0xff] %vm1330, %v1326
        %v1334 = vld [vmem:[#allocation2 + $0x50] sm:$0xff]
        %v1335 = vld [vmem:[#allocation2 + $0x58] sm:$0xff]
        %v1336 = vld [vmem:[#allocation2 + $0x60] sm:$0xff]
        %1340 = vrot.lane.b32.xlu0 %v1334, 50
        %v1341 = vpop.permute.xlu0 %1340
        %1342 = vrot.lane.b32.xlu0 %v1335, 50
        %v1343 = vpop.permute.xlu0 %1342
        %1344 = vrot.lane.b32.xlu0 %v1336, 50
        %v1345 = vpop.permute.xlu0 %1344
        %vm1349 = vcmask 490896
        %1350 = vst.msk [vmem:[#allocation3] sm:$0xff] %vm1349, %v1341
        %1351 = vst.msk [vmem:[#allocation3 + $0x10] sm:$0xff] %vm1349, %v1343
        %1352 = vst.msk [vmem:[#allocation3 + $0x20] sm:$0xff] %vm1349, %v1345
        %v1353 = vld [vmem:[#allocation2 + $0x78] sm:$0xff]
        %v1354 = vld [vmem:[#allocation2 + $0x80] sm:$0xff]
        %v1355 = vld [vmem:[#allocation2 + $0x88] sm:$0xff]
        %1359 = vrot.lane.b32.xlu0 %v1353, 60
        %v1360 = vpop.permute.xlu0 %1359
        %1361 = vrot.lane.b32.xlu0 %v1354, 60
        %v1362 = vpop.permute.xlu0 %1361
        %1363 = vrot.lane.b32.xlu0 %v1355, 60
        %v1364 = vpop.permute.xlu0 %1363
        %vm1368 = vcmask 572896
        %1369 = vst.msk [vmem:[#allocation3] sm:$0xff] %vm1368, %v1360
        %1370 = vst.msk [vmem:[#allocation3 + $0x10] sm:$0xff] %vm1368, %v1362
        %1371 = vst.msk [vmem:[#allocation3 + $0x20] sm:$0xff] %vm1368, %v1364
        %v1372 = vld [vmem:[#allocation2 + $0x51] sm:$0xff]
        %v1373 = vld [vmem:[#allocation2 + $0x59] sm:$0xff]
        %v1374 = vld [vmem:[#allocation2 + $0x61] sm:$0xff]
        %1378 = vrot.lane.b32.xlu0 %v1372, 70
        %v1379 = vpop.permute.xlu0 %1378
        %1380 = vrot.lane.b32.xlu0 %v1373, 70
        %v1381 = vpop.permute.xlu0 %1380
        %1382 = vrot.lane.b32.xlu0 %v1374, 70
        %v1383 = vpop.permute.xlu0 %1382
        %vm1387 = vcmask 654896
        %1388 = vst.msk [vmem:[#allocation3] sm:$0xff] %vm1387, %v1379
        %1389 = vst.msk [vmem:[#allocation3 + $0x10] sm:$0xff] %vm1387, %v1381
        %1390 = vst.msk [vmem:[#allocation3 + $0x20] sm:$0xff] %vm1387, %v1383
        %v1391 = vld [vmem:[#allocation2 + $0x79] sm:$0xff]
        %v1392 = vld [vmem:[#allocation2 + $0x81] sm:$0xff]
        %v1393 = vld [vmem:[#allocation2 + $0x89] sm:$0xff]
        %1397 = vrot.lane.b32.xlu0 %v1391, 80
        %v1398 = vpop.permute.xlu0 %1397
        %1399 = vrot.lane.b32.xlu0 %v1392, 80
        %v1400 = vpop.permute.xlu0 %1399
        %1401 = vrot.lane.b32.xlu0 %v1393, 80
        %v1402 = vpop.permute.xlu0 %1401
        %vm1406 = vcmask 736896
        %1407 = vst.msk [vmem:[#allocation3] sm:$0xff] %vm1406, %v1398
        %1408 = vst.msk [vmem:[#allocation3 + $0x10] sm:$0xff] %vm1406, %v1400
        %1409 = vst.msk [vmem:[#allocation3 + $0x20] sm:$0xff] %vm1406, %v1402
        %v1410 = vld [vmem:[#allocation2 + $0x52] sm:$0xff]
        %v1411 = vld [vmem:[#allocation2 + $0x5a] sm:$0xff]
        %v1412 = vld [vmem:[#allocation2 + $0x62] sm:$0xff]
        %1416 = vrot.lane.b32.xlu0 %v1410, 90
        %v1417 = vpop.permute.xlu0 %1416
        %1418 = vrot.lane.b32.xlu0 %v1411, 90
        %v1419 = vpop.permute.xlu0 %1418
        %1420 = vrot.lane.b32.xlu0 %v1412, 90
        %v1421 = vpop.permute.xlu0 %1420
        %vm1425 = vcmask 818896
        %1426 = vst.msk [vmem:[#allocation3] sm:$0xff] %vm1425, %v1417
        %1427 = vst.msk [vmem:[#allocation3 + $0x10] sm:$0xff] %vm1425, %v1419
        %1428 = vst.msk [vmem:[#allocation3 + $0x20] sm:$0xff] %vm1425, %v1421
        %v1429 = vld [vmem:[#allocation2 + $0x6] sm:$0xff]
        %v1430 = vld [vmem:[#allocation2 + $0xe] sm:$0xff]
        %v1431 = vld [vmem:[#allocation2 + $0x16] sm:$0xff]
        %1435 = vrot.lane.b32.xlu0 %v1429, 100
        %v1436 = vpop.permute.xlu0 %1435
        %1437 = vrot.lane.b32.xlu0 %v1430, 100
        %v1438 = vpop.permute.xlu0 %1437
        %1439 = vrot.lane.b32.xlu0 %v1431, 100
        %v1440 = vpop.permute.xlu0 %1439
        %vm1444 = vcmask 900896
        %1445 = vst.msk [vmem:[#allocation3] sm:$0xff] %vm1444, %v1436
        %1446 = vst.msk [vmem:[#allocation3 + $0x10] sm:$0xff] %vm1444, %v1438
        %1447 = vst.msk [vmem:[#allocation3 + $0x20] sm:$0xff] %vm1444, %v1440
        %v1448 = vld [vmem:[#allocation2 + $0x2e] sm:$0xff]
        %v1449 = vld [vmem:[#allocation2 + $0x36] sm:$0xff]
        %v1450 = vld [vmem:[#allocation2 + $0x3e] sm:$0xff]
        %1454 = vrot.lane.b32.xlu0 %v1448, 110
        %v1455 = vpop.permute.xlu0 %1454
        %1456 = vrot.lane.b32.xlu0 %v1449, 110
        %v1457 = vpop.permute.xlu0 %1456
        %1458 = vrot.lane.b32.xlu0 %v1450, 110
        %v1459 = vpop.permute.xlu0 %1458
        %vm1463 = vcmask 982896
        %1464 = vst.msk [vmem:[#allocation3] sm:$0xff] %vm1463, %v1455
        %1465 = vst.msk [vmem:[#allocation3 + $0x10] sm:$0xff] %vm1463, %v1457
        %1466 = vst.msk [vmem:[#allocation3 + $0x20] sm:$0xff] %vm1463, %v1459
        %v1467 = vld [vmem:[#allocation2 + $0x7] sm:$0xff]
        %v1468 = vld [vmem:[#allocation2 + $0xf] sm:$0xff]
        %v1469 = vld [vmem:[#allocation2 + $0x17] sm:$0xff]
        %1473 = vrot.lane.b32.xlu0 %v1467, 120
        %v1474 = vpop.permute.xlu0 %1473
        %1475 = vrot.lane.b32.xlu0 %v1468, 120
        %v1476 = vpop.permute.xlu0 %1475
        %1477 = vrot.lane.b32.xlu0 %v1469, 120
        %v1478 = vpop.permute.xlu0 %1477
        %vm1482 = vcmask 1048512
        %1483 = vst.msk [vmem:[#allocation3] sm:$0xff] %vm1482, %v1474
        %vm1484 = vcmask 15360
        %1485 = vst.msk [vmem:[#allocation3 + $0x8] sm:$0xff] %vm1484, %v1474
        %1486 = vst.msk [vmem:[#allocation3 + $0x10] sm:$0xff] %vm1482, %v1476
        %1487 = vst.msk [vmem:[#allocation3 + $0x18] sm:$0xff] %vm1484, %v1476
        %1488 = vst.msk [vmem:[#allocation3 + $0x20] sm:$0xff] %vm1482, %v1478
        %1489 = vst.msk [vmem:[#allocation3 + $0x28] sm:$0xff] %vm1484, %v1478
        %v1490 = vld [vmem:[#allocation2 + $0x2f] sm:$0xff]
        %v1491 = vld [vmem:[#allocation2 + $0x37] sm:$0xff]
        %v1492 = vld [vmem:[#allocation2 + $0x3f] sm:$0xff]
        %1496 = vrot.lane.b32.xlu0 %v1490, 2
        %v1497 = vpop.permute.xlu0 %1496
        %1498 = vrot.lane.b32.xlu0 %v1491, 2
        %v1499 = vpop.permute.xlu0 %1498
        %1500 = vrot.lane.b32.xlu0 %v1492, 2
        %v1501 = vpop.permute.xlu0 %1500
        %vm1505 = vcmask 97296
        %1506 = vst.msk [vmem:[#allocation3 + $0x8] sm:$0xff] %vm1505, %v1497
        %1507 = vst.msk [vmem:[#allocation3 + $0x18] sm:$0xff] %vm1505, %v1499
        %1508 = vst.msk [vmem:[#allocation3 + $0x28] sm:$0xff] %vm1505, %v1501
        %v1509 = vld [vmem:[#allocation2 + $0x8] sm:$0xff]
        %v1510 = vld [vmem:[#allocation2 + $0x10] sm:$0xff]
        %v1511 = vld [vmem:[#allocation2 + $0x18] sm:$0xff]
        %1515 = vrot.lane.b32.xlu0 %v1509, 12
        %v1516 = vpop.permute.xlu0 %1515
        %1517 = vrot.lane.b32.xlu0 %v1510, 12
        %v1518 = vpop.permute.xlu0 %1517
        %1519 = vrot.lane.b32.xlu0 %v1511, 12
        %v1520 = vpop.permute.xlu0 %1519
        %vm1524 = vcmask 179296
        %1525 = vst.msk [vmem:[#allocation3 + $0x8] sm:$0xff] %vm1524, %v1516
        %1526 = vst.msk [vmem:[#allocation3 + $0x18] sm:$0xff] %vm1524, %v1518
        %1527 = vst.msk [vmem:[#allocation3 + $0x28] sm:$0xff] %vm1524, %v1520
        %v1528 = vld [vmem:[#allocation2 + $0x56] sm:$0xff]
        %v1529 = vld [vmem:[#allocation2 + $0x5e] sm:$0xff]
        %v1530 = vld [vmem:[#allocation2 + $0x66] sm:$0xff]
        %1534 = vrot.lane.b32.xlu0 %v1528, 22
        %v1535 = vpop.permute.xlu0 %1534
        %1536 = vrot.lane.b32.xlu0 %v1529, 22
        %v1537 = vpop.permute.xlu0 %1536
        %1538 = vrot.lane.b32.xlu0 %v1530, 22
        %v1539 = vpop.permute.xlu0 %1538
        %vm1543 = vcmask 261296
        %1544 = vst.msk [vmem:[#allocation3 + $0x8] sm:$0xff] %vm1543, %v1535
        %1545 = vst.msk [vmem:[#allocation3 + $0x18] sm:$0xff] %vm1543, %v1537
        %1546 = vst.msk [vmem:[#allocation3 + $0x28] sm:$0xff] %vm1543, %v1539
        %v1547 = vld [vmem:[#allocation2 + $0x7e] sm:$0xff]
        %v1548 = vld [vmem:[#allocation2 + $0x86] sm:$0xff]
        %v1549 = vld [vmem:[#allocation2 + $0x8e] sm:$0xff]
        %1553 = vrot.lane.b32.xlu0 %v1547, 32
        %v1554 = vpop.permute.xlu0 %1553
        %1555 = vrot.lane.b32.xlu0 %v1548, 32
        %v1556 = vpop.permute.xlu0 %1555
        %1557 = vrot.lane.b32.xlu0 %v1549, 32
        %v1558 = vpop.permute.xlu0 %1557
        %vm1562 = vcmask 343296
        %1563 = vst.msk [vmem:[#allocation3 + $0x8] sm:$0xff] %vm1562, %v1554
        %1564 = vst.msk [vmem:[#allocation3 + $0x18] sm:$0xff] %vm1562, %v1556
        %1565 = vst.msk [vmem:[#allocation3 + $0x28] sm:$0xff] %vm1562, %v1558
        %v1566 = vld [vmem:[#allocation2 + $0x57] sm:$0xff]
        %v1567 = vld [vmem:[#allocation2 + $0x5f] sm:$0xff]
        %v1568 = vld [vmem:[#allocation2 + $0x67] sm:$0xff]
        %1572 = vrot.lane.b32.xlu0 %v1566, 42
        %v1573 = vpop.permute.xlu0 %1572
        %1574 = vrot.lane.b32.xlu0 %v1567, 42
        %v1575 = vpop.permute.xlu0 %1574
        %1576 = vrot.lane.b32.xlu0 %v1568, 42
        %v1577 = vpop.permute.xlu0 %1576
        %vm1581 = vcmask 425296
        %1582 = vst.msk [vmem:[#allocation3 + $0x8] sm:$0xff] %vm1581, %v1573
        %1583 = vst.msk [vmem:[#allocation3 + $0x18] sm:$0xff] %vm1581, %v1575
        %1584 = vst.msk [vmem:[#allocation3 + $0x28] sm:$0xff] %vm1581, %v1577
        %v1585 = vld [vmem:[#allocation2 + $0x7f] sm:$0xff]
        %v1586 = vld [vmem:[#allocation2 + $0x87] sm:$0xff]
        %v1587 = vld [vmem:[#allocation2 + $0x8f] sm:$0xff]
        %1591 = vrot.lane.b32.xlu0 %v1585, 52
        %v1592 = vpop.permute.xlu0 %1591
        %1593 = vrot.lane.b32.xlu0 %v1586, 52
        %v1594 = vpop.permute.xlu0 %1593
        %1595 = vrot.lane.b32.xlu0 %v1587, 52
        %v1596 = vpop.permute.xlu0 %1595
        %vm1600 = vcmask 507296
        %1601 = vst.msk [vmem:[#allocation3 + $0x8] sm:$0xff] %vm1600, %v1592
        %1602 = vst.msk [vmem:[#allocation3 + $0x18] sm:$0xff] %vm1600, %v1594
        %1603 = vst.msk [vmem:[#allocation3 + $0x28] sm:$0xff] %vm1600, %v1596
        %v1604 = vld [vmem:[#allocation2 + $0x58] sm:$0xff]
        %v1605 = vld [vmem:[#allocation2 + $0x60] sm:$0xff]
        %v1606 = vld [vmem:[#allocation2 + $0x68] sm:$0xff]
        %1610 = vrot.lane.b32.xlu0 %v1604, 62
        %v1611 = vpop.permute.xlu0 %1610
        %1612 = vrot.lane.b32.xlu0 %v1605, 62
        %v1613 = vpop.permute.xlu0 %1612
        %1614 = vrot.lane.b32.xlu0 %v1606, 62
        %v1615 = vpop.permute.xlu0 %1614
        %vm1619 = vcmask 589296
        %1620 = vst.msk [vmem:[#allocation3 + $0x8] sm:$0xff] %vm1619, %v1611
        %1621 = vst.msk [vmem:[#allocation3 + $0x18] sm:$0xff] %vm1619, %v1613
        %1622 = vst.msk [vmem:[#allocation3 + $0x28] sm:$0xff] %vm1619, %v1615
        %v1623 = vld [vmem:[#allocation2 + $0xc] sm:$0xff]
        %v1624 = vld [vmem:[#allocation2 + $0x14] sm:$0xff]
        %v1625 = vld [vmem:[#allocation2 + $0x1c] sm:$0xff]
        %1629 = vrot.lane.b32.xlu0 %v1623, 72
        %v1630 = vpop.permute.xlu0 %1629
        %1631 = vrot.lane.b32.xlu0 %v1624, 72
        %v1632 = vpop.permute.xlu0 %1631
        %1633 = vrot.lane.b32.xlu0 %v1625, 72
        %v1634 = vpop.permute.xlu0 %1633
        %vm1638 = vcmask 671296
        %1639 = vst.msk [vmem:[#allocation3 + $0x8] sm:$0xff] %vm1638, %v1630
        %1640 = vst.msk [vmem:[#allocation3 + $0x18] sm:$0xff] %vm1638, %v1632
        %1641 = vst.msk [vmem:[#allocation3 + $0x28] sm:$0xff] %vm1638, %v1634
        %v1642 = vld [vmem:[#allocation2 + $0x34] sm:$0xff]
        %v1643 = vld [vmem:[#allocation2 + $0x3c] sm:$0xff]
        %v1644 = vld [vmem:[#allocation2 + $0x44] sm:$0xff]
        %1648 = vrot.lane.b32.xlu0 %v1642, 82
        %v1649 = vpop.permute.xlu0 %1648
        %1650 = vrot.lane.b32.xlu0 %v1643, 82
        %v1651 = vpop.permute.xlu0 %1650
        %1652 = vrot.lane.b32.xlu0 %v1644, 82
        %v1653 = vpop.permute.xlu0 %1652
        %vm1657 = vcmask 753296
        %1658 = vst.msk [vmem:[#allocation3 + $0x8] sm:$0xff] %vm1657, %v1649
        %1659 = vst.msk [vmem:[#allocation3 + $0x18] sm:$0xff] %vm1657, %v1651
        %1660 = vst.msk [vmem:[#allocation3 + $0x28] sm:$0xff] %vm1657, %v1653
        %v1661 = vld [vmem:[#allocation2 + $0xd] sm:$0xff]
        %v1662 = vld [vmem:[#allocation2 + $0x15] sm:$0xff]
        %v1663 = vld [vmem:[#allocation2 + $0x1d] sm:$0xff]
        %1667 = vrot.lane.b32.xlu0 %v1661, 92
        %v1668 = vpop.permute.xlu0 %1667
        %1669 = vrot.lane.b32.xlu0 %v1662, 92
        %v1670 = vpop.permute.xlu0 %1669
        %1671 = vrot.lane.b32.xlu0 %v1663, 92
        %v1672 = vpop.permute.xlu0 %1671
        %vm1676 = vcmask 835296
        %1677 = vst.msk [vmem:[#allocation3 + $0x8] sm:$0xff] %vm1676, %v1668
        %1678 = vst.msk [vmem:[#allocation3 + $0x18] sm:$0xff] %vm1676, %v1670
        %1679 = vst.msk [vmem:[#allocation3 + $0x28] sm:$0xff] %vm1676, %v1672
        %v1680 = vld [vmem:[#allocation2 + $0x35] sm:$0xff]
        %v1681 = vld [vmem:[#allocation2 + $0x3d] sm:$0xff]
        %v1682 = vld [vmem:[#allocation2 + $0x45] sm:$0xff]
        %1686 = vrot.lane.b32.xlu0 %v1680, 102
        %v1687 = vpop.permute.xlu0 %1686
        %1688 = vrot.lane.b32.xlu0 %v1681, 102
        %v1689 = vpop.permute.xlu0 %1688
        %1690 = vrot.lane.b32.xlu0 %v1682, 102
        %v1691 = vpop.permute.xlu0 %1690
        %vm1695 = vcmask 917296
        %1696 = vst.msk [vmem:[#allocation3 + $0x8] sm:$0xff] %vm1695, %v1687
        %1697 = vst.msk [vmem:[#allocation3 + $0x18] sm:$0xff] %vm1695, %v1689
        %1698 = vst.msk [vmem:[#allocation3 + $0x28] sm:$0xff] %vm1695, %v1691
        %v1699 = vld [vmem:[#allocation2 + $0xe] sm:$0xff]
        %v1700 = vld [vmem:[#allocation2 + $0x16] sm:$0xff]
        %v1701 = vld [vmem:[#allocation2 + $0x1e] sm:$0xff]
        %1705 = vrot.lane.b32.xlu0 %v1699, 112
        %v1706 = vpop.permute.xlu0 %1705
        %1707 = vrot.lane.b32.xlu0 %v1700, 112
        %v1708 = vpop.permute.xlu0 %1707
        %1709 = vrot.lane.b32.xlu0 %v1701, 112
        %v1710 = vpop.permute.xlu0 %1709
        %vm1714 = vcmask 999296
        %1715 = vst.msk [vmem:[#allocation3 + $0x8] sm:$0xff] %vm1714, %v1706
        %1716 = vst.msk [vmem:[#allocation3 + $0x18] sm:$0xff] %vm1714, %v1708
        %1717 = vst.msk [vmem:[#allocation3 + $0x28] sm:$0xff] %vm1714, %v1710
        %v1718 = vld [vmem:[#allocation2 + $0x28] sm:$0xff]
        %v1719 = vld [vmem:[#allocation2 + $0x30] sm:$0xff]
        %v1720 = vld [vmem:[#allocation2 + $0x38] sm:$0xff]
        %1721 = vst.msk [vmem:[#allocation3 + $0x30] sm:$0xff] %vm1231, %v1718
        %1722 = vst.msk [vmem:[#allocation3 + $0x40] sm:$0xff] %vm1231, %v1719
        %1723 = vst.msk [vmem:[#allocation3 + $0x50] sm:$0xff] %vm1231, %v1720
        %v1724 = vld [vmem:[#allocation2 + $0x1] sm:$0xff]
        %v1725 = vld [vmem:[#allocation2 + $0x9] sm:$0xff]
        %v1726 = vld [vmem:[#allocation2 + $0x11] sm:$0xff]
        %1730 = vrot.lane.b32.xlu0 %v1724, 10
        %v1731 = vpop.permute.xlu0 %1730
        %1732 = vrot.lane.b32.xlu0 %v1725, 10
        %v1733 = vpop.permute.xlu0 %1732
        %1734 = vrot.lane.b32.xlu0 %v1726, 10
        %v1735 = vpop.permute.xlu0 %1734
        %1739 = vst.msk [vmem:[#allocation3 + $0x30] sm:$0xff] %vm1273, %v1731
        %1740 = vst.msk [vmem:[#allocation3 + $0x40] sm:$0xff] %vm1273, %v1733
        %1741 = vst.msk [vmem:[#allocation3 + $0x50] sm:$0xff] %vm1273, %v1735
        %v1742 = vld [vmem:[#allocation2 + $0x29] sm:$0xff]
        %v1743 = vld [vmem:[#allocation2 + $0x31] sm:$0xff]
        %v1744 = vld [vmem:[#allocation2 + $0x39] sm:$0xff]
        %1748 = vrot.lane.b32.xlu0 %v1742, 20
        %v1749 = vpop.permute.xlu0 %1748
        %1750 = vrot.lane.b32.xlu0 %v1743, 20
        %v1751 = vpop.permute.xlu0 %1750
        %1752 = vrot.lane.b32.xlu0 %v1744, 20
        %v1753 = vpop.permute.xlu0 %1752
        %1757 = vst.msk [vmem:[#allocation3 + $0x30] sm:$0xff] %vm1292, %v1749
        %1758 = vst.msk [vmem:[#allocation3 + $0x40] sm:$0xff] %vm1292, %v1751
        %1759 = vst.msk [vmem:[#allocation3 + $0x50] sm:$0xff] %vm1292, %v1753
        %v1760 = vld [vmem:[#allocation2 + $0x2] sm:$0xff]
        %v1761 = vld [vmem:[#allocation2 + $0xa] sm:$0xff]
        %v1762 = vld [vmem:[#allocation2 + $0x12] sm:$0xff]
        %1766 = vrot.lane.b32.xlu0 %v1760, 30
        %v1767 = vpop.permute.xlu0 %1766
        %1768 = vrot.lane.b32.xlu0 %v1761, 30
        %v1769 = vpop.permute.xlu0 %1768
        %1770 = vrot.lane.b32.xlu0 %v1762, 30
        %v1771 = vpop.permute.xlu0 %1770
        %1775 = vst.msk [vmem:[#allocation3 + $0x30] sm:$0xff] %vm1311, %v1767
        %1776 = vst.msk [vmem:[#allocation3 + $0x40] sm:$0xff] %vm1311, %v1769
        %1777 = vst.msk [vmem:[#allocation3 + $0x50] sm:$0xff] %vm1311, %v1771
        %v1778 = vld [vmem:[#allocation2 + $0x2a] sm:$0xff]
        %v1779 = vld [vmem:[#allocation2 + $0x32] sm:$0xff]
        %v1780 = vld [vmem:[#allocation2 + $0x3a] sm:$0xff]
        %1784 = vrot.lane.b32.xlu0 %v1778, 40
        %v1785 = vpop.permute.xlu0 %1784
        %1786 = vrot.lane.b32.xlu0 %v1779, 40
        %v1787 = vpop.permute.xlu0 %1786
        %1788 = vrot.lane.b32.xlu0 %v1780, 40
        %v1789 = vpop.permute.xlu0 %1788
        %1793 = vst.msk [vmem:[#allocation3 + $0x30] sm:$0xff] %vm1330, %v1785
        %1794 = vst.msk [vmem:[#allocation3 + $0x40] sm:$0xff] %vm1330, %v1787
        %1795 = vst.msk [vmem:[#allocation3 + $0x50] sm:$0xff] %vm1330, %v1789
        %v1796 = vld [vmem:[#allocation2 + $0x78] sm:$0xff]
        %v1797 = vld [vmem:[#allocation2 + $0x80] sm:$0xff]
        %v1798 = vld [vmem:[#allocation2 + $0x88] sm:$0xff]
        %1802 = vrot.lane.b32.xlu0 %v1796, 50
        %v1803 = vpop.permute.xlu0 %1802
        %1804 = vrot.lane.b32.xlu0 %v1797, 50
        %v1805 = vpop.permute.xlu0 %1804
        %1806 = vrot.lane.b32.xlu0 %v1798, 50
        %v1807 = vpop.permute.xlu0 %1806
        %1811 = vst.msk [vmem:[#allocation3 + $0x30] sm:$0xff] %vm1349, %v1803
        %1812 = vst.msk [vmem:[#allocation3 + $0x40] sm:$0xff] %vm1349, %v1805
        %1813 = vst.msk [vmem:[#allocation3 + $0x50] sm:$0xff] %vm1349, %v1807
        %v1814 = vld [vmem:[#allocation2 + $0x51] sm:$0xff]
        %v1815 = vld [vmem:[#allocation2 + $0x59] sm:$0xff]
        %v1816 = vld [vmem:[#allocation2 + $0x61] sm:$0xff]
        %1820 = vrot.lane.b32.xlu0 %v1814, 60
        %v1821 = vpop.permute.xlu0 %1820
        %1822 = vrot.lane.b32.xlu0 %v1815, 60
        %v1823 = vpop.permute.xlu0 %1822
        %1824 = vrot.lane.b32.xlu0 %v1816, 60
        %v1825 = vpop.permute.xlu0 %1824
        %1829 = vst.msk [vmem:[#allocation3 + $0x30] sm:$0xff] %vm1368, %v1821
        %1830 = vst.msk [vmem:[#allocation3 + $0x40] sm:$0xff] %vm1368, %v1823
        %1831 = vst.msk [vmem:[#allocation3 + $0x50] sm:$0xff] %vm1368, %v1825
        %v1832 = vld [vmem:[#allocation2 + $0x79] sm:$0xff]
        %v1833 = vld [vmem:[#allocation2 + $0x81] sm:$0xff]
        %v1834 = vld [vmem:[#allocation2 + $0x89] sm:$0xff]
        %1838 = vrot.lane.b32.xlu0 %v1832, 70
        %v1839 = vpop.permute.xlu0 %1838
        %1840 = vrot.lane.b32.xlu0 %v1833, 70
        %v1841 = vpop.permute.xlu0 %1840
        %1842 = vrot.lane.b32.xlu0 %v1834, 70
        %v1843 = vpop.permute.xlu0 %1842
        %1847 = vst.msk [vmem:[#allocation3 + $0x30] sm:$0xff] %vm1387, %v1839
        %1848 = vst.msk [vmem:[#allocation3 + $0x40] sm:$0xff] %vm1387, %v1841
        %1849 = vst.msk [vmem:[#allocation3 + $0x50] sm:$0xff] %vm1387, %v1843
        %v1850 = vld [vmem:[#allocation2 + $0x52] sm:$0xff]
        %v1851 = vld [vmem:[#allocation2 + $0x5a] sm:$0xff]
        %v1852 = vld [vmem:[#allocation2 + $0x62] sm:$0xff]
        %1856 = vrot.lane.b32.xlu0 %v1850, 80
        %v1857 = vpop.permute.xlu0 %1856
        %1858 = vrot.lane.b32.xlu0 %v1851, 80
        %v1859 = vpop.permute.xlu0 %1858
        %1860 = vrot.lane.b32.xlu0 %v1852, 80
        %v1861 = vpop.permute.xlu0 %1860
        %1865 = vst.msk [vmem:[#allocation3 + $0x30] sm:$0xff] %vm1406, %v1857
        %1866 = vst.msk [vmem:[#allocation3 + $0x40] sm:$0xff] %vm1406, %v1859
        %1867 = vst.msk [vmem:[#allocation3 + $0x50] sm:$0xff] %vm1406, %v1861
        %v1868 = vld [vmem:[#allocation2 + $0x7a] sm:$0xff]
        %v1869 = vld [vmem:[#allocation2 + $0x82] sm:$0xff]
        %v1870 = vld [vmem:[#allocation2 + $0x8a] sm:$0xff]
        %1874 = vrot.lane.b32.xlu0 %v1868, 90
        %v1875 = vpop.permute.xlu0 %1874
        %1876 = vrot.lane.b32.xlu0 %v1869, 90
        %v1877 = vpop.permute.xlu0 %1876
        %1878 = vrot.lane.b32.xlu0 %v1870, 90
        %v1879 = vpop.permute.xlu0 %1878
        %1883 = vst.msk [vmem:[#allocation3 + $0x30] sm:$0xff] %vm1425, %v1875
        %1884 = vst.msk [vmem:[#allocation3 + $0x40] sm:$0xff] %vm1425, %v1877
        %1885 = vst.msk [vmem:[#allocation3 + $0x50] sm:$0xff] %vm1425, %v1879
        %v1886 = vld [vmem:[#allocation2 + $0x2e] sm:$0xff]
        %v1887 = vld [vmem:[#allocation2 + $0x36] sm:$0xff]
        %v1888 = vld [vmem:[#allocation2 + $0x3e] sm:$0xff]
        %1892 = vrot.lane.b32.xlu0 %v1886, 100
        %v1893 = vpop.permute.xlu0 %1892
        %1894 = vrot.lane.b32.xlu0 %v1887, 100
        %v1895 = vpop.permute.xlu0 %1894
        %1896 = vrot.lane.b32.xlu0 %v1888, 100
        %v1897 = vpop.permute.xlu0 %1896
        %1901 = vst.msk [vmem:[#allocation3 + $0x30] sm:$0xff] %vm1444, %v1893
        %1902 = vst.msk [vmem:[#allocation3 + $0x40] sm:$0xff] %vm1444, %v1895
        %1903 = vst.msk [vmem:[#allocation3 + $0x50] sm:$0xff] %vm1444, %v1897
        %v1904 = vld [vmem:[#allocation2 + $0x7] sm:$0xff]
        %v1905 = vld [vmem:[#allocation2 + $0xf] sm:$0xff]
        %v1906 = vld [vmem:[#allocation2 + $0x17] sm:$0xff]
        %1910 = vrot.lane.b32.xlu0 %v1904, 110
        %v1911 = vpop.permute.xlu0 %1910
        %1912 = vrot.lane.b32.xlu0 %v1905, 110
        %v1913 = vpop.permute.xlu0 %1912
        %1914 = vrot.lane.b32.xlu0 %v1906, 110
        %v1915 = vpop.permute.xlu0 %1914
        %1919 = vst.msk [vmem:[#allocation3 + $0x30] sm:$0xff] %vm1463, %v1911
        %1920 = vst.msk [vmem:[#allocation3 + $0x40] sm:$0xff] %vm1463, %v1913
        %1921 = vst.msk [vmem:[#allocation3 + $0x50] sm:$0xff] %vm1463, %v1915
        %v1922 = vld [vmem:[#allocation2 + $0x2f] sm:$0xff]
        %v1923 = vld [vmem:[#allocation2 + $0x37] sm:$0xff]
        %v1924 = vld [vmem:[#allocation2 + $0x3f] sm:$0xff]
        %1928 = vrot.lane.b32.xlu0 %v1922, 120
        %v1929 = vpop.permute.xlu0 %1928
        %1930 = vrot.lane.b32.xlu0 %v1923, 120
        %v1931 = vpop.permute.xlu0 %1930
        %1932 = vrot.lane.b32.xlu0 %v1924, 120
        %v1933 = vpop.permute.xlu0 %1932
        %1937 = vst.msk [vmem:[#allocation3 + $0x30] sm:$0xff] %vm1482, %v1929
        %1938 = vst.msk [vmem:[#allocation3 + $0x38] sm:$0xff] %vm1484, %v1929
        %1939 = vst.msk [vmem:[#allocation3 + $0x40] sm:$0xff] %vm1482, %v1931
        %1940 = vst.msk [vmem:[#allocation3 + $0x48] sm:$0xff] %vm1484, %v1931
        %1941 = vst.msk [vmem:[#allocation3 + $0x50] sm:$0xff] %vm1482, %v1933
        %1942 = vst.msk [vmem:[#allocation3 + $0x58] sm:$0xff] %vm1484, %v1933
        %v1943 = vld [vmem:[#allocation2 + $0x8] sm:$0xff]
        %v1944 = vld [vmem:[#allocation2 + $0x10] sm:$0xff]
        %v1945 = vld [vmem:[#allocation2 + $0x18] sm:$0xff]
        %1949 = vrot.lane.b32.xlu0 %v1943, 2
        %v1950 = vpop.permute.xlu0 %1949
        %1951 = vrot.lane.b32.xlu0 %v1944, 2
        %v1952 = vpop.permute.xlu0 %1951
        %1953 = vrot.lane.b32.xlu0 %v1945, 2
        %v1954 = vpop.permute.xlu0 %1953
        %1958 = vst.msk [vmem:[#allocation3 + $0x38] sm:$0xff] %vm1505, %v1950
        %1959 = vst.msk [vmem:[#allocation3 + $0x48] sm:$0xff] %vm1505, %v1952
        %1960 = vst.msk [vmem:[#allocation3 + $0x58] sm:$0xff] %vm1505, %v1954
        %v1961 = vld [vmem:[#allocation2 + $0x30] sm:$0xff]
        %v1962 = vld [vmem:[#allocation2 + $0x38] sm:$0xff]
        %v1963 = vld [vmem:[#allocation2 + $0x40] sm:$0xff]
        %1967 = vrot.lane.b32.xlu0 %v1961, 12
        %v1968 = vpop.permute.xlu0 %1967
        %1969 = vrot.lane.b32.xlu0 %v1962, 12
        %v1970 = vpop.permute.xlu0 %1969
        %1971 = vrot.lane.b32.xlu0 %v1963, 12
        %v1972 = vpop.permute.xlu0 %1971
        %1976 = vst.msk [vmem:[#allocation3 + $0x38] sm:$0xff] %vm1524, %v1968
        %1977 = vst.msk [vmem:[#allocation3 + $0x48] sm:$0xff] %vm1524, %v1970
        %1978 = vst.msk [vmem:[#allocation3 + $0x58] sm:$0xff] %vm1524, %v1972
        %v1979 = vld [vmem:[#allocation2 + $0x7e] sm:$0xff]
        %v1980 = vld [vmem:[#allocation2 + $0x86] sm:$0xff]
        %v1981 = vld [vmem:[#allocation2 + $0x8e] sm:$0xff]
        %1985 = vrot.lane.b32.xlu0 %v1979, 22
        %v1986 = vpop.permute.xlu0 %1985
        %1987 = vrot.lane.b32.xlu0 %v1980, 22
        %v1988 = vpop.permute.xlu0 %1987
        %1989 = vrot.lane.b32.xlu0 %v1981, 22
        %v1990 = vpop.permute.xlu0 %1989
        %1994 = vst.msk [vmem:[#allocation3 + $0x38] sm:$0xff] %vm1543, %v1986
        %1995 = vst.msk [vmem:[#allocation3 + $0x48] sm:$0xff] %vm1543, %v1988
        %1996 = vst.msk [vmem:[#allocation3 + $0x58] sm:$0xff] %vm1543, %v1990
        %v1997 = vld [vmem:[#allocation2 + $0x57] sm:$0xff]
        %v1998 = vld [vmem:[#allocation2 + $0x5f] sm:$0xff]
        %v1999 = vld [vmem:[#allocation2 + $0x67] sm:$0xff]
        %2003 = vrot.lane.b32.xlu0 %v1997, 32
        %v2004 = vpop.permute.xlu0 %2003
        %2005 = vrot.lane.b32.xlu0 %v1998, 32
        %v2006 = vpop.permute.xlu0 %2005
        %2007 = vrot.lane.b32.xlu0 %v1999, 32
        %v2008 = vpop.permute.xlu0 %2007
        %2012 = vst.msk [vmem:[#allocation3 + $0x38] sm:$0xff] %vm1562, %v2004
        %2013 = vst.msk [vmem:[#allocation3 + $0x48] sm:$0xff] %vm1562, %v2006
        %2014 = vst.msk [vmem:[#allocation3 + $0x58] sm:$0xff] %vm1562, %v2008
        %v2015 = vld [vmem:[#allocation2 + $0x7f] sm:$0xff]
        %v2016 = vld [vmem:[#allocation2 + $0x87] sm:$0xff]
        %v2017 = vld [vmem:[#allocation2 + $0x8f] sm:$0xff]
        %2021 = vrot.lane.b32.xlu0 %v2015, 42
        %v2022 = vpop.permute.xlu0 %2021
        %2023 = vrot.lane.b32.xlu0 %v2016, 42
        %v2024 = vpop.permute.xlu0 %2023
        %2025 = vrot.lane.b32.xlu0 %v2017, 42
        %v2026 = vpop.permute.xlu0 %2025
        %2030 = vst.msk [vmem:[#allocation3 + $0x38] sm:$0xff] %vm1581, %v2022
        %2031 = vst.msk [vmem:[#allocation3 + $0x48] sm:$0xff] %vm1581, %v2024
        %2032 = vst.msk [vmem:[#allocation3 + $0x58] sm:$0xff] %vm1581, %v2026
        %v2033 = vld [vmem:[#allocation2 + $0x58] sm:$0xff]
        %v2034 = vld [vmem:[#allocation2 + $0x60] sm:$0xff]
        %v2035 = vld [vmem:[#allocation2 + $0x68] sm:$0xff]
        %2039 = vrot.lane.b32.xlu0 %v2033, 52
        %v2040 = vpop.permute.xlu0 %2039
        %2041 = vrot.lane.b32.xlu0 %v2034, 52
        %v2042 = vpop.permute.xlu0 %2041
        %2043 = vrot.lane.b32.xlu0 %v2035, 52
        %v2044 = vpop.permute.xlu0 %2043
        %2048 = vst.msk [vmem:[#allocation3 + $0x38] sm:$0xff] %vm1600, %v2040
        %2049 = vst.msk [vmem:[#allocation3 + $0x48] sm:$0xff] %vm1600, %v2042
        %2050 = vst.msk [vmem:[#allocation3 + $0x58] sm:$0xff] %vm1600, %v2044
        %v2051 = vld [vmem:[#allocation2 + $0x80] sm:$0xff]
        %v2052 = vld [vmem:[#allocation2 + $0x88] sm:$0xff]
        %v2053 = vld [vmem:[#allocation2 + $0x90] sm:$0xff]
        %2057 = vrot.lane.b32.xlu0 %v2051, 62
        %v2058 = vpop.permute.xlu0 %2057
        %2059 = vrot.lane.b32.xlu0 %v2052, 62
        %v2060 = vpop.permute.xlu0 %2059
        %2061 = vrot.lane.b32.xlu0 %v2053, 62
        %v2062 = vpop.permute.xlu0 %2061
        %2066 = vst.msk [vmem:[#allocation3 + $0x38] sm:$0xff] %vm1619, %v2058
        %2067 = vst.msk [vmem:[#allocation3 + $0x48] sm:$0xff] %vm1619, %v2060
        %2068 = vst.msk [vmem:[#allocation3 + $0x58] sm:$0xff] %vm1619, %v2062
        %v2069 = vld [vmem:[#allocation2 + $0x34] sm:$0xff]
        %v2070 = vld [vmem:[#allocation2 + $0x3c] sm:$0xff]
        %v2071 = vld [vmem:[#allocation2 + $0x44] sm:$0xff]
        %2075 = vrot.lane.b32.xlu0 %v2069, 72
        %v2076 = vpop.permute.xlu0 %2075
        %2077 = vrot.lane.b32.xlu0 %v2070, 72
        %v2078 = vpop.permute.xlu0 %2077
        %2079 = vrot.lane.b32.xlu0 %v2071, 72
        %v2080 = vpop.permute.xlu0 %2079
        %2084 = vst.msk [vmem:[#allocation3 + $0x38] sm:$0xff] %vm1638, %v2076
        %2085 = vst.msk [vmem:[#allocation3 + $0x48] sm:$0xff] %vm1638, %v2078
        %2086 = vst.msk [vmem:[#allocation3 + $0x58] sm:$0xff] %vm1638, %v2080
        %v2087 = vld [vmem:[#allocation2 + $0xd] sm:$0xff]
        %v2088 = vld [vmem:[#allocation2 + $0x15] sm:$0xff]
        %v2089 = vld [vmem:[#allocation2 + $0x1d] sm:$0xff]
        %2093 = vrot.lane.b32.xlu0 %v2087, 82
        %v2094 = vpop.permute.xlu0 %2093
        %2095 = vrot.lane.b32.xlu0 %v2088, 82
        %v2096 = vpop.permute.xlu0 %2095
        %2097 = vrot.lane.b32.xlu0 %v2089, 82
        %v2098 = vpop.permute.xlu0 %2097
        %2102 = vst.msk [vmem:[#allocation3 + $0x38] sm:$0xff] %vm1657, %v2094
        %2103 = vst.msk [vmem:[#allocation3 + $0x48] sm:$0xff] %vm1657, %v2096
        %2104 = vst.msk [vmem:[#allocation3 + $0x58] sm:$0xff] %vm1657, %v2098
        %v2105 = vld [vmem:[#allocation2 + $0x35] sm:$0xff]
        %v2106 = vld [vmem:[#allocation2 + $0x3d] sm:$0xff]
        %v2107 = vld [vmem:[#allocation2 + $0x45] sm:$0xff]
        %2111 = vrot.lane.b32.xlu0 %v2105, 92
        %v2112 = vpop.permute.xlu0 %2111
        %2113 = vrot.lane.b32.xlu0 %v2106, 92
        %v2114 = vpop.permute.xlu0 %2113
        %2115 = vrot.lane.b32.xlu0 %v2107, 92
        %v2116 = vpop.permute.xlu0 %2115
        %2120 = vst.msk [vmem:[#allocation3 + $0x38] sm:$0xff] %vm1676, %v2112
        %2121 = vst.msk [vmem:[#allocation3 + $0x48] sm:$0xff] %vm1676, %v2114
        %2122 = vst.msk [vmem:[#allocation3 + $0x58] sm:$0xff] %vm1676, %v2116
        %v2123 = vld [vmem:[#allocation2 + $0xe] sm:$0xff]
        %v2124 = vld [vmem:[#allocation2 + $0x16] sm:$0xff]
        %v2125 = vld [vmem:[#allocation2 + $0x1e] sm:$0xff]
        %2129 = vrot.lane.b32.xlu0 %v2123, 102
        %v2130 = vpop.permute.xlu0 %2129
        %2131 = vrot.lane.b32.xlu0 %v2124, 102
        %v2132 = vpop.permute.xlu0 %2131
        %2133 = vrot.lane.b32.xlu0 %v2125, 102
        %v2134 = vpop.permute.xlu0 %2133
        %2138 = vst.msk [vmem:[#allocation3 + $0x38] sm:$0xff] %vm1695, %v2130
        %2139 = vst.msk [vmem:[#allocation3 + $0x48] sm:$0xff] %vm1695, %v2132
        %2140 = vst.msk [vmem:[#allocation3 + $0x58] sm:$0xff] %vm1695, %v2134
        %v2141 = vld [vmem:[#allocation2 + $0x36] sm:$0xff]
        %v2142 = vld [vmem:[#allocation2 + $0x3e] sm:$0xff]
        %v2143 = vld [vmem:[#allocation2 + $0x46] sm:$0xff]
        %2147 = vrot.lane.b32.xlu0 %v2141, 112
        %v2148 = vpop.permute.xlu0 %2147
        %2149 = vrot.lane.b32.xlu0 %v2142, 112
        %v2150 = vpop.permute.xlu0 %2149
        %2151 = vrot.lane.b32.xlu0 %v2143, 112
        %v2152 = vpop.permute.xlu0 %2151
        %2156 = vst.msk [vmem:[#allocation3 + $0x38] sm:$0xff] %vm1714, %v2148
        %2157 = vst.msk [vmem:[#allocation3 + $0x48] sm:$0xff] %vm1714, %v2150
        %2158 = vst.msk [vmem:[#allocation3 + $0x58] sm:$0xff] %vm1714, %v2152
        %v2159 = vld [vmem:[#allocation2 + $0x50] sm:$0xff]
        %v2160 = vld [vmem:[#allocation2 + $0x58] sm:$0xff]
        %v2161 = vld [vmem:[#allocation2 + $0x60] sm:$0xff]
        %2162 = vst.msk [vmem:[#allocation3 + $0x60] sm:$0xff] %vm1231, %v2159
        %2163 = vst.msk [vmem:[#allocation3 + $0x70] sm:$0xff] %vm1231, %v2160
        %2164 = vst.msk [vmem:[#allocation3 + $0x80] sm:$0xff] %vm1231, %v2161
        %v2165 = vld [vmem:[#allocation2 + $0x78] sm:$0xff]
        %v2166 = vld [vmem:[#allocation2 + $0x80] sm:$0xff]
        %v2167 = vld [vmem:[#allocation2 + $0x88] sm:$0xff]
        %2171 = vrot.lane.b32.xlu0 %v2165, 10
        %v2172 = vpop.permute.xlu0 %2171
        %2173 = vrot.lane.b32.xlu0 %v2166, 10
        %v2174 = vpop.permute.xlu0 %2173
        %2175 = vrot.lane.b32.xlu0 %v2167, 10
        %v2176 = vpop.permute.xlu0 %2175
        %2180 = vst.msk [vmem:[#allocation3 + $0x60] sm:$0xff] %vm1273, %v2172
        %2181 = vst.msk [vmem:[#allocation3 + $0x70] sm:$0xff] %vm1273, %v2174
        %2182 = vst.msk [vmem:[#allocation3 + $0x80] sm:$0xff] %vm1273, %v2176
        %v2183 = vld [vmem:[#allocation2 + $0x51] sm:$0xff]
        %v2184 = vld [vmem:[#allocation2 + $0x59] sm:$0xff]
        %v2185 = vld [vmem:[#allocation2 + $0x61] sm:$0xff]
        %2189 = vrot.lane.b32.xlu0 %v2183, 20
        %v2190 = vpop.permute.xlu0 %2189
        %2191 = vrot.lane.b32.xlu0 %v2184, 20
        %v2192 = vpop.permute.xlu0 %2191
        %2193 = vrot.lane.b32.xlu0 %v2185, 20
        %v2194 = vpop.permute.xlu0 %2193
        %2198 = vst.msk [vmem:[#allocation3 + $0x60] sm:$0xff] %vm1292, %v2190
        %2199 = vst.msk [vmem:[#allocation3 + $0x70] sm:$0xff] %vm1292, %v2192
        %2200 = vst.msk [vmem:[#allocation3 + $0x80] sm:$0xff] %vm1292, %v2194
        %v2201 = vld [vmem:[#allocation2 + $0x79] sm:$0xff]
        %v2202 = vld [vmem:[#allocation2 + $0x81] sm:$0xff]
        %v2203 = vld [vmem:[#allocation2 + $0x89] sm:$0xff]
        %2207 = vrot.lane.b32.xlu0 %v2201, 30
        %v2208 = vpop.permute.xlu0 %2207
        %2209 = vrot.lane.b32.xlu0 %v2202, 30
        %v2210 = vpop.permute.xlu0 %2209
        %2211 = vrot.lane.b32.xlu0 %v2203, 30
        %v2212 = vpop.permute.xlu0 %2211
        %2216 = vst.msk [vmem:[#allocation3 + $0x60] sm:$0xff] %vm1311, %v2208
        %2217 = vst.msk [vmem:[#allocation3 + $0x70] sm:$0xff] %vm1311, %v2210
        %2218 = vst.msk [vmem:[#allocation3 + $0x80] sm:$0xff] %vm1311, %v2212
        %v2219 = vld [vmem:[#allocation2 + $0x52] sm:$0xff]
        %v2220 = vld [vmem:[#allocation2 + $0x5a] sm:$0xff]
        %v2221 = vld [vmem:[#allocation2 + $0x62] sm:$0xff]
        %2225 = vrot.lane.b32.xlu0 %v2219, 40
        %v2226 = vpop.permute.xlu0 %2225
        %2227 = vrot.lane.b32.xlu0 %v2220, 40
        %v2228 = vpop.permute.xlu0 %2227
        %2229 = vrot.lane.b32.xlu0 %v2221, 40
        %v2230 = vpop.permute.xlu0 %2229
        %2234 = vst.msk [vmem:[#allocation3 + $0x60] sm:$0xff] %vm1330, %v2226
        %2235 = vst.msk [vmem:[#allocation3 + $0x70] sm:$0xff] %vm1330, %v2228
        %2236 = vst.msk [vmem:[#allocation3 + $0x80] sm:$0xff] %vm1330, %v2230
        %v2237 = vld [vmem:[#allocation2 + $0x6] sm:$0xff]
        %v2238 = vld [vmem:[#allocation2 + $0xe] sm:$0xff]
        %v2239 = vld [vmem:[#allocation2 + $0x16] sm:$0xff]
        %2243 = vrot.lane.b32.xlu0 %v2237, 50
        %v2244 = vpop.permute.xlu0 %2243
        %2245 = vrot.lane.b32.xlu0 %v2238, 50
        %v2246 = vpop.permute.xlu0 %2245
        %2247 = vrot.lane.b32.xlu0 %v2239, 50
        %v2248 = vpop.permute.xlu0 %2247
        %2252 = vst.msk [vmem:[#allocation3 + $0x60] sm:$0xff] %vm1349, %v2244
        %2253 = vst.msk [vmem:[#allocation3 + $0x70] sm:$0xff] %vm1349, %v2246
        %2254 = vst.msk [vmem:[#allocation3 + $0x80] sm:$0xff] %vm1349, %v2248
        %v2255 = vld [vmem:[#allocation2 + $0x2e] sm:$0xff]
        %v2256 = vld [vmem:[#allocation2 + $0x36] sm:$0xff]
        %v2257 = vld [vmem:[#allocation2 + $0x3e] sm:$0xff]
        %2261 = vrot.lane.b32.xlu0 %v2255, 60
        %v2262 = vpop.permute.xlu0 %2261
        %2263 = vrot.lane.b32.xlu0 %v2256, 60
        %v2264 = vpop.permute.xlu0 %2263
        %2265 = vrot.lane.b32.xlu0 %v2257, 60
        %v2266 = vpop.permute.xlu0 %2265
        %2270 = vst.msk [vmem:[#allocation3 + $0x60] sm:$0xff] %vm1368, %v2262
        %2271 = vst.msk [vmem:[#allocation3 + $0x70] sm:$0xff] %vm1368, %v2264
        %2272 = vst.msk [vmem:[#allocation3 + $0x80] sm:$0xff] %vm1368, %v2266
        %v2273 = vld [vmem:[#allocation2 + $0x7] sm:$0xff]
        %v2274 = vld [vmem:[#allocation2 + $0xf] sm:$0xff]
        %v2275 = vld [vmem:[#allocation2 + $0x17] sm:$0xff]
        %2279 = vrot.lane.b32.xlu0 %v2273, 70
        %v2280 = vpop.permute.xlu0 %2279
        %2281 = vrot.lane.b32.xlu0 %v2274, 70
        %v2282 = vpop.permute.xlu0 %2281
        %2283 = vrot.lane.b32.xlu0 %v2275, 70
        %v2284 = vpop.permute.xlu0 %2283
        %2288 = vst.msk [vmem:[#allocation3 + $0x60] sm:$0xff] %vm1387, %v2280
        %2289 = vst.msk [vmem:[#allocation3 + $0x70] sm:$0xff] %vm1387, %v2282
        %2290 = vst.msk [vmem:[#allocation3 + $0x80] sm:$0xff] %vm1387, %v2284
        %v2291 = vld [vmem:[#allocation2 + $0x2f] sm:$0xff]
        %v2292 = vld [vmem:[#allocation2 + $0x37] sm:$0xff]
        %v2293 = vld [vmem:[#allocation2 + $0x3f] sm:$0xff]
        %2297 = vrot.lane.b32.xlu0 %v2291, 80
        %v2298 = vpop.permute.xlu0 %2297
        %2299 = vrot.lane.b32.xlu0 %v2292, 80
        %v2300 = vpop.permute.xlu0 %2299
        %2301 = vrot.lane.b32.xlu0 %v2293, 80
        %v2302 = vpop.permute.xlu0 %2301
        %2306 = vst.msk [vmem:[#allocation3 + $0x60] sm:$0xff] %vm1406, %v2298
        %2307 = vst.msk [vmem:[#allocation3 + $0x70] sm:$0xff] %vm1406, %v2300
        %2308 = vst.msk [vmem:[#allocation3 + $0x80] sm:$0xff] %vm1406, %v2302
        %v2309 = vld [vmem:[#allocation2 + $0x8] sm:$0xff]
        %v2310 = vld [vmem:[#allocation2 + $0x10] sm:$0xff]
        %v2311 = vld [vmem:[#allocation2 + $0x18] sm:$0xff]
        %2315 = vrot.lane.b32.xlu0 %v2309, 90
        %v2316 = vpop.permute.xlu0 %2315
        %2317 = vrot.lane.b32.xlu0 %v2310, 90
        %v2318 = vpop.permute.xlu0 %2317
        %2319 = vrot.lane.b32.xlu0 %v2311, 90
        %v2320 = vpop.permute.xlu0 %2319
        %2324 = vst.msk [vmem:[#allocation3 + $0x60] sm:$0xff] %vm1425, %v2316
        %2325 = vst.msk [vmem:[#allocation3 + $0x70] sm:$0xff] %vm1425, %v2318
        %2326 = vst.msk [vmem:[#allocation3 + $0x80] sm:$0xff] %vm1425, %v2320
        %v2327 = vld [vmem:[#allocation2 + $0x56] sm:$0xff]
        %v2328 = vld [vmem:[#allocation2 + $0x5e] sm:$0xff]
        %v2329 = vld [vmem:[#allocation2 + $0x66] sm:$0xff]
        %2333 = vrot.lane.b32.xlu0 %v2327, 100
        %v2334 = vpop.permute.xlu0 %2333
        %2335 = vrot.lane.b32.xlu0 %v2328, 100
        %v2336 = vpop.permute.xlu0 %2335
        %2337 = vrot.lane.b32.xlu0 %v2329, 100
        %v2338 = vpop.permute.xlu0 %2337
        %2342 = vst.msk [vmem:[#allocation3 + $0x60] sm:$0xff] %vm1444, %v2334
        %2343 = vst.msk [vmem:[#allocation3 + $0x70] sm:$0xff] %vm1444, %v2336
        %2344 = vst.msk [vmem:[#allocation3 + $0x80] sm:$0xff] %vm1444, %v2338
        %v2345 = vld [vmem:[#allocation2 + $0x7e] sm:$0xff]
        %v2346 = vld [vmem:[#allocation2 + $0x86] sm:$0xff]
        %v2347 = vld [vmem:[#allocation2 + $0x8e] sm:$0xff]
        %2351 = vrot.lane.b32.xlu0 %v2345, 110
        %v2352 = vpop.permute.xlu0 %2351
        %2353 = vrot.lane.b32.xlu0 %v2346, 110
        %v2354 = vpop.permute.xlu0 %2353
        %2355 = vrot.lane.b32.xlu0 %v2347, 110
        %v2356 = vpop.permute.xlu0 %2355
        %2360 = vst.msk [vmem:[#allocation3 + $0x60] sm:$0xff] %vm1463, %v2352
        %2361 = vst.msk [vmem:[#allocation3 + $0x70] sm:$0xff] %vm1463, %v2354
        %2362 = vst.msk [vmem:[#allocation3 + $0x80] sm:$0xff] %vm1463, %v2356
        %v2363 = vld [vmem:[#allocation2 + $0x57] sm:$0xff]
        %v2364 = vld [vmem:[#allocation2 + $0x5f] sm:$0xff]
        %v2365 = vld [vmem:[#allocation2 + $0x67] sm:$0xff]
        %2369 = vrot.lane.b32.xlu0 %v2363, 120
        %v2370 = vpop.permute.xlu0 %2369
        %2371 = vrot.lane.b32.xlu0 %v2364, 120
        %v2372 = vpop.permute.xlu0 %2371
        %2373 = vrot.lane.b32.xlu0 %v2365, 120
        %v2374 = vpop.permute.xlu0 %2373
        %2378 = vst.msk [vmem:[#allocation3 + $0x60] sm:$0xff] %vm1482, %v2370
        %2379 = vst.msk [vmem:[#allocation3 + $0x68] sm:$0xff] %vm1484, %v2370
        %2380 = vst.msk [vmem:[#allocation3 + $0x70] sm:$0xff] %vm1482, %v2372
        %2381 = vst.msk [vmem:[#allocation3 + $0x78] sm:$0xff] %vm1484, %v2372
        %2382 = vst.msk [vmem:[#allocation3 + $0x80] sm:$0xff] %vm1482, %v2374
        %2383 = vst.msk [vmem:[#allocation3 + $0x88] sm:$0xff] %vm1484, %v2374
        %v2384 = vld [vmem:[#allocation2 + $0x7f] sm:$0xff]
        %v2385 = vld [vmem:[#allocation2 + $0x87] sm:$0xff]
        %v2386 = vld [vmem:[#allocation2 + $0x8f] sm:$0xff]
        %2390 = vrot.lane.b32.xlu0 %v2384, 2
        %v2391 = vpop.permute.xlu0 %2390
        %2392 = vrot.lane.b32.xlu0 %v2385, 2
        %v2393 = vpop.permute.xlu0 %2392
        %2394 = vrot.lane.b32.xlu0 %v2386, 2
        %v2395 = vpop.permute.xlu0 %2394
        %2399 = vst.msk [vmem:[#allocation3 + $0x68] sm:$0xff] %vm1505, %v2391
        %2400 = vst.msk [vmem:[#allocation3 + $0x78] sm:$0xff] %vm1505, %v2393
        %2401 = vst.msk [vmem:[#allocation3 + $0x88] sm:$0xff] %vm1505, %v2395
        %v2402 = vld [vmem:[#allocation2 + $0x58] sm:$0xff]
        %v2403 = vld [vmem:[#allocation2 + $0x60] sm:$0xff]
        %v2404 = vld [vmem:[#allocation2 + $0x68] sm:$0xff]
        %2408 = vrot.lane.b32.xlu0 %v2402, 12
        %v2409 = vpop.permute.xlu0 %2408
        %2410 = vrot.lane.b32.xlu0 %v2403, 12
        %v2411 = vpop.permute.xlu0 %2410
        %2412 = vrot.lane.b32.xlu0 %v2404, 12
        %v2413 = vpop.permute.xlu0 %2412
        %2417 = vst.msk [vmem:[#allocation3 + $0x68] sm:$0xff] %vm1524, %v2409
        %2418 = vst.msk [vmem:[#allocation3 + $0x78] sm:$0xff] %vm1524, %v2411
        %2419 = vst.msk [vmem:[#allocation3 + $0x88] sm:$0xff] %vm1524, %v2413
        %v2420 = vld [vmem:[#allocation2 + $0xc] sm:$0xff]
        %v2421 = vld [vmem:[#allocation2 + $0x14] sm:$0xff]
        %v2422 = vld [vmem:[#allocation2 + $0x1c] sm:$0xff]
        %2426 = vrot.lane.b32.xlu0 %v2420, 22
        %v2427 = vpop.permute.xlu0 %2426
        %2428 = vrot.lane.b32.xlu0 %v2421, 22
        %v2429 = vpop.permute.xlu0 %2428
        %2430 = vrot.lane.b32.xlu0 %v2422, 22
        %v2431 = vpop.permute.xlu0 %2430
        %2435 = vst.msk [vmem:[#allocation3 + $0x68] sm:$0xff] %vm1543, %v2427
        %2436 = vst.msk [vmem:[#allocation3 + $0x78] sm:$0xff] %vm1543, %v2429
        %2437 = vst.msk [vmem:[#allocation3 + $0x88] sm:$0xff] %vm1543, %v2431
        %v2438 = vld [vmem:[#allocation2 + $0x34] sm:$0xff]
        %v2439 = vld [vmem:[#allocation2 + $0x3c] sm:$0xff]
        %v2440 = vld [vmem:[#allocation2 + $0x44] sm:$0xff]
        %2444 = vrot.lane.b32.xlu0 %v2438, 32
        %v2445 = vpop.permute.xlu0 %2444
        %2446 = vrot.lane.b32.xlu0 %v2439, 32
        %v2447 = vpop.permute.xlu0 %2446
        %2448 = vrot.lane.b32.xlu0 %v2440, 32
        %v2449 = vpop.permute.xlu0 %2448
        %2453 = vst.msk [vmem:[#allocation3 + $0x68] sm:$0xff] %vm1562, %v2445
        %2454 = vst.msk [vmem:[#allocation3 + $0x78] sm:$0xff] %vm1562, %v2447
        %2455 = vst.msk [vmem:[#allocation3 + $0x88] sm:$0xff] %vm1562, %v2449
        %v2456 = vld [vmem:[#allocation2 + $0xd] sm:$0xff]
        %v2457 = vld [vmem:[#allocation2 + $0x15] sm:$0xff]
        %v2458 = vld [vmem:[#allocation2 + $0x1d] sm:$0xff]
        %2462 = vrot.lane.b32.xlu0 %v2456, 42
        %v2463 = vpop.permute.xlu0 %2462
        %2464 = vrot.lane.b32.xlu0 %v2457, 42
        %v2465 = vpop.permute.xlu0 %2464
        %2466 = vrot.lane.b32.xlu0 %v2458, 42
        %v2467 = vpop.permute.xlu0 %2466
        %2471 = vst.msk [vmem:[#allocation3 + $0x68] sm:$0xff] %vm1581, %v2463
        %2472 = vst.msk [vmem:[#allocation3 + $0x78] sm:$0xff] %vm1581, %v2465
        %2473 = vst.msk [vmem:[#allocation3 + $0x88] sm:$0xff] %vm1581, %v2467
        %v2474 = vld [vmem:[#allocation2 + $0x35] sm:$0xff]
        %v2475 = vld [vmem:[#allocation2 + $0x3d] sm:$0xff]
        %v2476 = vld [vmem:[#allocation2 + $0x45] sm:$0xff]
        %2480 = vrot.lane.b32.xlu0 %v2474, 52
        %v2481 = vpop.permute.xlu0 %2480
        %2482 = vrot.lane.b32.xlu0 %v2475, 52
        %v2483 = vpop.permute.xlu0 %2482
        %2484 = vrot.lane.b32.xlu0 %v2476, 52
        %v2485 = vpop.permute.xlu0 %2484
        %2489 = vst.msk [vmem:[#allocation3 + $0x68] sm:$0xff] %vm1600, %v2481
        %2490 = vst.msk [vmem:[#allocation3 + $0x78] sm:$0xff] %vm1600, %v2483
        %2491 = vst.msk [vmem:[#allocation3 + $0x88] sm:$0xff] %vm1600, %v2485
        %v2492 = vld [vmem:[#allocation2 + $0xe] sm:$0xff]
        %v2493 = vld [vmem:[#allocation2 + $0x16] sm:$0xff]
        %v2494 = vld [vmem:[#allocation2 + $0x1e] sm:$0xff]
        %2498 = vrot.lane.b32.xlu0 %v2492, 62
        %v2499 = vpop.permute.xlu0 %2498
        %2500 = vrot.lane.b32.xlu0 %v2493, 62
        %v2501 = vpop.permute.xlu0 %2500
        %2502 = vrot.lane.b32.xlu0 %v2494, 62
        %v2503 = vpop.permute.xlu0 %2502
        %2507 = vst.msk [vmem:[#allocation3 + $0x68] sm:$0xff] %vm1619, %v2499
        %2508 = vst.msk [vmem:[#allocation3 + $0x78] sm:$0xff] %vm1619, %v2501
        %2509 = vst.msk [vmem:[#allocation3 + $0x88] sm:$0xff] %vm1619, %v2503
        %v2510 = vld [vmem:[#allocation2 + $0x5c] sm:$0xff]
        %v2511 = vld [vmem:[#allocation2 + $0x64] sm:$0xff]
        %v2512 = vld [vmem:[#allocation2 + $0x6c] sm:$0xff]
        %2516 = vrot.lane.b32.xlu0 %v2510, 72
        %v2517 = vpop.permute.xlu0 %2516
        %2518 = vrot.lane.b32.xlu0 %v2511, 72
        %v2519 = vpop.permute.xlu0 %2518
        %2520 = vrot.lane.b32.xlu0 %v2512, 72
        %v2521 = vpop.permute.xlu0 %2520
        %2525 = vst.msk [vmem:[#allocation3 + $0x68] sm:$0xff] %vm1638, %v2517
        %2526 = vst.msk [vmem:[#allocation3 + $0x78] sm:$0xff] %vm1638, %v2519
        %2527 = vst.msk [vmem:[#allocation3 + $0x88] sm:$0xff] %vm1638, %v2521
        %v2528 = vld [vmem:[#allocation2 + $0x84] sm:$0xff]
        %v2529 = vld [vmem:[#allocation2 + $0x8c] sm:$0xff]
        %v2530 = vld [vmem:[#allocation2 + $0x94] sm:$0xff]
        %2534 = vrot.lane.b32.xlu0 %v2528, 82
        %v2535 = vpop.permute.xlu0 %2534
        %2536 = vrot.lane.b32.xlu0 %v2529, 82
        %v2537 = vpop.permute.xlu0 %2536
        %2538 = vrot.lane.b32.xlu0 %v2530, 82
        %v2539 = vpop.permute.xlu0 %2538
        %2543 = vst.msk [vmem:[#allocation3 + $0x68] sm:$0xff] %vm1657, %v2535
        %2544 = vst.msk [vmem:[#allocation3 + $0x78] sm:$0xff] %vm1657, %v2537
        %2545 = vst.msk [vmem:[#allocation3 + $0x88] sm:$0xff] %vm1657, %v2539
        %v2546 = vld [vmem:[#allocation2 + $0x5d] sm:$0xff]
        %v2547 = vld [vmem:[#allocation2 + $0x65] sm:$0xff]
        %v2548 = vld [vmem:[#allocation2 + $0x6d] sm:$0xff]
        %2552 = vrot.lane.b32.xlu0 %v2546, 92
        %v2553 = vpop.permute.xlu0 %2552
        %2554 = vrot.lane.b32.xlu0 %v2547, 92
        %v2555 = vpop.permute.xlu0 %2554
        %2556 = vrot.lane.b32.xlu0 %v2548, 92
        %v2557 = vpop.permute.xlu0 %2556
        %2561 = vst.msk [vmem:[#allocation3 + $0x68] sm:$0xff] %vm1676, %v2553
        %2562 = vst.msk [vmem:[#allocation3 + $0x78] sm:$0xff] %vm1676, %v2555
        %2563 = vst.msk [vmem:[#allocation3 + $0x88] sm:$0xff] %vm1676, %v2557
        %v2564 = vld [vmem:[#allocation2 + $0x85] sm:$0xff]
        %v2565 = vld [vmem:[#allocation2 + $0x8d] sm:$0xff]
        %v2566 = vld [vmem:[#allocation2 + $0x95] sm:$0xff]
        %2570 = vrot.lane.b32.xlu0 %v2564, 102
        %v2571 = vpop.permute.xlu0 %2570
        %2572 = vrot.lane.b32.xlu0 %v2565, 102
        %v2573 = vpop.permute.xlu0 %2572
        %2574 = vrot.lane.b32.xlu0 %v2566, 102
        %v2575 = vpop.permute.xlu0 %2574
        %2579 = vst.msk [vmem:[#allocation3 + $0x68] sm:$0xff] %vm1695, %v2571
        %2580 = vst.msk [vmem:[#allocation3 + $0x78] sm:$0xff] %vm1695, %v2573
        %2581 = vst.msk [vmem:[#allocation3 + $0x88] sm:$0xff] %vm1695, %v2575
        %v2582 = vld [vmem:[#allocation2 + $0x5e] sm:$0xff]
        %v2583 = vld [vmem:[#allocation2 + $0x66] sm:$0xff]
        %v2584 = vld [vmem:[#allocation2 + $0x6e] sm:$0xff]
        %2588 = vrot.lane.b32.xlu0 %v2582, 112
        %v2589 = vpop.permute.xlu0 %2588
        %2590 = vrot.lane.b32.xlu0 %v2583, 112
        %v2591 = vpop.permute.xlu0 %2590
        %2592 = vrot.lane.b32.xlu0 %v2584, 112
        %v2593 = vpop.permute.xlu0 %2592
        %2597 = vst.msk [vmem:[#allocation3 + $0x68] sm:$0xff] %vm1714, %v2589
        %2598 = vst.msk [vmem:[#allocation3 + $0x78] sm:$0xff] %vm1714, %v2591
        %2599 = vst.msk [vmem:[#allocation3 + $0x88] sm:$0xff] %vm1714, %v2593
        %v2600 = vld [vmem:[#allocation2 + $0x78] sm:$0xff]
        %v2601 = vld [vmem:[#allocation2 + $0x80] sm:$0xff]
        %v2602 = vld [vmem:[#allocation2 + $0x88] sm:$0xff]
        %2603 = vst.msk [vmem:[#allocation3 + $0x90] sm:$0xff] %vm1231, %v2600
        %2604 = vst.msk [vmem:[#allocation3 + $0xa0] sm:$0xff] %vm1231, %v2601
        %2605 = vst.msk [vmem:[#allocation3 + $0xb0] sm:$0xff] %vm1231, %v2602
        %v2606 = vld [vmem:[#allocation2 + $0x51] sm:$0xff]
        %v2607 = vld [vmem:[#allocation2 + $0x59] sm:$0xff]
        %v2608 = vld [vmem:[#allocation2 + $0x61] sm:$0xff]
        %2612 = vrot.lane.b32.xlu0 %v2606, 10
        %v2613 = vpop.permute.xlu0 %2612
        %2614 = vrot.lane.b32.xlu0 %v2607, 10
        %v2615 = vpop.permute.xlu0 %2614
        %2616 = vrot.lane.b32.xlu0 %v2608, 10
        %v2617 = vpop.permute.xlu0 %2616
        %2621 = vst.msk [vmem:[#allocation3 + $0x90] sm:$0xff] %vm1273, %v2613
        %2622 = vst.msk [vmem:[#allocation3 + $0xa0] sm:$0xff] %vm1273, %v2615
        %2623 = vst.msk [vmem:[#allocation3 + $0xb0] sm:$0xff] %vm1273, %v2617
        %v2624 = vld [vmem:[#allocation2 + $0x79] sm:$0xff]
        %v2625 = vld [vmem:[#allocation2 + $0x81] sm:$0xff]
        %v2626 = vld [vmem:[#allocation2 + $0x89] sm:$0xff]
        %2630 = vrot.lane.b32.xlu0 %v2624, 20
        %v2631 = vpop.permute.xlu0 %2630
        %2632 = vrot.lane.b32.xlu0 %v2625, 20
        %v2633 = vpop.permute.xlu0 %2632
        %2634 = vrot.lane.b32.xlu0 %v2626, 20
        %v2635 = vpop.permute.xlu0 %2634
        %2639 = vst.msk [vmem:[#allocation3 + $0x90] sm:$0xff] %vm1292, %v2631
        %2640 = vst.msk [vmem:[#allocation3 + $0xa0] sm:$0xff] %vm1292, %v2633
        %2641 = vst.msk [vmem:[#allocation3 + $0xb0] sm:$0xff] %vm1292, %v2635
        %v2642 = vld [vmem:[#allocation2 + $0x52] sm:$0xff]
        %v2643 = vld [vmem:[#allocation2 + $0x5a] sm:$0xff]
        %v2644 = vld [vmem:[#allocation2 + $0x62] sm:$0xff]
        %2648 = vrot.lane.b32.xlu0 %v2642, 30
        %v2649 = vpop.permute.xlu0 %2648
        %2650 = vrot.lane.b32.xlu0 %v2643, 30
        %v2651 = vpop.permute.xlu0 %2650
        %2652 = vrot.lane.b32.xlu0 %v2644, 30
        %v2653 = vpop.permute.xlu0 %2652
        %2657 = vst.msk [vmem:[#allocation3 + $0x90] sm:$0xff] %vm1311, %v2649
        %2658 = vst.msk [vmem:[#allocation3 + $0xa0] sm:$0xff] %vm1311, %v2651
        %2659 = vst.msk [vmem:[#allocation3 + $0xb0] sm:$0xff] %vm1311, %v2653
        %v2660 = vld [vmem:[#allocation2 + $0x7a] sm:$0xff]
        %v2661 = vld [vmem:[#allocation2 + $0x82] sm:$0xff]
        %v2662 = vld [vmem:[#allocation2 + $0x8a] sm:$0xff]
        %2666 = vrot.lane.b32.xlu0 %v2660, 40
        %v2667 = vpop.permute.xlu0 %2666
        %2668 = vrot.lane.b32.xlu0 %v2661, 40
        %v2669 = vpop.permute.xlu0 %2668
        %2670 = vrot.lane.b32.xlu0 %v2662, 40
        %v2671 = vpop.permute.xlu0 %2670
        %2675 = vst.msk [vmem:[#allocation3 + $0x90] sm:$0xff] %vm1330, %v2667
        %2676 = vst.msk [vmem:[#allocation3 + $0xa0] sm:$0xff] %vm1330, %v2669
        %2677 = vst.msk [vmem:[#allocation3 + $0xb0] sm:$0xff] %vm1330, %v2671
        %v2678 = vld [vmem:[#allocation2 + $0x2e] sm:$0xff]
        %v2679 = vld [vmem:[#allocation2 + $0x36] sm:$0xff]
        %v2680 = vld [vmem:[#allocation2 + $0x3e] sm:$0xff]
        %2684 = vrot.lane.b32.xlu0 %v2678, 50
        %v2685 = vpop.permute.xlu0 %2684
        %2686 = vrot.lane.b32.xlu0 %v2679, 50
        %v2687 = vpop.permute.xlu0 %2686
        %2688 = vrot.lane.b32.xlu0 %v2680, 50
        %v2689 = vpop.permute.xlu0 %2688
        %2693 = vst.msk [vmem:[#allocation3 + $0x90] sm:$0xff] %vm1349, %v2685
        %2694 = vst.msk [vmem:[#allocation3 + $0xa0] sm:$0xff] %vm1349, %v2687
        %2695 = vst.msk [vmem:[#allocation3 + $0xb0] sm:$0xff] %vm1349, %v2689
        %v2696 = vld [vmem:[#allocation2 + $0x7] sm:$0xff]
        %v2697 = vld [vmem:[#allocation2 + $0xf] sm:$0xff]
        %v2698 = vld [vmem:[#allocation2 + $0x17] sm:$0xff]
        %2702 = vrot.lane.b32.xlu0 %v2696, 60
        %v2703 = vpop.permute.xlu0 %2702
        %2704 = vrot.lane.b32.xlu0 %v2697, 60
        %v2705 = vpop.permute.xlu0 %2704
        %2706 = vrot.lane.b32.xlu0 %v2698, 60
        %v2707 = vpop.permute.xlu0 %2706
        %2711 = vst.msk [vmem:[#allocation3 + $0x90] sm:$0xff] %vm1368, %v2703
        %2712 = vst.msk [vmem:[#allocation3 + $0xa0] sm:$0xff] %vm1368, %v2705
        %2713 = vst.msk [vmem:[#allocation3 + $0xb0] sm:$0xff] %vm1368, %v2707
        %v2714 = vld [vmem:[#allocation2 + $0x2f] sm:$0xff]
        %v2715 = vld [vmem:[#allocation2 + $0x37] sm:$0xff]
        %v2716 = vld [vmem:[#allocation2 + $0x3f] sm:$0xff]
        %2720 = vrot.lane.b32.xlu0 %v2714, 70
        %v2721 = vpop.permute.xlu0 %2720
        %2722 = vrot.lane.b32.xlu0 %v2715, 70
        %v2723 = vpop.permute.xlu0 %2722
        %2724 = vrot.lane.b32.xlu0 %v2716, 70
        %v2725 = vpop.permute.xlu0 %2724
        %2729 = vst.msk [vmem:[#allocation3 + $0x90] sm:$0xff] %vm1387, %v2721
        %2730 = vst.msk [vmem:[#allocation3 + $0xa0] sm:$0xff] %vm1387, %v2723
        %2731 = vst.msk [vmem:[#allocation3 + $0xb0] sm:$0xff] %vm1387, %v2725
        %v2732 = vld [vmem:[#allocation2 + $0x8] sm:$0xff]
        %v2733 = vld [vmem:[#allocation2 + $0x10] sm:$0xff]
        %v2734 = vld [vmem:[#allocation2 + $0x18] sm:$0xff]
        %2738 = vrot.lane.b32.xlu0 %v2732, 80
        %v2739 = vpop.permute.xlu0 %2738
        %2740 = vrot.lane.b32.xlu0 %v2733, 80
        %v2741 = vpop.permute.xlu0 %2740
        %2742 = vrot.lane.b32.xlu0 %v2734, 80
        %v2743 = vpop.permute.xlu0 %2742
        %2747 = vst.msk [vmem:[#allocation3 + $0x90] sm:$0xff] %vm1406, %v2739
        %2748 = vst.msk [vmem:[#allocation3 + $0xa0] sm:$0xff] %vm1406, %v2741
        %2749 = vst.msk [vmem:[#allocation3 + $0xb0] sm:$0xff] %vm1406, %v2743
        %v2750 = vld [vmem:[#allocation2 + $0x30] sm:$0xff]
        %v2751 = vld [vmem:[#allocation2 + $0x38] sm:$0xff]
        %v2752 = vld [vmem:[#allocation2 + $0x40] sm:$0xff]
        %2756 = vrot.lane.b32.xlu0 %v2750, 90
        %v2757 = vpop.permute.xlu0 %2756
        %2758 = vrot.lane.b32.xlu0 %v2751, 90
        %v2759 = vpop.permute.xlu0 %2758
        %2760 = vrot.lane.b32.xlu0 %v2752, 90
        %v2761 = vpop.permute.xlu0 %2760
        %2765 = vst.msk [vmem:[#allocation3 + $0x90] sm:$0xff] %vm1425, %v2757
        %2766 = vst.msk [vmem:[#allocation3 + $0xa0] sm:$0xff] %vm1425, %v2759
        %2767 = vst.msk [vmem:[#allocation3 + $0xb0] sm:$0xff] %vm1425, %v2761
        %v2768 = vld [vmem:[#allocation2 + $0x7e] sm:$0xff]
        %v2769 = vld [vmem:[#allocation2 + $0x86] sm:$0xff]
        %v2770 = vld [vmem:[#allocation2 + $0x8e] sm:$0xff]
        %2774 = vrot.lane.b32.xlu0 %v2768, 100
        %v2775 = vpop.permute.xlu0 %2774
        %2776 = vrot.lane.b32.xlu0 %v2769, 100
        %v2777 = vpop.permute.xlu0 %2776
        %2778 = vrot.lane.b32.xlu0 %v2770, 100
        %v2779 = vpop.permute.xlu0 %2778
        %2783 = vst.msk [vmem:[#allocation3 + $0x90] sm:$0xff] %vm1444, %v2775
        %2784 = vst.msk [vmem:[#allocation3 + $0xa0] sm:$0xff] %vm1444, %v2777
        %2785 = vst.msk [vmem:[#allocation3 + $0xb0] sm:$0xff] %vm1444, %v2779
        %v2786 = vld [vmem:[#allocation2 + $0x57] sm:$0xff]
        %v2787 = vld [vmem:[#allocation2 + $0x5f] sm:$0xff]
        %v2788 = vld [vmem:[#allocation2 + $0x67] sm:$0xff]
        %2792 = vrot.lane.b32.xlu0 %v2786, 110
        %v2793 = vpop.permute.xlu0 %2792
        %2794 = vrot.lane.b32.xlu0 %v2787, 110
        %v2795 = vpop.permute.xlu0 %2794
        %2796 = vrot.lane.b32.xlu0 %v2788, 110
        %v2797 = vpop.permute.xlu0 %2796
        %2801 = vst.msk [vmem:[#allocation3 + $0x90] sm:$0xff] %vm1463, %v2793
        %2802 = vst.msk [vmem:[#allocation3 + $0xa0] sm:$0xff] %vm1463, %v2795
        %2803 = vst.msk [vmem:[#allocation3 + $0xb0] sm:$0xff] %vm1463, %v2797
        %v2804 = vld [vmem:[#allocation2 + $0x7f] sm:$0xff]
        %v2805 = vld [vmem:[#allocation2 + $0x87] sm:$0xff]
        %v2806 = vld [vmem:[#allocation2 + $0x8f] sm:$0xff]
        %2810 = vrot.lane.b32.xlu0 %v2804, 120
        %v2811 = vpop.permute.xlu0 %2810
        %2812 = vrot.lane.b32.xlu0 %v2805, 120
        %v2813 = vpop.permute.xlu0 %2812
        %2814 = vrot.lane.b32.xlu0 %v2806, 120
        %v2815 = vpop.permute.xlu0 %2814
        %2819 = vst.msk [vmem:[#allocation3 + $0x90] sm:$0xff] %vm1482, %v2811
        %2820 = vst.msk [vmem:[#allocation3 + $0x98] sm:$0xff] %vm1484, %v2811
        %2821 = vst.msk [vmem:[#allocation3 + $0xa0] sm:$0xff] %vm1482, %v2813
        %2822 = vst.msk [vmem:[#allocation3 + $0xa8] sm:$0xff] %vm1484, %v2813
        %2823 = vst.msk [vmem:[#allocation3 + $0xb0] sm:$0xff] %vm1482, %v2815
        %2824 = vst.msk [vmem:[#allocation3 + $0xb8] sm:$0xff] %vm1484, %v2815
        %v2825 = vld [vmem:[#allocation2 + $0x58] sm:$0xff]
        %v2826 = vld [vmem:[#allocation2 + $0x60] sm:$0xff]
        %v2827 = vld [vmem:[#allocation2 + $0x68] sm:$0xff]
        %2831 = vrot.lane.b32.xlu0 %v2825, 2
        %v2832 = vpop.permute.xlu0 %2831
        %2833 = vrot.lane.b32.xlu0 %v2826, 2
        %v2834 = vpop.permute.xlu0 %2833
        %2835 = vrot.lane.b32.xlu0 %v2827, 2
        %v2836 = vpop.permute.xlu0 %2835
        %2840 = vst.msk [vmem:[#allocation3 + $0x98] sm:$0xff] %vm1505, %v2832
        %2841 = vst.msk [vmem:[#allocation3 + $0xa8] sm:$0xff] %vm1505, %v2834
        %2842 = vst.msk [vmem:[#allocation3 + $0xb8] sm:$0xff] %vm1505, %v2836
        %v2843 = vld [vmem:[#allocation2 + $0x80] sm:$0xff]
        %v2844 = vld [vmem:[#allocation2 + $0x88] sm:$0xff]
        %v2845 = vld [vmem:[#allocation2 + $0x90] sm:$0xff]
        %2849 = vrot.lane.b32.xlu0 %v2843, 12
        %v2850 = vpop.permute.xlu0 %2849
        %2851 = vrot.lane.b32.xlu0 %v2844, 12
        %v2852 = vpop.permute.xlu0 %2851
        %2853 = vrot.lane.b32.xlu0 %v2845, 12
        %v2854 = vpop.permute.xlu0 %2853
        %2858 = vst.msk [vmem:[#allocation3 + $0x98] sm:$0xff] %vm1524, %v2850
        %2859 = vst.msk [vmem:[#allocation3 + $0xa8] sm:$0xff] %vm1524, %v2852
        %2860 = vst.msk [vmem:[#allocation3 + $0xb8] sm:$0xff] %vm1524, %v2854
        %v2861 = vld [vmem:[#allocation2 + $0x34] sm:$0xff]
        %v2862 = vld [vmem:[#allocation2 + $0x3c] sm:$0xff]
        %v2863 = vld [vmem:[#allocation2 + $0x44] sm:$0xff]
        %2867 = vrot.lane.b32.xlu0 %v2861, 22
        %v2868 = vpop.permute.xlu0 %2867
        %2869 = vrot.lane.b32.xlu0 %v2862, 22
        %v2870 = vpop.permute.xlu0 %2869
        %2871 = vrot.lane.b32.xlu0 %v2863, 22
        %v2872 = vpop.permute.xlu0 %2871
        %2876 = vst.msk [vmem:[#allocation3 + $0x98] sm:$0xff] %vm1543, %v2868
        %2877 = vst.msk [vmem:[#allocation3 + $0xa8] sm:$0xff] %vm1543, %v2870
        %2878 = vst.msk [vmem:[#allocation3 + $0xb8] sm:$0xff] %vm1543, %v2872
        %v2879 = vld [vmem:[#allocation2 + $0xd] sm:$0xff]
        %v2880 = vld [vmem:[#allocation2 + $0x15] sm:$0xff]
        %v2881 = vld [vmem:[#allocation2 + $0x1d] sm:$0xff]
        %2885 = vrot.lane.b32.xlu0 %v2879, 32
        %v2886 = vpop.permute.xlu0 %2885
        %2887 = vrot.lane.b32.xlu0 %v2880, 32
        %v2888 = vpop.permute.xlu0 %2887
        %2889 = vrot.lane.b32.xlu0 %v2881, 32
        %v2890 = vpop.permute.xlu0 %2889
        %2894 = vst.msk [vmem:[#allocation3 + $0x98] sm:$0xff] %vm1562, %v2886
        %2895 = vst.msk [vmem:[#allocation3 + $0xa8] sm:$0xff] %vm1562, %v2888
        %2896 = vst.msk [vmem:[#allocation3 + $0xb8] sm:$0xff] %vm1562, %v2890
        %v2897 = vld [vmem:[#allocation2 + $0x35] sm:$0xff]
        %v2898 = vld [vmem:[#allocation2 + $0x3d] sm:$0xff]
        %v2899 = vld [vmem:[#allocation2 + $0x45] sm:$0xff]
        %2903 = vrot.lane.b32.xlu0 %v2897, 42
        %v2904 = vpop.permute.xlu0 %2903
        %2905 = vrot.lane.b32.xlu0 %v2898, 42
        %v2906 = vpop.permute.xlu0 %2905
        %2907 = vrot.lane.b32.xlu0 %v2899, 42
        %v2908 = vpop.permute.xlu0 %2907
        %2912 = vst.msk [vmem:[#allocation3 + $0x98] sm:$0xff] %vm1581, %v2904
        %2913 = vst.msk [vmem:[#allocation3 + $0xa8] sm:$0xff] %vm1581, %v2906
        %2914 = vst.msk [vmem:[#allocation3 + $0xb8] sm:$0xff] %vm1581, %v2908
        %v2915 = vld [vmem:[#allocation2 + $0xe] sm:$0xff]
        %v2916 = vld [vmem:[#allocation2 + $0x16] sm:$0xff]
        %v2917 = vld [vmem:[#allocation2 + $0x1e] sm:$0xff]
        %2921 = vrot.lane.b32.xlu0 %v2915, 52
        %v2922 = vpop.permute.xlu0 %2921
        %2923 = vrot.lane.b32.xlu0 %v2916, 52
        %v2924 = vpop.permute.xlu0 %2923
        %2925 = vrot.lane.b32.xlu0 %v2917, 52
        %v2926 = vpop.permute.xlu0 %2925
        %2930 = vst.msk [vmem:[#allocation3 + $0x98] sm:$0xff] %vm1600, %v2922
        %2931 = vst.msk [vmem:[#allocation3 + $0xa8] sm:$0xff] %vm1600, %v2924
        %2932 = vst.msk [vmem:[#allocation3 + $0xb8] sm:$0xff] %vm1600, %v2926
        %v2933 = vld [vmem:[#allocation2 + $0x36] sm:$0xff]
        %v2934 = vld [vmem:[#allocation2 + $0x3e] sm:$0xff]
        %v2935 = vld [vmem:[#allocation2 + $0x46] sm:$0xff]
        %2939 = vrot.lane.b32.xlu0 %v2933, 62
        %v2940 = vpop.permute.xlu0 %2939
        %2941 = vrot.lane.b32.xlu0 %v2934, 62
        %v2942 = vpop.permute.xlu0 %2941
        %2943 = vrot.lane.b32.xlu0 %v2935, 62
        %v2944 = vpop.permute.xlu0 %2943
        %2948 = vst.msk [vmem:[#allocation3 + $0x98] sm:$0xff] %vm1619, %v2940
        %2949 = vst.msk [vmem:[#allocation3 + $0xa8] sm:$0xff] %vm1619, %v2942
        %2950 = vst.msk [vmem:[#allocation3 + $0xb8] sm:$0xff] %vm1619, %v2944
        %v2951 = vld [vmem:[#allocation2 + $0x84] sm:$0xff]
        %v2952 = vld [vmem:[#allocation2 + $0x8c] sm:$0xff]
        %v2953 = vld [vmem:[#allocation2 + $0x94] sm:$0xff]
        %2957 = vrot.lane.b32.xlu0 %v2951, 72
        %v2958 = vpop.permute.xlu0 %2957
        %2959 = vrot.lane.b32.xlu0 %v2952, 72
        %v2960 = vpop.permute.xlu0 %2959
        %2961 = vrot.lane.b32.xlu0 %v2953, 72
        %v2962 = vpop.permute.xlu0 %2961
        %2966 = vst.msk [vmem:[#allocation3 + $0x98] sm:$0xff] %vm1638, %v2958
        %2967 = vst.msk [vmem:[#allocation3 + $0xa8] sm:$0xff] %vm1638, %v2960
        %2968 = vst.msk [vmem:[#allocation3 + $0xb8] sm:$0xff] %vm1638, %v2962
        %v2969 = vld [vmem:[#allocation2 + $0x5d] sm:$0xff]
        %v2970 = vld [vmem:[#allocation2 + $0x65] sm:$0xff]
        %v2971 = vld [vmem:[#allocation2 + $0x6d] sm:$0xff]
        %2975 = vrot.lane.b32.xlu0 %v2969, 82
        %v2976 = vpop.permute.xlu0 %2975
        %2977 = vrot.lane.b32.xlu0 %v2970, 82
        %v2978 = vpop.permute.xlu0 %2977
        %2979 = vrot.lane.b32.xlu0 %v2971, 82
        %v2980 = vpop.permute.xlu0 %2979
        %2984 = vst.msk [vmem:[#allocation3 + $0x98] sm:$0xff] %vm1657, %v2976
        %2985 = vst.msk [vmem:[#allocation3 + $0xa8] sm:$0xff] %vm1657, %v2978
        %2986 = vst.msk [vmem:[#allocation3 + $0xb8] sm:$0xff] %vm1657, %v2980
        %v2987 = vld [vmem:[#allocation2 + $0x85] sm:$0xff]
        %v2988 = vld [vmem:[#allocation2 + $0x8d] sm:$0xff]
        %v2989 = vld [vmem:[#allocation2 + $0x95] sm:$0xff]
        %2993 = vrot.lane.b32.xlu0 %v2987, 92
        %v2994 = vpop.permute.xlu0 %2993
        %2995 = vrot.lane.b32.xlu0 %v2988, 92
        %v2996 = vpop.permute.xlu0 %2995
        %2997 = vrot.lane.b32.xlu0 %v2989, 92
        %v2998 = vpop.permute.xlu0 %2997
        %3002 = vst.msk [vmem:[#allocation3 + $0x98] sm:$0xff] %vm1676, %v2994
        %3003 = vst.msk [vmem:[#allocation3 + $0xa8] sm:$0xff] %vm1676, %v2996
        %3004 = vst.msk [vmem:[#allocation3 + $0xb8] sm:$0xff] %vm1676, %v2998
        %v3005 = vld [vmem:[#allocation2 + $0x5e] sm:$0xff]
        %v3006 = vld [vmem:[#allocation2 + $0x66] sm:$0xff]
        %v3007 = vld [vmem:[#allocation2 + $0x6e] sm:$0xff]
        %3011 = vrot.lane.b32.xlu0 %v3005, 102
        %v3012 = vpop.permute.xlu0 %3011
        %3013 = vrot.lane.b32.xlu0 %v3006, 102
        %v3014 = vpop.permute.xlu0 %3013
        %3015 = vrot.lane.b32.xlu0 %v3007, 102
        %v3016 = vpop.permute.xlu0 %3015
        %3020 = vst.msk [vmem:[#allocation3 + $0x98] sm:$0xff] %vm1695, %v3012
        %3021 = vst.msk [vmem:[#allocation3 + $0xa8] sm:$0xff] %vm1695, %v3014
        %3022 = vst.msk [vmem:[#allocation3 + $0xb8] sm:$0xff] %vm1695, %v3016
        %v3023 = vld [vmem:[#allocation2 + $0x86] sm:$0xff]
        %v3024 = vld [vmem:[#allocation2 + $0x8e] sm:$0xff]
        %v3025 = vld [vmem:[#allocation2 + $0x96] sm:$0xff]
        %3029 = vrot.lane.b32.xlu0 %v3023, 112
        %v3030 = vpop.permute.xlu0 %3029
        %3031 = vrot.lane.b32.xlu0 %v3024, 112
        %v3032 = vpop.permute.xlu0 %3031
        %3033 = vrot.lane.b32.xlu0 %v3025, 112
        %v3034 = vpop.permute.xlu0 %3033
        %3038 = vst.msk [vmem:[#allocation3 + $0x98] sm:$0xff] %vm1714, %v3030
        %3039 = vst.msk [vmem:[#allocation3 + $0xa8] sm:$0xff] %vm1714, %v3032
        %3040 = vst.msk [vmem:[#allocation3 + $0xb8] sm:$0xff] %vm1714, %v3034
        %v3041 = vld [vmem:[#allocation3] sm:$0xff]
        %v3042 = vld [vmem:[#allocation3 + $0x8] sm:$0xff]
        %v3043 = vld [vmem:[#allocation3 + $0x10] sm:$0xff]
        %v3044 = vld [vmem:[#allocation3 + $0x18] sm:$0xff]
        %v3045 = vld [vmem:[#allocation3 + $0x20] sm:$0xff]
        %v3046 = vld [vmem:[#allocation3 + $0x28] sm:$0xff]
        %v3047 = vld [vmem:[#allocation3 + $0x30] sm:$0xff]
        %v3048 = vld [vmem:[#allocation3 + $0x38] sm:$0xff]
        %v3049 = vld [vmem:[#allocation3 + $0x40] sm:$0xff]
        %v3050 = vld [vmem:[#allocation3 + $0x48] sm:$0xff]
        %v3051 = vld [vmem:[#allocation3 + $0x50] sm:$0xff]
        %v3052 = vld [vmem:[#allocation3 + $0x58] sm:$0xff]
        %v3053 = vld [vmem:[#allocation3 + $0x60] sm:$0xff]
        %v3054 = vld [vmem:[#allocation3 + $0x68] sm:$0xff]
        %v3055 = vld [vmem:[#allocation3 + $0x70] sm:$0xff]
        %v3056 = vld [vmem:[#allocation3 + $0x78] sm:$0xff]
        %v3057 = vld [vmem:[#allocation3 + $0x80] sm:$0xff]
        %v3058 = vld [vmem:[#allocation3 + $0x88] sm:$0xff]
        %v3059 = vld [vmem:[#allocation3 + $0x90] sm:$0xff]
        %v3060 = vld [vmem:[#allocation3 + $0x98] sm:$0xff]
        %v3061 = vld [vmem:[#allocation3 + $0xa0] sm:$0xff]
        %v3062 = vld [vmem:[#allocation3 + $0xa8] sm:$0xff]
        %v3063 = vld [vmem:[#allocation3 + $0xb0] sm:$0xff]
        %v3064 = vld [vmem:[#allocation3 + $0xb8] sm:$0xff]
        %v3065 = vld [vmem:[%s3] sm:$0xff]
        %v3066 = vld [vmem:[%s3 + $0x8] sm:$0xff]
        %v3067 = vld [vmem:[%s3 + $0x10] sm:$0xff]
        %v3068 = vld [vmem:[%s3 + $0x18] sm:$0xff]
        %v3069 = vld [vmem:[%s3 + $0x20] sm:$0xff]
        %v3070 = vld [vmem:[%s3 + $0x28] sm:$0xff]
        %v3071 = vld [vmem:[%s3 + $0x30] sm:$0xff]
        %v3072 = vld [vmem:[%s3 + $0x38] sm:$0xff]
        %v3073 = vld [vmem:[%s3 + $0x40] sm:$0xff]
        %v3074 = vld [vmem:[%s3 + $0x48] sm:$0xff]
        %v3075 = vld [vmem:[%s3 + $0x50] sm:$0xff]
        %v3076 = vld [vmem:[%s3 + $0x58] sm:$0xff]
        %v3077 = vld [vmem:[%s3 + $0x60] sm:$0xff]
        %v3078 = vld [vmem:[%s3 + $0x68] sm:$0xff]
        %v3079 = vld [vmem:[%s3 + $0x70] sm:$0xff]
        %v3080 = vld [vmem:[%s3 + $0x78] sm:$0xff]
        %v3081 = vld [vmem:[%s3 + $0x80] sm:$0xff]
        %v3082 = vld [vmem:[%s3 + $0x88] sm:$0xff]
        %v3083 = vld [vmem:[%s3 + $0x90] sm:$0xff]
        %v3084 = vld [vmem:[%s3 + $0x98] sm:$0xff]
        %v3085 = vld [vmem:[%s3 + $0xa0] sm:$0xff]
        %v3086 = vld [vmem:[%s3 + $0xa8] sm:$0xff]
        %v3087 = vld [vmem:[%s3 + $0xb0] sm:$0xff]
        %v3088 = vld [vmem:[%s3 + $0xb8] sm:$0xff]
        %v3089 = vld [vmem:[%s3 + $0xc0] sm:$0xff]
        %v3090 = vld [vmem:[%s3 + $0xc8] sm:$0xff]
        %v3091 = vld [vmem:[%s3 + $0xd0] sm:$0xff]
        %v3092 = vld [vmem:[%s3 + $0xd8] sm:$0xff]
        %v3093 = vld [vmem:[%s3 + $0xe0] sm:$0xff]
        %v3094 = vld [vmem:[%s3 + $0xe8] sm:$0xff]
        %v3095 = vld [vmem:[%s3 + $0xf0] sm:$0xff]
        %v3096 = vld [vmem:[%s3 + $0xf8] sm:$0x3]
        %vm3097 = vcmask 998400
        %v3099 = vsel %vm3097, %v3042, 0
        %v3102 = vsel %vm3097, %v3044, 0
        %v3105 = vsel %vm3097, %v3046, 0
        %v3108 = vsel %vm3097, %v3048, 0
        %v3111 = vsel %vm3097, %v3050, 0
        %v3114 = vsel %vm3097, %v3052, 0
        %v3117 = vsel %vm3097, %v3054, 0
        %v3120 = vsel %vm3097, %v3056, 0
        %v3123 = vsel %vm3097, %v3058, 0
        %v3126 = vsel %vm3097, %v3060, 0
        %v3129 = vsel %vm3097, %v3062, 0
        %v3132 = vsel %vm3097, %v3064, 0
        %vm3134 = vcmask 1041408
        %v3136 = vsel %vm3134, %v3096, 0
        %3138 = vmatprep.subr.mxu0 0.0
        %3139 = vmatpush1.msra.mxu0 %v3080
        %3140 = vmatprep.subr.mxu0 0.0
        %3141 = vmatpush1.msra.mxu0 %v3079
        %3142 = vmatprep.subr.mxu0 0.0
        %3143 = vmatpush1.msra.mxu0 %v3078
        %3144 = vmatprep.subr.mxu0 0.0
        %3145 = vmatpush1.msra.mxu0 %v3077
        %3146 = vmatprep.subr.mxu0 0.0
        %3147 = vmatpush1.msra.mxu0 %v3076
        %3148 = vmatprep.subr.mxu0 0.0
        %3149 = vmatpush1.msra.mxu0 %v3075
        %3150 = vmatprep.subr.mxu0 0.0
        %3151 = vmatpush1.msra.mxu0 %v3074
        %3152 = vmatprep.subr.mxu0 0.0
        %3153 = vmatpush1.msra.mxu0 %v3073
        %3154 = vmatprep.subr.mxu0 0.0
        %3155 = vmatpush1.msra.mxu0 %v3072
        %3156 = vmatprep.subr.mxu0 0.0
        %3157 = vmatpush1.msra.mxu0 %v3071
        %3158 = vmatprep.subr.mxu0 0.0
        %3159 = vmatpush1.msra.mxu0 %v3070
        %3160 = vmatprep.subr.mxu0 0.0
        %3161 = vmatpush1.msra.mxu0 %v3069
        %3162 = vmatprep.subr.mxu0 0.0
        %3163 = vmatpush1.msra.mxu0 %v3068
        %3164 = vmatprep.subr.mxu0 0.0
        %3165 = vmatpush1.msra.mxu0 %v3067
        %3166 = vmatprep.subr.mxu0 0.0
        %3167 = vmatpush1.msra.mxu0 %v3066
        %3168 = vmatprep.subr.mxu0 0.0
        %3169 = vmatpush1.msra.mxu0 %v3065
        %3170 = vmatprep.subr.mxu0 0.0
        %3171 = vmatpush2.msra.mxu0 %v3136
        %3172 = vmatprep.subr.mxu0 0.0
        %3173 = vmatpush2.msra.mxu0 %v3095
        %3174 = vmatprep.subr.mxu0 0.0
        %3175 = vmatpush2.msra.mxu0 %v3094
        %3176 = vmatprep.subr.mxu0 0.0
        %3177 = vmatpush2.msra.mxu0 %v3093
        %3178 = vmatprep.subr.mxu0 0.0
        %3179 = vmatpush2.msra.mxu0 %v3092
        %3180 = vmatprep.subr.mxu0 0.0
        %3181 = vmatpush2.msra.mxu0 %v3091
        %3182 = vmatprep.subr.mxu0 0.0
        %3183 = vmatpush2.msra.mxu0 %v3090
        %3184 = vmatprep.subr.mxu0 0.0
        %3185 = vmatpush2.msra.mxu0 %v3089
        %3186 = vmatprep.subr.mxu0 0.0
        %3187 = vmatpush2.msra.mxu0 %v3088
        %3188 = vmatprep.subr.mxu0 0.0
        %3189 = vmatpush2.msra.mxu0 %v3087
        %3190 = vmatprep.subr.mxu0 0.0
        %3191 = vmatpush2.msra.mxu0 %v3086
        %3192 = vmatprep.subr.mxu0 0.0
        %3193 = vmatpush2.msra.mxu0 %v3085
        %3194 = vmatprep.subr.mxu0 0.0
        %3195 = vmatpush2.msra.mxu0 %v3084
        %3196 = vmatprep.subr.mxu0 0.0
        %3197 = vmatpush2.msra.mxu0 %v3083
        %3198 = vmatprep.subr.mxu0 0.0
        %3199 = vmatpush2.msra.mxu0 %v3082
        %3200 = vmatprep.subr.mxu0 0.0
        %3201 = vmatpush2.msra.mxu0 %v3081
        %3202 = vmatprep.mubr.f32.mxu0 %v3099
        %3203 = vmatmul.mubr.f32.gmra.mxu0 %v3041
        %v3204 = vpop.f32.mrf.mxu0
        %v3205 = vadd.f32 0.0, %v3204
        %v3206 = vpop.f32.mrf.mxu0
        %3207 = vmatprep.mubr.f32.mxu0 %v3102
        %3208 = vmatmul.mubr.f32.gmra.mxu0 %v3043
        %v3209 = vpop.f32.mrf.mxu0
        %v3210 = vadd.f32 0.0, %v3209
        %v3211 = vpop.f32.mrf.mxu0
        %3212 = vmatprep.mubr.f32.mxu0 %v3105
        %3213 = vmatmul.mubr.f32.gmra.mxu0 %v3045
        %v3214 = vpop.f32.mrf.mxu0
        %v3215 = vadd.f32 0.0, %v3214
        %v3216 = vpop.f32.mrf.mxu0
        %3217 = vmatprep.mubr.f32.mxu0 %v3108
        %3218 = vmatmul.mubr.f32.gmra.mxu0 %v3047
        %v3219 = vpop.f32.mrf.mxu0
        %v3220 = vadd.f32 0.0, %v3219
        %v3221 = vpop.f32.mrf.mxu0
        %3222 = vmatprep.mubr.f32.mxu0 %v3111
        %3223 = vmatmul.mubr.f32.gmra.mxu0 %v3049
        %v3224 = vpop.f32.mrf.mxu0
        %v3225 = vadd.f32 0.0, %v3224
        %v3226 = vpop.f32.mrf.mxu0
        %3227 = vmatprep.mubr.f32.mxu0 %v3114
        %3228 = vmatmul.mubr.f32.gmra.mxu0 %v3051
        %v3229 = vpop.f32.mrf.mxu0
        %v3230 = vadd.f32 0.0, %v3229
        %v3231 = vpop.f32.mrf.mxu0
        %3232 = vmatprep.mubr.f32.mxu0 %v3117
        %3233 = vmatmul.mubr.f32.gmra.mxu0 %v3053
        %v3234 = vpop.f32.mrf.mxu0
        %v3235 = vadd.f32 0.0, %v3234
        %v3236 = vpop.f32.mrf.mxu0
        %3237 = vmatprep.mubr.f32.mxu0 %v3120
        %3238 = vmatmul.mubr.f32.gmra.mxu0 %v3055
        %v3239 = vpop.f32.mrf.mxu0
        %v3240 = vadd.f32 0.0, %v3239
        %v3241 = vpop.f32.mrf.mxu0
        %3242 = vmatprep.mubr.f32.mxu0 %v3123
        %3243 = vmatmul.mubr.f32.gmra.mxu0 %v3057
        %v3244 = vpop.f32.mrf.mxu0
        %v3245 = vadd.f32 0.0, %v3244
        %v3246 = vpop.f32.mrf.mxu0
        %3247 = vmatprep.mubr.f32.mxu0 %v3126
        %3248 = vmatmul.mubr.f32.gmra.mxu0 %v3059
        %v3249 = vpop.f32.mrf.mxu0
        %v3250 = vadd.f32 0.0, %v3249
        %v3251 = vpop.f32.mrf.mxu0
        %3252 = vmatprep.mubr.f32.mxu0 %v3129
        %3253 = vmatmul.mubr.f32.gmra.mxu0 %v3061
        %v3254 = vpop.f32.mrf.mxu0
        %v3255 = vadd.f32 0.0, %v3254
        %v3256 = vpop.f32.mrf.mxu0
        %3257 = vmatprep.mubr.f32.mxu0 %v3132
        %3258 = vmatmul.mubr.f32.gmra.mxu0 %v3063
        %v3259 = vpop.f32.mrf.mxu0
        %v3260 = vadd.f32 0.0, %v3259
        %v3261 = vpop.f32.mrf.mxu0
        %3262 = vdwg.mxu0
        %v3263 = vmax.f32 %v3205, %v3220
        %v3264 = vmax.f32 %v3210, %v3225
        %v3265 = vmax.f32 %v3215, %v3230
        %v3266 = vmax.f32 %v3235, %v3250
        %v3267 = vmax.f32 %v3240, %v3255
        %v3268 = vmax.f32 %v3245, %v3260
        %v3269 = vmax.f32 %v3263, %v3266
        %v3270 = vmax.f32 %v3264, %v3267
        %v3271 = vmax.f32 %v3265, %v3268
        %v3272 = vld [vmem:[%s4] sm:$0x1]
        %v3274 = vlaneseq
        %v3275 = vshrl.u32 %v3274, 7
        %v3276 = vsub.s32 0, %v3275
        %v3277 = vrot.slane %v3272, %v3276
        %v3279 = vadd.f32 %v3269, %v3277
        %v3280 = vadd.f32 %v3270, %v3277
        %v3281 = vadd.f32 %v3271, %v3277
        %v3282 = vmax.f32 %v3279, 0.0
        %v3283 = vmax.f32 %v3280, 0.0
        %v3284 = vmax.f32 %v3281, 0.0
        %v3286 = vrot.slane %v3282, 1
        %3287 = vrot.lane.b32.xlu0 %v3286, 20
        %v3288 = vpop.permute.xlu0 %3287
        %v3290 = vrot.slane %v3282, 2
        %3291 = vrot.lane.b32.xlu0 %v3290, 40
        %v3292 = vpop.permute.xlu0 %3291
        %v3294 = vrot.slane %v3282, 3
        %3295 = vrot.lane.b32.xlu0 %v3294, 60
        %v3296 = vpop.permute.xlu0 %3295
        %v3298 = vrot.slane %v3282, 6
        %3299 = vrot.lane.b32.xlu0 %v3298, 80
        %v3300 = vpop.permute.xlu0 %3299
        %v3302 = vrot.slane %v3282, 7
        %3303 = vrot.lane.b32.xlu0 %v3302, 100
        %v3304 = vpop.permute.xlu0 %3303
        %3307 = vrot.lane.b32.xlu0 %v3283, 120
        %v3308 = vpop.permute.xlu0 %3307
        %v3310 = vrot.slane %v3283, 1
        %3311 = vrot.lane.b32.xlu0 %v3310, 12
        %v3312 = vpop.permute.xlu0 %3311
        %v3314 = vrot.slane %v3283, 4
        %3315 = vrot.lane.b32.xlu0 %v3314, 32
        %v3316 = vpop.permute.xlu0 %3315
        %v3318 = vrot.slane %v3283, 5
        %3319 = vrot.lane.b32.xlu0 %v3318, 52
        %v3320 = vpop.permute.xlu0 %3319
        %v3322 = vrot.slane %v3283, 6
        %3323 = vrot.lane.b32.xlu0 %v3322, 72
        %v3324 = vpop.permute.xlu0 %3323
        %v3326 = vrot.slane %v3283, 7
        %3327 = vrot.lane.b32.xlu0 %v3326, 92
        %v3328 = vpop.permute.xlu0 %3327
        %v3331 = vrot.slane %v3284, 2
        %3332 = vrot.lane.b32.xlu0 %v3331, 112
        %v3333 = vpop.permute.xlu0 %3332
        %v3335 = vrot.slane %v3284, 3
        %3336 = vrot.lane.b32.xlu0 %v3335, 4
        %v3337 = vpop.permute.xlu0 %3336
        %v3339 = vrot.slane %v3284, 4
        %3340 = vrot.lane.b32.xlu0 %v3339, 24
        %v3341 = vpop.permute.xlu0 %3340
        %v3343 = vrot.slane %v3284, 5
        %3344 = vrot.lane.b32.xlu0 %v3343, 44
        %v3345 = vpop.permute.xlu0 %3344
        %vm3347 = vcmask 162816
        %v3348 = vsel %vm3347, %v3282, %v3288
        %vm3349 = vcmask 326656
        %v3350 = vsel %vm3349, %v3348, %v3292
        %vm3351 = vcmask 490496
        %v3352 = vsel %vm3351, %v3350, %v3296
        %vm3353 = vcmask 654336
        %v3354 = vsel %vm3353, %v3352, %v3300
        %vm3355 = vcmask 818176
        %v3356 = vsel %vm3355, %v3354, %v3304
        %vm3357 = vcmask 982016
        %v3358 = vsel %vm3357, %v3356, %v3308
        %vm3359 = vcmask 97280
        %v3360 = vsel %vm3359, %v3308, %v3312
        %vm3361 = vcmask 261120
        %v3362 = vsel %vm3361, %v3360, %v3316
        %vm3363 = vcmask 424960
        %v3364 = vsel %vm3363, %v3362, %v3320
        %vm3365 = vcmask 588800
        %v3366 = vsel %vm3365, %v3364, %v3324
        %vm3367 = vcmask 752640
        %v3368 = vsel %vm3367, %v3366, %v3328
        %vm3369 = vcmask 916480
        %v3370 = vsel %vm3369, %v3368, %v3333
        %vm3371 = vcmask 31744
        %v3372 = vsel %vm3371, %v3333, %v3337
        %vm3373 = vcmask 195584
        %v3374 = vsel %vm3373, %v3372, %v3341
        %vm3375 = vcmask 359424
        %v3376 = vsel %vm3375, %v3374, %v3345
        %v3377 = vld [vmem:[%s5] sm:$0xff]
        %v3378 = vld [vmem:[%s5 + $0x8] sm:$0xff]
        %v3379 = vld [vmem:[%s5 + $0x10] sm:$0xff]
        %v3380 = vld [vmem:[%s5 + $0x18] sm:$0xff]
        %v3381 = vld [vmem:[%s5 + $0x20] sm:$0xff]
        %v3382 = vld [vmem:[%s5 + $0x28] sm:$0xff]
        %v3383 = vld [vmem:[%s5 + $0x30] sm:$0xff]
        %v3384 = vld [vmem:[%s5 + $0x38] sm:$0xff]
        %v3385 = vld [vmem:[%s5 + $0x40] sm:$0xff]
        %v3386 = vld [vmem:[%s5 + $0x48] sm:$0xff]
        %v3387 = vld [vmem:[%s5 + $0x50] sm:$0xff]
        %v3388 = vld [vmem:[%s5 + $0x58] sm:$0xff]
        %v3389 = vld [vmem:[%s5 + $0x60] sm:$0xff]
        %v3390 = vld [vmem:[%s5 + $0x68] sm:$0xff]
        %v3391 = vld [vmem:[%s5 + $0x70] sm:$0xff]
        %v3392 = vld [vmem:[%s5 + $0x78] sm:$0xff]
        %v3393 = vld [vmem:[%s5 + $0x80] sm:$0xff]
        %v3394 = vld [vmem:[%s5 + $0x88] sm:$0xff]
        %v3395 = vld [vmem:[%s5 + $0x90] sm:$0xff]
        %v3396 = vld [vmem:[%s5 + $0x98] sm:$0xff]
        %v3397 = vld [vmem:[%s5 + $0xa0] sm:$0xff]
        %v3398 = vld [vmem:[%s5 + $0xa8] sm:$0xff]
        %v3399 = vld [vmem:[%s5 + $0xb0] sm:$0xff]
        %v3400 = vld [vmem:[%s5 + $0xb8] sm:$0xff]
        %v3401 = vld [vmem:[%s5 + $0xc0] sm:$0xff]
        %v3402 = vld [vmem:[%s5 + $0xc8] sm:$0xff]
        %v3403 = vld [vmem:[%s5 + $0xd0] sm:$0xff]
        %v3404 = vld [vmem:[%s5 + $0xd8] sm:$0xff]
        %v3405 = vld [vmem:[%s5 + $0xe0] sm:$0xff]
        %v3406 = vld [vmem:[%s5 + $0xe8] sm:$0xff]
        %v3407 = vld [vmem:[%s5 + $0xf0] sm:$0xff]
        %v3408 = vld [vmem:[%s5 + $0xf8] sm:$0xff]
        %v3409 = vld [vmem:[%s5 + $0x100] sm:$0xff]
        %v3410 = vld [vmem:[%s5 + $0x108] sm:$0xff]
        %v3411 = vld [vmem:[%s5 + $0x110] sm:$0xff]
        %v3412 = vld [vmem:[%s5 + $0x118] sm:$0xff]
        %v3413 = vld [vmem:[%s5 + $0x120] sm:$0xff]
        %v3414 = vld [vmem:[%s5 + $0x128] sm:$0xff]
        %v3415 = vld [vmem:[%s5 + $0x130] sm:$0xff]
        %v3416 = vld [vmem:[%s5 + $0x138] sm:$0xff]
        %v3417 = vld [vmem:[%s6] sm:$0x1]
        %vm3418 = vcmask 523264
        %v3420 = vsel %vm3418, %v3376, 0
        %3422 = vmatprep.subr.mxu0 0.0
        %3423 = vmatpush1.msra.mxu0 %v3392
        %3424 = vmatprep.subr.mxu0 0.0
        %3425 = vmatpush1.msra.mxu0 %v3391
        %3426 = vmatprep.subr.mxu0 0.0
        %3427 = vmatpush1.msra.mxu0 %v3390
        %3428 = vmatprep.subr.mxu0 0.0
        %3429 = vmatpush1.msra.mxu0 %v3389
        %3430 = vmatprep.subr.mxu0 0.0
        %3431 = vmatpush1.msra.mxu0 %v3388
        %3432 = vmatprep.subr.mxu0 0.0
        %3433 = vmatpush1.msra.mxu0 %v3387
        %3434 = vmatprep.subr.mxu0 0.0
        %3435 = vmatpush1.msra.mxu0 %v3386
        %3436 = vmatprep.subr.mxu0 0.0
        %3437 = vmatpush1.msra.mxu0 %v3385
        %3438 = vmatprep.subr.mxu0 0.0
        %3439 = vmatpush1.msra.mxu0 %v3384
        %3440 = vmatprep.subr.mxu0 0.0
        %3441 = vmatpush1.msra.mxu0 %v3383
        %3442 = vmatprep.subr.mxu0 0.0
        %3443 = vmatpush1.msra.mxu0 %v3382
        %3444 = vmatprep.subr.mxu0 0.0
        %3445 = vmatpush1.msra.mxu0 %v3381
        %3446 = vmatprep.subr.mxu0 0.0
        %3447 = vmatpush1.msra.mxu0 %v3380
        %3448 = vmatprep.subr.mxu0 0.0
        %3449 = vmatpush1.msra.mxu0 %v3379
        %3450 = vmatprep.subr.mxu0 0.0
        %3451 = vmatpush1.msra.mxu0 %v3378
        %3452 = vmatprep.subr.mxu0 0.0
        %3453 = vmatpush1.msra.mxu0 %v3377
        %3454 = vmatprep.subr.mxu0 0.0
        %3455 = vmatpush2.msra.mxu0 %v3408
        %3456 = vmatprep.subr.mxu0 0.0
        %3457 = vmatpush2.msra.mxu0 %v3407
        %3458 = vmatprep.subr.mxu0 0.0
        %3459 = vmatpush2.msra.mxu0 %v3406
        %3460 = vmatprep.subr.mxu0 0.0
        %3461 = vmatpush2.msra.mxu0 %v3405
        %3462 = vmatprep.subr.mxu0 0.0
        %3463 = vmatpush2.msra.mxu0 %v3404
        %3464 = vmatprep.subr.mxu0 0.0
        %3465 = vmatpush2.msra.mxu0 %v3403
        %3466 = vmatprep.subr.mxu0 0.0
        %3467 = vmatpush2.msra.mxu0 %v3402
        %3468 = vmatprep.subr.mxu0 0.0
        %3469 = vmatpush2.msra.mxu0 %v3401
        %3470 = vmatprep.subr.mxu0 0.0
        %3471 = vmatpush2.msra.mxu0 %v3400
        %3472 = vmatprep.subr.mxu0 0.0
        %3473 = vmatpush2.msra.mxu0 %v3399
        %3474 = vmatprep.subr.mxu0 0.0
        %3475 = vmatpush2.msra.mxu0 %v3398
        %3476 = vmatprep.subr.mxu0 0.0
        %3477 = vmatpush2.msra.mxu0 %v3397
        %3478 = vmatprep.subr.mxu0 0.0
        %3479 = vmatpush2.msra.mxu0 %v3396
        %3480 = vmatprep.subr.mxu0 0.0
        %3481 = vmatpush2.msra.mxu0 %v3395
        %3482 = vmatprep.subr.mxu0 0.0
        %3483 = vmatpush2.msra.mxu0 %v3394
        %3484 = vmatprep.subr.mxu0 0.0
        %3485 = vmatpush2.msra.mxu0 %v3393
        %3486 = vmatprep.mubr.f32.mxu0 %v3370
        %3487 = vmatmul.mubr.f32.gmra.mxu0 %v3358
        %v3488 = vpop.f32.mrf.mxu0
        %v3489 = vadd.f32 %v3417, %v3488
        %v3490 = vpop.f32.mrf.mxu0
        %3491 = vdwg.mxu0
        %3492 = vmatprep.subr.mxu0 0.0
        %3493 = vmatpush1.msra.mxu0 0.0
        %3494 = vmatprep.subr.mxu0 0.0
        %3495 = vmatpush1.msra.mxu0 0.0
        %3496 = vmatprep.subr.mxu0 0.0
        %3497 = vmatpush1.msra.mxu0 0.0
        %3498 = vmatprep.subr.mxu0 0.0
        %3499 = vmatpush1.msra.mxu0 0.0
        %3500 = vmatprep.subr.mxu0 0.0
        %3501 = vmatpush1.msra.mxu0 0.0
        %3502 = vmatprep.subr.mxu0 0.0
        %3503 = vmatpush1.msra.mxu0 0.0
        %3504 = vmatprep.subr.mxu0 0.0
        %3505 = vmatpush1.msra.mxu0 0.0
        %3506 = vmatprep.subr.mxu0 0.0
        %3507 = vmatpush1.msra.mxu0 0.0
        %3508 = vmatprep.subr.mxu0 0.0
        %3509 = vmatpush1.msra.mxu0 %v3416
        %3510 = vmatprep.subr.mxu0 0.0
        %3511 = vmatpush1.msra.mxu0 %v3415
        %3512 = vmatprep.subr.mxu0 0.0
        %3513 = vmatpush1.msra.mxu0 %v3414
        %3514 = vmatprep.subr.mxu0 0.0
        %3515 = vmatpush1.msra.mxu0 %v3413
        %3516 = vmatprep.subr.mxu0 0.0
        %3517 = vmatpush1.msra.mxu0 %v3412
        %3518 = vmatprep.subr.mxu0 0.0
        %3519 = vmatpush1.msra.mxu0 %v3411
        %3520 = vmatprep.subr.mxu0 0.0
        %3521 = vmatpush1.msra.mxu0 %v3410
        %3522 = vmatprep.subr.mxu0 0.0
        %3523 = vmatpush1.msra.mxu0 %v3409
        %3524 = vmatprep.subr.mxu0 0.0
        %3525 = vmatpush2.msra.mxu0 0.0
        %3526 = vmatprep.subr.mxu0 0.0
        %3527 = vmatpush2.msra.mxu0 0.0
        %3528 = vmatprep.subr.mxu0 0.0
        %3529 = vmatpush2.msra.mxu0 0.0
        %3530 = vmatprep.subr.mxu0 0.0
        %3531 = vmatpush2.msra.mxu0 0.0
        %3532 = vmatprep.subr.mxu0 0.0
        %3533 = vmatpush2.msra.mxu0 0.0
        %3534 = vmatprep.subr.mxu0 0.0
        %3535 = vmatpush2.msra.mxu0 0.0
        %3536 = vmatprep.subr.mxu0 0.0
        %3537 = vmatpush2.msra.mxu0 0.0
        %3538 = vmatprep.subr.mxu0 0.0
        %3539 = vmatpush2.msra.mxu0 0.0
        %3540 = vmatprep.subr.mxu0 0.0
        %3541 = vmatpush2.msra.mxu0 0.0
        %3542 = vmatprep.subr.mxu0 0.0
        %3543 = vmatpush2.msra.mxu0 0.0
        %3544 = vmatprep.subr.mxu0 0.0
        %3545 = vmatpush2.msra.mxu0 0.0
        %3546 = vmatprep.subr.mxu0 0.0
        %3547 = vmatpush2.msra.mxu0 0.0
        %3548 = vmatprep.subr.mxu0 0.0
        %3549 = vmatpush2.msra.mxu0 0.0
        %3550 = vmatprep.subr.mxu0 0.0
        %3551 = vmatpush2.msra.mxu0 0.0
        %3552 = vmatprep.subr.mxu0 0.0
        %3553 = vmatpush2.msra.mxu0 0.0
        %3554 = vmatprep.subr.mxu0 0.0
        %3555 = vmatpush2.msra.mxu0 0.0
        %3556 = vmatprep.mubr.f32.mxu0 0.0
        %3557 = vmatmul.mubr.f32.gmra.mxu0 %v3420
        %v3558 = vpop.f32.mrf.mxu0
        %v3559 = vadd.f32 %v3489, %v3558
        %v3560 = vpop.f32.mrf.mxu0
        %3561 = vdwg.mxu0
        %v3562 = vmax.f32 %v3559, 0.0
        %v3563 = vld [vmem:[%s7] sm:$0xff]
        %v3564 = vld [vmem:[%s7 + $0x8] sm:$0xff]
        %v3565 = vld [vmem:[%s7 + $0x10] sm:$0xff]
        %v3566 = vld [vmem:[%s7 + $0x18] sm:$0xff]
        %v3567 = vld [vmem:[%s7 + $0x20] sm:$0xff]
        %v3568 = vld [vmem:[%s7 + $0x28] sm:$0xff]
        %v3569 = vld [vmem:[%s7 + $0x30] sm:$0x3]
        %v3570 = vld [vmem:[%s8] sm:$0x1]
        %vm3571 = vcmask 408576
        %v3573 = vsel %vm3571, %v3562, 0
        %v3576 = vsel %vm3134, %v3569, 0
        %3578 = vmatprep.subr.mxu0 0.0
        %3579 = vmatpush1.msra.mxu0 0.0
        %3580 = vmatprep.subr.mxu0 0.0
        %3581 = vmatpush1.msra.mxu0 0.0
        %3582 = vmatprep.subr.mxu0 0.0
        %3583 = vmatpush1.msra.mxu0 0.0
        %3584 = vmatprep.subr.mxu0 0.0
        %3585 = vmatpush1.msra.mxu0 0.0
        %3586 = vmatprep.subr.mxu0 0.0
        %3587 = vmatpush1.msra.mxu0 0.0
        %3588 = vmatprep.subr.mxu0 0.0
        %3589 = vmatpush1.msra.mxu0 0.0
        %3590 = vmatprep.subr.mxu0 0.0
        %3591 = vmatpush1.msra.mxu0 0.0
        %3592 = vmatprep.subr.mxu0 0.0
        %3593 = vmatpush1.msra.mxu0 0.0
        %3594 = vmatprep.subr.mxu0 0.0
        %3595 = vmatpush1.msra.mxu0 0.0
        %3596 = vmatprep.subr.mxu0 0.0
        %3597 = vmatpush1.msra.mxu0 %v3576
        %3598 = vmatprep.subr.mxu0 0.0
        %3599 = vmatpush1.msra.mxu0 %v3568
        %3600 = vmatprep.subr.mxu0 0.0
        %3601 = vmatpush1.msra.mxu0 %v3567
        %3602 = vmatprep.subr.mxu0 0.0
        %3603 = vmatpush1.msra.mxu0 %v3566
        %3604 = vmatprep.subr.mxu0 0.0
        %3605 = vmatpush1.msra.mxu0 %v3565
        %3606 = vmatprep.subr.mxu0 0.0
        %3607 = vmatpush1.msra.mxu0 %v3564
        %3608 = vmatprep.subr.mxu0 0.0
        %3609 = vmatpush1.msra.mxu0 %v3563
        %3610 = vmatprep.subr.mxu0 0.0
        %3611 = vmatpush2.msra.mxu0 0.0
        %3612 = vmatprep.subr.mxu0 0.0
        %3613 = vmatpush2.msra.mxu0 0.0
        %3614 = vmatprep.subr.mxu0 0.0
        %3615 = vmatpush2.msra.mxu0 0.0
        %3616 = vmatprep.subr.mxu0 0.0
        %3617 = vmatpush2.msra.mxu0 0.0
        %3618 = vmatprep.subr.mxu0 0.0
        %3619 = vmatpush2.msra.mxu0 0.0
        %3620 = vmatprep.subr.mxu0 0.0
        %3621 = vmatpush2.msra.mxu0 0.0
        %3622 = vmatprep.subr.mxu0 0.0
        %3623 = vmatpush2.msra.mxu0 0.0
        %3624 = vmatprep.subr.mxu0 0.0
        %3625 = vmatpush2.msra.mxu0 0.0
        %3626 = vmatprep.subr.mxu0 0.0
        %3627 = vmatpush2.msra.mxu0 0.0
        %3628 = vmatprep.subr.mxu0 0.0
        %3629 = vmatpush2.msra.mxu0 0.0
        %3630 = vmatprep.subr.mxu0 0.0
        %3631 = vmatpush2.msra.mxu0 0.0
        %3632 = vmatprep.subr.mxu0 0.0
        %3633 = vmatpush2.msra.mxu0 0.0
        %3634 = vmatprep.subr.mxu0 0.0
        %3635 = vmatpush2.msra.mxu0 0.0
        %3636 = vmatprep.subr.mxu0 0.0
        %3637 = vmatpush2.msra.mxu0 0.0
        %3638 = vmatprep.subr.mxu0 0.0
        %3639 = vmatpush2.msra.mxu0 0.0
        %3640 = vmatprep.subr.mxu0 0.0
        %3641 = vmatpush2.msra.mxu0 0.0
        %3642 = vmatprep.mubr.f32.mxu0 0.0
        %3643 = vmatmul.mubr.f32.gmra.mxu0 %v3573
        %v3644 = vpop.f32.mrf.mxu0
        %v3645 = vadd.f32 %v3570, %v3644
        %v3646 = vpop.f32.mrf.mxu0
        %3647 = vdwg.mxu0
        %vm3648 = vcmask 73728
        %3649 = vst.msk [vmem:[%s324] sm:$0x1] %vm3648, %v3645
        %s3650 = sand.u32 %s225, 1
        %s3651 = scalar_lea.sflag [#allocation5], %s3650
        %s3652 = sand.u32 %s225, 1
        %s3653 = scalar_lea.vmem [#allocation4], %s3652
        // Predicated region
        $region57: #{lenet_forward.1} parent=55 // pred_check
          %p3654 = pneg %p235
        $region58: #{lenet_forward.1} parent=55 // pred_check_branch
          %3656 = sbr.rel (%p3654) target = $region60
        $region59: #{lenet_forward.1} parent=55 // pred_region
          %s3658 = ssub.s32 16, 16
          %3659 = vsyncadd %s3651, %s3658
          %s3660 = smul.addr %s23, 16
          %s3661 = scalar_lea.hbm %s9, %s3660
          %s3663 = sshll.u32 %s3653, 4
          %s3664 = int_to_ptr.vmem [resolvable:$true] %s3663
          %3666 = dma.vmem_to_hbm [thread:$0]  %s3664, 16, %s3661, %s3651
        $region60: #{lenet_forward.1} parent=55 // pred_fallthru
          _
      $region56: #{lenet_forward.1} parent=5 // pred_fallthru
        _
      %p3667 = scmp.le.s32.totalorder 2, %s18
      // Predicated region
      $region61: #{lenet_forward.1} parent=5 // pred_check
        %p3668 = pneg %p3667
      $region62: #{lenet_forward.1} parent=5 // pred_check_branch
        %3670 = sbr.rel (%p3668) target = $region64
      $region63: #{lenet_forward.1} parent=5 // pred_region
        %s3671 = ssub.s32 %s18, 2
        // Predicated region
        $region65: #{lenet_forward.1} parent=63 // pred_check
          %p3672 = pneg %p241
        $region66: #{lenet_forward.1} parent=63 // pred_check_branch
          %3674 = sbr.rel (%p3672) target = $region68
        $region67: #{lenet_forward.1} parent=63 // pred_region
          %s3675 = sand.u32 %s226, 1
          %s3676 = scalar_lea.sflag [#allocation5], %s3675
          %s3677 = sand.u32 %s226, 1
          %s3678 = scalar_lea.vmem [#allocation4], %s3677
          %3679 = dma.done %s3676, 16
        $region68: #{lenet_forward.1} parent=63 // pred_fallthru
          _
      $region64: #{lenet_forward.1} parent=5 // pred_fallthru
        _
    $region6: #{lenet_forward.1} parent=1 // loop_footer
      %s22 = sadd.s32 1, %s18
    $region7: #{lenet_forward.1} parent=1 // loop_footer_branch
      %17 = sbr.rel target = $region3
    $region8: #{lenet_forward.1} parent=1 // loop_exit
      _
    %3680 = vsyncpa [#allocation5], 1
    %s3681 = scalar_lea.sflag [#allocation5], 1
    %3682 = vsyncpa %s3681, 1

</llo_original>
